<compile_context>
chip_gen: v7x
topology: tpu7x:2x2x1
jax: 0.10.0
libtpu: 0.0.40
codegen_flags: <defaults>
</compile_context>

<pallas_src>
import functools

import jax
import jax.numpy as jnp
from jax.experimental import pallas as pl
from jax.experimental.pallas import tpu as pltpu


# ----------------------------------------------------------------------------
# MXU input dtype: bf16 on v6e / v7x (f32 accumulate), exact f32 otherwise.
# ----------------------------------------------------------------------------
def _select_mxu_dtype():
    try:
        kind = jax.devices()[0].device_kind.lower()
    except Exception:  # pragma: no cover
        return jnp.float32
    if ("v6" in kind) or ("v7" in kind) or ("7x" in kind):
        return jnp.bfloat16
    return jnp.float32


MXU_DTYPE = _select_mxu_dtype()


def _round_up(x, m):
    return ((x + m - 1) // m) * m


# ----------------------------------------------------------------------------
# Pallas kernels
# ----------------------------------------------------------------------------
def _dense_kernel(x_ref, w_ref, b_ref, o_ref, *, relu):
    # MXU dot in MXU_DTYPE with f32 accumulation; bias/ReLU epilogue in f32.
    acc = jnp.dot(x_ref[...], w_ref[...], preferred_element_type=jnp.float32)
    acc = acc + b_ref[...]                      # (1, Np) broadcast over rows
    if relu:
        acc = jnp.maximum(acc, 0.0)
    o_ref[...] = acc


def _head_kernel(board_ref, mini_ref, wm_ref, bm_ref, w1a_ref, w1b_ref, b1_ref,
                 w2_ref, b2_ref, wh1_ref, bh1_ref, wh2_ref, bh2_ref, o_ref):
    """mini FC -> shared fc1 -> fc2 -> fused head layer1 -> fused head layer2."""
    f32 = jnp.float32
    # miniNN33 FC (block-diag now|next) + ReLU   -> (M, 128): [now32 | next32 | 0...]
    mini = jnp.dot(mini_ref[...], wm_ref[...], preferred_element_type=f32) + bm_ref[...]
    mini = jnp.maximum(mini, 0.0).astype(MXU_DTYPE)
    # shared fc1 on cat([board, mini_feats]) via split weights + ReLU  -> (M, 256)
    h = jnp.dot(board_ref[...], w1a_ref[...], preferred_element_type=f32)
    h = h + jnp.dot(mini, w1b_ref[...], preferred_element_type=f32)
    h = jnp.maximum(h + b1_ref[...], 0.0).astype(MXU_DTYPE)
    # shared fc2 + ReLU  -> (M, 128)
    h = jnp.dot(h, w2_ref[...], preferred_element_type=f32) + b2_ref[...]
    h = jnp.maximum(h, 0.0).astype(MXU_DTYPE)
    # heads layer 1 (trans1|rot1|slide1 concatenated along N=128) + ReLU
    g = jnp.dot(h, wh1_ref[...], preferred_element_type=f32) + bh1_ref[...]
    g = jnp.maximum(g, 0.0).astype(MXU_DTYPE)
    # heads layer 2 (block-diag trans2|rot2|slide2), no ReLU
    o_ref[...] = jnp.dot(g, wh2_ref[...], preferred_element_type=f32) + bh2_ref[...]


# ----------------------------------------------------------------------------
# GEMM wrapper: out = relu?(x @ w + b), weights pre-padded at param-prep time.
# ----------------------------------------------------------------------------
def pallas_dense(x, layer, relu=False, block_m=256):
    """x: (M, K) f32; layer: {'w': (Kp, Np) MXU dtype, 'b': (1, Np) f32, 'cout': N}."""
    M, K = x.shape
    Kp, Np = layer["w"].shape
    Mp = _round_up(max(M, 8), 8)
    if (M, K) == (Mp, Kp) and x.dtype == MXU_DTYPE:
        xp = x
    else:
        xp = jnp.zeros((Mp, Kp), MXU_DTYPE).at[:M, :K].set(x.astype(MXU_DTYPE))
    bm = block_m if (Mp > block_m and Mp % block_m == 0) else Mp
    out = pl.pallas_call(
        functools.partial(_dense_kernel, relu=relu),
        out_shape=jax.ShapeDtypeStruct((Mp, Np), jnp.float32),
        grid=(Mp // bm,),
        in_specs=[
            pl.BlockSpec((bm, Kp), lambda i: (i, 0)),
            pl.BlockSpec((Kp, Np), lambda i: (0, 0)),
            pl.BlockSpec((1, Np), lambda i: (0, 0)),
        ],
        out_specs=pl.BlockSpec((bm, Np), lambda i: (i, 0)),
        compiler_params=pltpu.CompilerParams(dimension_semantics=("parallel",)),
    )(xp, layer["w"], layer["b"])
    return out[:M, :layer["cout"]]


# ----------------------------------------------------------------------------
# NHWC conv (stride 1) via im2col + fused Pallas GEMM; NHWC pooling glue (JAX)
# ----------------------------------------------------------------------------
def conv_gemm(x, layer, k, pad, relu):
    B, H, W, C = x.shape
    if k == 1:
        Ho, Wo = H, W
        cols = x.reshape(B * H * W, C)                 # 1x1 conv: pure reshape in NHWC
    else:
        Ho = H + 2 * pad - k + 1
        Wo = W + 2 * pad - k + 1
        xp = jnp.pad(x, ((0, 0), (pad, pad), (pad, pad), (0, 0)))
        cols = jnp.stack(
            [xp[:, dy:dy + Ho, dx:dx + Wo, :] for dy in range(k) for dx in range(k)],
            axis=3)                                    # (B, Ho, Wo, k*k, C): (tap, c) order
        cols = cols.reshape(B * Ho * Wo, k * k * C)
    out = pallas_dense(cols, layer, relu=relu)
    return out.reshape(B, Ho, Wo, layer["cout"])


def maxpool2x2(x):
    B, H, W, C = x.shape
    return x.reshape(B, H // 2, 2, W // 2, 2, C).max(axis=(2, 4))


def avgpool2x2(x):
    B, H, W, C = x.shape
    return x.reshape(B, H // 2, 2, W // 2, 2, C).mean(axis=(2, 4))


def maxpool3x3_s1_p1(x):
    B, H, W, C = x.shape
    xp = jnp.pad(x, ((0, 0), (1, 1), (1, 1), (0, 0)), constant_values=-jnp.inf)
    stack = jnp.stack(
        [xp[:, dy:dy + H, dx:dx + W, :] for dy in range(3) for dx in range(3)], axis=0)
    return jnp.max(stack, axis=0)


# ----------------------------------------------------------------------------
# Deterministic parameter initialization (synthetic, PyTorch-default-like)
# ----------------------------------------------------------------------------
def _conv_params(key, cout, cin, k):
    k1, k2 = jax.random.split(key)
    bound = 1.0 / float(cin * k * k) ** 0.5
    w = jax.random.uniform(k1, (cout, cin, k, k), jnp.float32, -bound, bound)
    b = jax.random.uniform(k2, (cout,), jnp.float32, -bound, bound)
    return w, b


def _linear_params(key, cin, cout):
    k1, k2 = jax.random.split(key)
    bound = 1.0 / float(cin) ** 0.5
    w = jax.random.uniform(k1, (cin, cout), jnp.float32, -bound, bound)  # stored (in, out)
    b = jax.random.uniform(k2, (cout,), jnp.float32, -bound, bound)
    return w, b


def _bn_params(key, c):
    k1, k2, k3 = jax.random.split(key, 3)
    gamma = jax.random.uniform(k1, (c,), jnp.float32, 0.5, 1.5)
    beta = jax.random.uniform(k2, (c,), jnp.float32, -0.1, 0.1)
    running_mean = jax.random.uniform(k3, (c,), jnp.float32, -0.1, 0.1)
    running_var = jnp.ones((c,), jnp.float32)
    return gamma, beta, running_mean, running_var


def _bn_scale_shift(bn, eps=1e-5):
    gamma, beta, mean, var = bn
    scale = gamma / jnp.sqrt(var + eps)
    shift = beta - mean * scale
    return scale, shift


def fold_bn_after_conv(w, b, bn):
    """Conv -> BN(eval): fold BN into conv output channels."""
    scale, shift = _bn_scale_shift(bn)
    return w * scale[:, None, None, None], b * scale + shift


def fold_bn_before_1x1_conv(w, b, bn):
    """BN(eval) -> 1x1 Conv: fold BN into conv input channels."""
    scale, shift = _bn_scale_shift(bn)
    w_f = w * scale[None, :, None, None]
    b_f = b + jnp.einsum("oi,i->o", w[:, :, 0, 0], shift)
    return w_f, b_f


def init_params(key):
    keys = jax.random.split(key, 32)
    it = iter(keys)
    p = {}
    # FrontEndNet
    p["fe_conv1"] = _conv_params(next(it), 32, 1, 3)
    p["fe_bn1"] = _bn_params(next(it), 32)
    p["fe_conv2"] = _conv_params(next(it), 64, 32, 3)
    p["fe_bn2"] = _bn_params(next(it), 64)
    p["inc_b1"] = _conv_params(next(it), 32, 64, 1)
    p["inc_b2a"] = _conv_params(next(it), 32, 64, 1)
    p["inc_b2b"] = _conv_params(next(it), 32, 32, 3)
    p["inc_b3a"] = _conv_params(next(it), 32, 64, 1)
    p["inc_b3b"] = _conv_params(next(it), 32, 32, 5)
    p["inc_b4"] = _conv_params(next(it), 32, 64, 1)
    p["fe_bn3"] = _bn_params(next(it), 128)          # FrontEndNet.bn1
    p["fe_conv3"] = _conv_params(next(it), 64, 128, 1)
    p["fe_conv4"] = _conv_params(next(it), 32, 64, 1)
    # miniNN33 x2
    for name in ("now", "next"):
        p[f"{name}_conv1"] = _conv_params(next(it), 8, 4, 3)
        p[f"{name}_conv2"] = _conv_params(next(it), 16, 8, 3)
        p[f"{name}_fc"] = _linear_params(next(it), 64, 32)
    # shared fc + heads
    p["fc1"] = _linear_params(next(it), 128 + 32 + 32, 256)
    p["fc2"] = _linear_params(next(it), 256, 128)
    p["trans1"] = _linear_params(next(it), 128, 64)
    p["trans2"] = _linear_params(next(it), 64, 10)
    p["rot1"] = _linear_params(next(it), 128, 32)
    p["rot2"] = _linear_params(next(it), 32, 4)
    p["slide1"] = _linear_params(next(it), 128, 32)
    p["slide2"] = _linear_params(next(it), 32, 3)
    return p


# ----------------------------------------------------------------------------
# One-time parameter preparation: BN folding, NHWC GEMM layout, weight fusion
# (N-concat / block-diagonal) and (8,128)-aligned zero padding.
# ----------------------------------------------------------------------------
def _to_nhwc_mat(w):
    """PyTorch conv weight (Cout, Cin, kh, kw) -> GEMM matrix (kh*kw*Cin, Cout)."""
    cout, cin, kh, kw = w.shape
    return jnp.transpose(w, (2, 3, 1, 0)).reshape(kh * kw * cin, cout)


def _pad_w(w):
    K, N = w.shape
    Kp, Np = _round_up(K, 128), _round_up(N, 128)
    return jnp.zeros((Kp, Np), MXU_DTYPE).at[:K, :N].set(w.astype(MXU_DTYPE))


def _pad_b(b):
    N = b.shape[0]
    Np = _round_up(N, 128)
    return jnp.zeros((1, Np), jnp.float32).at[0, :N].set(b.astype(jnp.float32))


def _pad_gemm(wmat, bias):
    return {"w": _pad_w(wmat), "b": _pad_b(bias), "cout": wmat.shape[1]}


def prepare_params(p):
    pp = {}
    # FrontEnd conv1/conv2 (BN folded into the conv GEMM, ReLU fused in the kernel).
    w, b = fold_bn_after_conv(*p["fe_conv1"], p["fe_bn1"])
    pp["fe_conv1"] = _pad_gemm(_to_nhwc_mat(w), b)
    w, b = fold_bn_after_conv(*p["fe_conv2"], p["fe_bn2"])
    pp["fe_conv2"] = _pad_gemm(_to_nhwc_mat(w), b)

    # Inception: ALL four 1x1 convs as one GEMM over concat([x, maxpool3x3(x)]).
    # Input channels: [x(64) | pooled(64)]; output channels: [b1 | b2mid | b3mid | b4].
    (w1, c1) = p["inc_b1"]
    (w2a, c2a) = p["inc_b2a"]
    (w3a, c3a) = p["inc_b3a"]
    (w4, c4) = p["inc_b4"]
    W = jnp.zeros((128, 128), jnp.float32)
    W = W.at[:64, 0:32].set(w1[:, :, 0, 0].T)
    W = W.at[:64, 32:64].set(w2a[:, :, 0, 0].T)
    W = W.at[:64, 64:96].set(w3a[:, :, 0, 0].T)
    W = W.at[64:, 96:128].set(w4[:, :, 0, 0].T)
    pp["inc_1x1"] = _pad_gemm(W, jnp.concatenate([c1, c2a, c3a, c4]))

    # Inception 3x3 + 5x5 branch convs as one block-diagonal 5x5 GEMM
    # over input channels [b2mid(32) | b3mid(32)] -> output [b2(32) | b3(32)].
    (w2b, c2b) = p["inc_b2b"]
    (w3b, c3b) = p["inc_b3b"]
    comb = jnp.zeros((5, 5, 64, 64), jnp.float32)
    comb = comb.at[1:4, 1:4, :32, :32].set(jnp.transpose(w2b, (2, 3, 1, 0)))  # 3x3 centred
    comb = comb.at[:, :, 32:, 32:].set(jnp.transpose(w3b, (2, 3, 1, 0)))
    pp["inc_35"] = _pad_gemm(comb.reshape(25 * 64, 64), jnp.concatenate([c2b, c3b]))

    # conv3 (frontend bn1 folded in, applied to relu(inception out)) and conv4.
    w, b = fold_bn_before_1x1_conv(*p["fe_conv3"], p["fe_bn3"])
    pp["fe_conv3"] = _pad_gemm(w[:, :, 0, 0].T, b)
    w, b = p["fe_conv4"]
    pp["fe_conv4"] = _pad_gemm(w[:, :, 0, 0].T, b)

    # miniNN33 now/next fused channel-wise with block-diagonal conv weights.
    (wn1, cn1), (wx1, cx1) = p["now_conv1"], p["next_conv1"]
    comb1 = jnp.zeros((3, 3, 8, 16), jnp.float32)
    comb1 = comb1.at[:, :, :4, :8].set(jnp.transpose(wn1, (2, 3, 1, 0)))
    comb1 = comb1.at[:, :, 4:, 8:].set(jnp.transpose(wx1, (2, 3, 1, 0)))
    pp["mini_conv1"] = _pad_gemm(comb1.reshape(9 * 8, 16), jnp.concatenate([cn1, cx1]))
    (wn2, cn2), (wx2, cx2) = p["now_conv2"], p["next_conv2"]
    comb2 = jnp.zeros((3, 3, 16, 32), jnp.float32)
    comb2 = comb2.at[:, :, :8, :16].set(jnp.transpose(wn2, (2, 3, 1, 0)))
    comb2 = comb2.at[:, :, 8:, 16:].set(jnp.transpose(wx2, (2, 3, 1, 0)))
    pp["mini_conv2"] = _pad_gemm(comb2.reshape(9 * 16, 32), jnp.concatenate([cn2, cx2]))

    # Head mega-kernel weights.
    (wfn, bfn), (wfx, bfx) = p["now_fc"], p["next_fc"]          # each (64, 32)
    wm = jnp.zeros((128, 64), jnp.float32)
    wm = wm.at[:64, :32].set(wfn).at[64:, 32:].set(wfx)          # block-diag now|next FC
    pp["mini_fc_w"] = _pad_w(wm)
    pp["mini_fc_b"] = _pad_b(jnp.concatenate([bfn, bfx]))

    w1, b1 = p["fc1"]                                            # (192, 256)
    pp["fc1_wa"] = _pad_w(w1[:128])                              # board-feature rows
    pp["fc1_wb"] = _pad_w(w1[128:192])                           # [now|next]-feature rows
    pp["fc1_b"] = _pad_b(b1)
    w2, b2 = p["fc2"]                                            # (256, 128)
    pp["fc2_w"] = _pad_w(w2)
    pp["fc2_b"] = _pad_b(b2)

    (wt1, bt1), (wr1, br1), (ws1, bs1) = p["trans1"], p["rot1"], p["slide1"]
    pp["head1_w"] = _pad_w(jnp.concatenate([wt1, wr1, ws1], axis=1))   # (128, 128) exact
    pp["head1_b"] = _pad_b(jnp.concatenate([bt1, br1, bs1]))
    (wt2, bt2), (wr2, br2), (ws2, bs2) = p["trans2"], p["rot2"], p["slide2"]
    wh2 = jnp.zeros((128, 17), jnp.float32)
    wh2 = wh2.at[:64, 0:10].set(wt2).at[64:96, 10:14].set(wr2).at[96:128, 14:17].set(ws2)
    pp["head2_w"] = _pad_w(wh2)
    pp["head2_b"] = _pad_b(jnp.concatenate([bt2, br2, bs2]))
    return pp


# ----------------------------------------------------------------------------
# Forward pass (inference: Dropout = identity, BatchNorm uses running stats)
# ----------------------------------------------------------------------------
def frontend_forward(pp, x):                                      # x: (B, 16, 16, 1) NHWC
    B = x.shape[0]
    x = conv_gemm(x, pp["fe_conv1"], k=3, pad=1, relu=True)       # Conv+BN+ReLU -> (B,16,16,32)
    x = conv_gemm(x, pp["fe_conv2"], k=3, pad=1, relu=True)       # Conv+BN+ReLU -> (B,16,16,64)
    x = maxpool2x2(x)                                             # (B,8,8,64)
    # Inception(64->128): one GEMM for all four 1x1 convs (ReLU fused; for b1/b4 it is
    # the post-concat F.relu applied early, for b2mid/b3mid it is the in-branch ReLU).
    y = conv_gemm(jnp.concatenate([x, maxpool3x3_s1_p1(x)], axis=-1),
                  pp["inc_1x1"], k=1, pad=0, relu=True)           # (B,8,8,128)=[b1|b2m|b3m|b4]
    b23 = conv_gemm(y[..., 32:96], pp["inc_35"], k=5, pad=2, relu=True)   # (B,8,8,64)=[b2|b3]
    x = jnp.concatenate([y[..., 0:32], b23, y[..., 96:128]], axis=-1)     # == relu(incep out)
    x = conv_gemm(x, pp["fe_conv3"], k=1, pad=0, relu=True)       # bn1 folded in, +ReLU
    x = avgpool2x2(x)                                             # (B,4,4,64)
    x = conv_gemm(x, pp["fe_conv4"], k=1, pad=0, relu=True)       # (B,4,4,32)
    x = avgpool2x2(x)                                             # (B,2,2,32)
    return jnp.transpose(x, (0, 3, 1, 2)).reshape(B, -1)          # NCHW flatten -> (B,128)


def mini_forward(pp, x_now, x_next):                              # each (B, 4, 4, 4) NHWC
    B = x_now.shape[0]
    x = jnp.concatenate([x_now, x_next], axis=-1)                 # (B,4,4,8)
    x = conv_gemm(x, pp["mini_conv1"], k=3, pad=1, relu=True)     # (B,4,4,16)=[now8|next8]
    x = conv_gemm(x, pp["mini_conv2"], k=3, pad=1, relu=True)     # (B,4,4,32)=[now16|next16]
    x = maxpool2x2(x)                                             # (B,2,2,32)
    now_flat = jnp.transpose(x[..., :16], (0, 3, 1, 2)).reshape(B, 64)   # NCHW flatten order
    next_flat = jnp.transpose(x[..., 16:], (0, 3, 1, 2)).reshape(B, 64)
    return jnp.concatenate([now_flat, next_flat], axis=1)         # (B,128)


def head_forward(pp, board_feat, mini_flat):
    B = board_feat.shape[0]
    Mp = _round_up(max(B, 8), 8)

    def pad_rows(a):
        return jnp.zeros((Mp, a.shape[1]), MXU_DTYPE).at[:B].set(a.astype(MXU_DTYPE))

    args = (pad_rows(board_feat), pad_rows(mini_flat),
            pp["mini_fc_w"], pp["mini_fc_b"],
            pp["fc1_wa"], pp["fc1_wb"], pp["fc1_b"],
            pp["fc2_w"], pp["fc2_b"],
            pp["head1_w"], pp["head1_b"],
            pp["head2_w"], pp["head2_b"])
    out = pl.pallas_call(
        _head_kernel,
        out_shape=jax.ShapeDtypeStruct((Mp, 128), jnp.float32),
        grid=(1,),
        in_specs=[pl.BlockSpec(a.shape, lambda i: (0, 0)) for a in args],
        out_specs=pl.BlockSpec((Mp, 128), lambda i: (0, 0)),
        compiler_params=pltpu.CompilerParams(dimension_semantics=("arbitrary",)),
    )(*args)
    return out[:B, 0:10], out[:B, 10:14], out[:B, 14:17]


def tetris_nn3_forward(pp, x_board, x_now, x_next):
    """Inputs in PyTorch NCHW layout; returns (translation, rotation, slide)."""
    board_feat = frontend_forward(pp, jnp.transpose(x_board, (0, 2, 3, 1)))   # (B,128)
    mini_flat = mini_forward(pp, jnp.transpose(x_now, (0, 2, 3, 1)),
                             jnp.transpose(x_next, (0, 2, 3, 1)))             # (B,128)
    return head_forward(pp, board_feat, mini_flat)


if __name__ == "__main__":
    key = jax.random.PRNGKey(0)
    kp, kb, kn, kx = jax.random.split(key, 4)
    params = prepare_params(init_params(kp))

    B = 2
    # Shapes implied by the module: frontend flatten must be 128 = 32*2*2 -> 16x16 board;
    # miniNN33 Linear(64, 32) -> 4x4 piece grids with 4 channels.
    x_board = jax.random.normal(kb, (B, 1, 16, 16), jnp.float32)
    x_now = jax.random.normal(kn, (B, 4, 4, 4), jnp.float32)
    x_next = jax.random.normal(kx, (B, 4, 4, 4), jnp.float32)

    fwd = jax.jit(functools.partial(tetris_nn3_forward, params))
    translation, rotation, slide = fwd(x_board, x_now, x_next)
    jax.block_until_ready((translation, rotation, slide))

    assert translation.shape == (B, 10)
    assert rotation.shape == (B, 4)
    assert slide.shape == (B, 3)
    print("KERNEL_OK")
</pallas_src>

<mosaic_0001>
module attributes {stable_mosaic.version = 11 : i64} {
  func.func @_dense_kernel(%arg0: i32, %arg1: memref<256x128xf32, #tpu.memory_space<vmem>>, %arg2: memref<128x128xf32, #tpu.memory_space<vmem>>, %arg3: memref<1x128xf32, #tpu.memory_space<vmem>>, %arg4: memref<256x128xf32, #tpu.memory_space<vmem>>) attributes {dimension_semantics = [#tpu.dimension_semantics<parallel>], iteration_bounds = array<i64: 2>, scalar_prefetch = 0 : i64, scratch_operands = 0 : i64, tpu.core_type = #tpu.core_type<tc>, window_params = [{transform_indices = @transform_0, window_bounds = array<i64: 256, 128>}, {pipeline_mode = #tpu.pipeline_mode<synchronous>, transform_indices = @transform_1, window_bounds = array<i64: 128, 128>}, {pipeline_mode = #tpu.pipeline_mode<synchronous>, transform_indices = @transform_2, window_bounds = array<i64: 1, 128>}, {transform_indices = @transform_3, window_bounds = array<i64: 256, 128>}]} {
    %c0 = arith.constant 0 : index
    %c0_0 = arith.constant 0 : index
    %0 = vector.load %arg1[%c0, %c0_0] : memref<256x128xf32, #tpu.memory_space<vmem>>, vector<256x128xf32>
    %c0_1 = arith.constant 0 : index
    %c0_2 = arith.constant 0 : index
    %1 = vector.load %arg2[%c0_1, %c0_2] : memref<128x128xf32, #tpu.memory_space<vmem>>, vector<128x128xf32>
    %cst = arith.constant dense<0.000000e+00> : vector<256x128xf32>
    %2 = tpu.matmul %0, %1, %cst {dimension_numbers = #tpu.dot_dimension_numbers<[1], [0], [0], [1], [0, 0, 1, 1], [], []>} : vector<256x128xf32>, vector<128x128xf32>, vector<256x128xf32> -> vector<256x128xf32>
    %c0_3 = arith.constant 0 : index
    %c0_4 = arith.constant 0 : index
    %3 = vector.load %arg3[%c0_3, %c0_4] : memref<1x128xf32, #tpu.memory_space<vmem>>, vector<1x128xf32>
    %4 = vector.broadcast %3 : vector<1x128xf32> to vector<256x128xf32>
    %5 = arith.addf %2, %4 : vector<256x128xf32>
    %cst_5 = arith.constant 0.000000e+00 : f32
    %6 = vector.broadcast %cst_5 : f32 to vector<256x128xf32>
    %7 = arith.maximumf %5, %6 : vector<256x128xf32>
    %c0_6 = arith.constant 0 : index
    %c0_7 = arith.constant 0 : index
    %8 = vector.load %arg4[%c0_6, %c0_7] : memref<256x128xf32, #tpu.memory_space<vmem>>, vector<256x128xf32>
    tpu.vector_store %arg4[%c0_6, %c0_7], %7 {strides = array<i32>} : memref<256x128xf32, #tpu.memory_space<vmem>>, vector<256x128xf32>,
    return
  }
  func.func @transform_0(%arg0: i32) -> (i32, i32) {
    %c0_i32 = arith.constant 0 : i32
    %c0_i32_0 = arith.constant 0 : i32
    return %arg0, %c0_i32 : i32, i32
  }
  func.func @transform_1(%arg0: i32) -> (i32, i32) {
    %c0_i32 = arith.constant 0 : i32
    %c0_i32_0 = arith.constant 0 : i32
    %c0_i32_1 = arith.constant 0 : i32
    return %c0_i32, %c0_i32_0 : i32, i32
  }
  func.func @transform_2(%arg0: i32) -> (i32, i32) {
    %c0_i32 = arith.constant 0 : i32
    %c0_i32_0 = arith.constant 0 : i32
    %c0_i32_1 = arith.constant 0 : i32
    return %c0_i32, %c0_i32_0 : i32, i32
  }
  func.func @transform_3(%arg0: i32) -> (i32, i32) {
    %c0_i32 = arith.constant 0 : i32
    %c0_i32_0 = arith.constant 0 : i32
    return %arg0, %c0_i32 : i32, i32
  }
}

module attributes {stable_mosaic.version = 11 : i64} {
  func.func @_dense_kernel(%arg0: i32, %arg1: memref<256x384xf32, #tpu.memory_space<vmem>>, %arg2: memref<384x128xf32, #tpu.memory_space<vmem>>, %arg3: memref<1x128xf32, #tpu.memory_space<vmem>>, %arg4: memref<256x128xf32, #tpu.memory_space<vmem>>) attributes {dimension_semantics = [#tpu.dimension_semantics<parallel>], iteration_bounds = array<i64: 2>, scalar_prefetch = 0 : i64, scratch_operands = 0 : i64, tpu.core_type = #tpu.core_type<tc>, window_params = [{transform_indices = @transform_0, window_bounds = array<i64: 256, 384>}, {pipeline_mode = #tpu.pipeline_mode<synchronous>, transform_indices = @transform_1, window_bounds = array<i64: 384, 128>}, {pipeline_mode = #tpu.pipeline_mode<synchronous>, transform_indices = @transform_2, window_bounds = array<i64: 1, 128>}, {transform_indices = @transform_3, window_bounds = array<i64: 256, 128>}]} {
    %c0 = arith.constant 0 : index
    %c0_0 = arith.constant 0 : index
    %0 = vector.load %arg1[%c0, %c0_0] : memref<256x384xf32, #tpu.memory_space<vmem>>, vector<256x384xf32>
    %c0_1 = arith.constant 0 : index
    %c0_2 = arith.constant 0 : index
    %1 = vector.load %arg2[%c0_1, %c0_2] : memref<384x128xf32, #tpu.memory_space<vmem>>, vector<384x128xf32>
    %cst = arith.constant dense<0.000000e+00> : vector<256x128xf32>
    %2 = tpu.matmul %0, %1, %cst {dimension_numbers = #tpu.dot_dimension_numbers<[1], [0], [0], [1], [0, 0, 1, 1], [], []>} : vector<256x384xf32>, vector<384x128xf32>, vector<256x128xf32> -> vector<256x128xf32>
    %c0_3 = arith.constant 0 : index
    %c0_4 = arith.constant 0 : index
    %3 = vector.load %arg3[%c0_3, %c0_4] : memref<1x128xf32, #tpu.memory_space<vmem>>, vector<1x128xf32>
    %4 = vector.broadcast %3 : vector<1x128xf32> to vector<256x128xf32>
    %5 = arith.addf %2, %4 : vector<256x128xf32>
    %cst_5 = arith.constant 0.000000e+00 : f32
    %6 = vector.broadcast %cst_5 : f32 to vector<256x128xf32>
    %7 = arith.maximumf %5, %6 : vector<256x128xf32>
    %c0_6 = arith.constant 0 : index
    %c0_7 = arith.constant 0 : index
    %8 = vector.load %arg4[%c0_6, %c0_7] : memref<256x128xf32, #tpu.memory_space<vmem>>, vector<256x128xf32>
    tpu.vector_store %arg4[%c0_6, %c0_7], %7 {strides = array<i32>} : memref<256x128xf32, #tpu.memory_space<vmem>>, vector<256x128xf32>,
    return
  }
  func.func @transform_0(%arg0: i32) -> (i32, i32) {
    %c0_i32 = arith.constant 0 : i32
    %c0_i32_0 = arith.constant 0 : i32
    return %arg0, %c0_i32 : i32, i32
  }
  func.func @transform_1(%arg0: i32) -> (i32, i32) {
    %c0_i32 = arith.constant 0 : i32
    %c0_i32_0 = arith.constant 0 : i32
    %c0_i32_1 = arith.constant 0 : i32
    return %c0_i32, %c0_i32_0 : i32, i32
  }
  func.func @transform_2(%arg0: i32) -> (i32, i32) {
    %c0_i32 = arith.constant 0 : i32
    %c0_i32_0 = arith.constant 0 : i32
    %c0_i32_1 = arith.constant 0 : i32
    return %c0_i32, %c0_i32_0 : i32, i32
  }
  func.func @transform_3(%arg0: i32) -> (i32, i32) {
    %c0_i32 = arith.constant 0 : i32
    %c0_i32_0 = arith.constant 0 : i32
    return %arg0, %c0_i32 : i32, i32
  }
}

module attributes {stable_mosaic.version = 11 : i64} {
  func.func @_dense_kernel(%arg0: i32, %arg1: memref<128x128xf32, #tpu.memory_space<vmem>>, %arg2: memref<128x128xf32, #tpu.memory_space<vmem>>, %arg3: memref<1x128xf32, #tpu.memory_space<vmem>>, %arg4: memref<128x128xf32, #tpu.memory_space<vmem>>) attributes {dimension_semantics = [#tpu.dimension_semantics<parallel>], iteration_bounds = array<i64: 1>, scalar_prefetch = 0 : i64, scratch_operands = 0 : i64, tpu.core_type = #tpu.core_type<tc>, window_params = [{transform_indices = @transform_0, window_bounds = array<i64: 128, 128>}, {pipeline_mode = #tpu.pipeline_mode<synchronous>, transform_indices = @transform_1, window_bounds = array<i64: 128, 128>}, {pipeline_mode = #tpu.pipeline_mode<synchronous>, transform_indices = @transform_2, window_bounds = array<i64: 1, 128>}, {transform_indices = @transform_3, window_bounds = array<i64: 128, 128>}]} {
    %c0 = arith.constant 0 : index
    %c0_0 = arith.constant 0 : index
    %0 = vector.load %arg1[%c0, %c0_0] : memref<128x128xf32, #tpu.memory_space<vmem>>, vector<128x128xf32>
    %c0_1 = arith.constant 0 : index
    %c0_2 = arith.constant 0 : index
    %1 = vector.load %arg2[%c0_1, %c0_2] : memref<128x128xf32, #tpu.memory_space<vmem>>, vector<128x128xf32>
    %cst = arith.constant dense<0.000000e+00> : vector<128x128xf32>
    %2 = tpu.matmul %0, %1, %cst {dimension_numbers = #tpu.dot_dimension_numbers<[1], [0], [0], [1], [0, 0, 1, 1], [], []>} : vector<128x128xf32>, vector<128x128xf32>, vector<128x128xf32> -> vector<128x128xf32>
    %c0_3 = arith.constant 0 : index
    %c0_4 = arith.constant 0 : index
    %3 = vector.load %arg3[%c0_3, %c0_4] : memref<1x128xf32, #tpu.memory_space<vmem>>, vector<1x128xf32>
    %4 = vector.broadcast %3 : vector<1x128xf32> to vector<128x128xf32>
    %5 = arith.addf %2, %4 : vector<128x128xf32>
    %cst_5 = arith.constant 0.000000e+00 : f32
    %6 = vector.broadcast %cst_5 : f32 to vector<128x128xf32>
    %7 = arith.maximumf %5, %6 : vector<128x128xf32>
    %c0_6 = arith.constant 0 : index
    %c0_7 = arith.constant 0 : index
    %8 = vector.load %arg4[%c0_6, %c0_7] : memref<128x128xf32, #tpu.memory_space<vmem>>, vector<128x128xf32>
    tpu.vector_store %arg4[%c0_6, %c0_7], %7 {strides = array<i32>} : memref<128x128xf32, #tpu.memory_space<vmem>>, vector<128x128xf32>,
    return
  }
  func.func @transform_0(%arg0: i32) -> (i32, i32) {
    %c0_i32 = arith.constant 0 : i32
    %c0_i32_0 = arith.constant 0 : i32
    return %arg0, %c0_i32 : i32, i32
  }
  func.func @transform_1(%arg0: i32) -> (i32, i32) {
    %c0_i32 = arith.constant 0 : i32
    %c0_i32_0 = arith.constant 0 : i32
    %c0_i32_1 = arith.constant 0 : i32
    return %c0_i32, %c0_i32_0 : i32, i32
  }
  func.func @transform_2(%arg0: i32) -> (i32, i32) {
    %c0_i32 = arith.constant 0 : i32
    %c0_i32_0 = arith.constant 0 : i32
    %c0_i32_1 = arith.constant 0 : i32
    return %c0_i32, %c0_i32_0 : i32, i32
  }
  func.func @transform_3(%arg0: i32) -> (i32, i32) {
    %c0_i32 = arith.constant 0 : i32
    %c0_i32_0 = arith.constant 0 : i32
    return %arg0, %c0_i32 : i32, i32
  }
}

module attributes {stable_mosaic.version = 11 : i64} {
  func.func @_dense_kernel(%arg0: i32, %arg1: memref<128x1664xf32, #tpu.memory_space<vmem>>, %arg2: memref<1664x128xf32, #tpu.memory_space<vmem>>, %arg3: memref<1x128xf32, #tpu.memory_space<vmem>>, %arg4: memref<128x128xf32, #tpu.memory_space<vmem>>) attributes {dimension_semantics = [#tpu.dimension_semantics<parallel>], iteration_bounds = array<i64: 1>, scalar_prefetch = 0 : i64, scratch_operands = 0 : i64, tpu.core_type = #tpu.core_type<tc>, window_params = [{transform_indices = @transform_0, window_bounds = array<i64: 128, 1664>}, {pipeline_mode = #tpu.pipeline_mode<synchronous>, transform_indices = @transform_1, window_bounds = array<i64: 1664, 128>}, {pipeline_mode = #tpu.pipeline_mode<synchronous>, transform_indices = @transform_2, window_bounds = array<i64: 1, 128>}, {transform_indices = @transform_3, window_bounds = array<i64: 128, 128>}]} {
    %c0 = arith.constant 0 : index
    %c0_0 = arith.constant 0 : index
    %0 = vector.load %arg1[%c0, %c0_0] : memref<128x1664xf32, #tpu.memory_space<vmem>>, vector<128x1664xf32>
    %c0_1 = arith.constant 0 : index
    %c0_2 = arith.constant 0 : index
    %1 = vector.load %arg2[%c0_1, %c0_2] : memref<1664x128xf32, #tpu.memory_space<vmem>>, vector<1664x128xf32>
    %cst = arith.constant dense<0.000000e+00> : vector<128x128xf32>
    %2 = tpu.matmul %0, %1, %cst {dimension_numbers = #tpu.dot_dimension_numbers<[1], [0], [0], [1], [0, 0, 1, 1], [], []>} : vector<128x1664xf32>, vector<1664x128xf32>, vector<128x128xf32> -> vector<128x128xf32>
    %c0_3 = arith.constant 0 : index
    %c0_4 = arith.constant 0 : index
    %3 = vector.load %arg3[%c0_3, %c0_4] : memref<1x128xf32, #tpu.memory_space<vmem>>, vector<1x128xf32>
    %4 = vector.broadcast %3 : vector<1x128xf32> to vector<128x128xf32>
    %5 = arith.addf %2, %4 : vector<128x128xf32>
    %cst_5 = arith.constant 0.000000e+00 : f32
    %6 = vector.broadcast %cst_5 : f32 to vector<128x128xf32>
    %7 = arith.maximumf %5, %6 : vector<128x128xf32>
    %c0_6 = arith.constant 0 : index
    %c0_7 = arith.constant 0 : index
    %8 = vector.load %arg4[%c0_6, %c0_7] : memref<128x128xf32, #tpu.memory_space<vmem>>, vector<128x128xf32>
    tpu.vector_store %arg4[%c0_6, %c0_7], %7 {strides = array<i32>} : memref<128x128xf32, #tpu.memory_space<vmem>>, vector<128x128xf32>,
    return
  }
  func.func @transform_0(%arg0: i32) -> (i32, i32) {
    %c0_i32 = arith.constant 0 : i32
    %c0_i32_0 = arith.constant 0 : i32
    return %arg0, %c0_i32 : i32, i32
  }
  func.func @transform_1(%arg0: i32) -> (i32, i32) {
    %c0_i32 = arith.constant 0 : i32
    %c0_i32_0 = arith.constant 0 : i32
    %c0_i32_1 = arith.constant 0 : i32
    return %c0_i32, %c0_i32_0 : i32, i32
  }
  func.func @transform_2(%arg0: i32) -> (i32, i32) {
    %c0_i32 = arith.constant 0 : i32
    %c0_i32_0 = arith.constant 0 : i32
    %c0_i32_1 = arith.constant 0 : i32
    return %c0_i32, %c0_i32_0 : i32, i32
  }
  func.func @transform_3(%arg0: i32) -> (i32, i32) {
    %c0_i32 = arith.constant 0 : i32
    %c0_i32_0 = arith.constant 0 : i32
    return %arg0, %c0_i32 : i32, i32
  }
}

module attributes {stable_mosaic.version = 11 : i64} {
  func.func @_dense_kernel(%arg0: i32, %arg1: memref<32x128xf32, #tpu.memory_space<vmem>>, %arg2: memref<128x128xf32, #tpu.memory_space<vmem>>, %arg3: memref<1x128xf32, #tpu.memory_space<vmem>>, %arg4: memref<32x128xf32, #tpu.memory_space<vmem>>) attributes {dimension_semantics = [#tpu.dimension_semantics<parallel>], iteration_bounds = array<i64: 1>, scalar_prefetch = 0 : i64, scratch_operands = 0 : i64, tpu.core_type = #tpu.core_type<tc>, window_params = [{transform_indices = @transform_0, window_bounds = array<i64: 32, 128>}, {pipeline_mode = #tpu.pipeline_mode<synchronous>, transform_indices = @transform_1, window_bounds = array<i64: 128, 128>}, {pipeline_mode = #tpu.pipeline_mode<synchronous>, transform_indices = @transform_2, window_bounds = array<i64: 1, 128>}, {transform_indices = @transform_3, window_bounds = array<i64: 32, 128>}]} {
    %c0 = arith.constant 0 : index
    %c0_0 = arith.constant 0 : index
    %0 = vector.load %arg1[%c0, %c0_0] : memref<32x128xf32, #tpu.memory_space<vmem>>, vector<32x128xf32>
    %c0_1 = arith.constant 0 : index
    %c0_2 = arith.constant 0 : index
    %1 = vector.load %arg2[%c0_1, %c0_2] : memref<128x128xf32, #tpu.memory_space<vmem>>, vector<128x128xf32>
    %cst = arith.constant dense<0.000000e+00> : vector<32x128xf32>
    %2 = tpu.matmul %0, %1, %cst {dimension_numbers = #tpu.dot_dimension_numbers<[1], [0], [0], [1], [0, 0, 1, 1], [], []>} : vector<32x128xf32>, vector<128x128xf32>, vector<32x128xf32> -> vector<32x128xf32>
    %c0_3 = arith.constant 0 : index
    %c0_4 = arith.constant 0 : index
    %3 = vector.load %arg3[%c0_3, %c0_4] : memref<1x128xf32, #tpu.memory_space<vmem>>, vector<1x128xf32>
    %4 = vector.broadcast %3 : vector<1x128xf32> to vector<32x128xf32>
    %5 = arith.addf %2, %4 : vector<32x128xf32>
    %cst_5 = arith.constant 0.000000e+00 : f32
    %6 = vector.broadcast %cst_5 : f32 to vector<32x128xf32>
    %7 = arith.maximumf %5, %6 : vector<32x128xf32>
    %c0_6 = arith.constant 0 : index
    %c0_7 = arith.constant 0 : index
    %8 = vector.load %arg4[%c0_6, %c0_7] : memref<32x128xf32, #tpu.memory_space<vmem>>, vector<32x128xf32>
    tpu.vector_store %arg4[%c0_6, %c0_7], %7 {strides = array<i32>} : memref<32x128xf32, #tpu.memory_space<vmem>>, vector<32x128xf32>,
    return
  }
  func.func @transform_0(%arg0: i32) -> (i32, i32) {
    %c0_i32 = arith.constant 0 : i32
    %c0_i32_0 = arith.constant 0 : i32
    return %arg0, %c0_i32 : i32, i32
  }
  func.func @transform_1(%arg0: i32) -> (i32, i32) {
    %c0_i32 = arith.constant 0 : i32
    %c0_i32_0 = arith.constant 0 : i32
    %c0_i32_1 = arith.constant 0 : i32
    return %c0_i32, %c0_i32_0 : i32, i32
  }
  func.func @transform_2(%arg0: i32) -> (i32, i32) {
    %c0_i32 = arith.constant 0 : i32
    %c0_i32_0 = arith.constant 0 : i32
    %c0_i32_1 = arith.constant 0 : i32
    return %c0_i32, %c0_i32_0 : i32, i32
  }
  func.func @transform_3(%arg0: i32) -> (i32, i32) {
    %c0_i32 = arith.constant 0 : i32
    %c0_i32_0 = arith.constant 0 : i32
    return %arg0, %c0_i32 : i32, i32
  }
}

module attributes {stable_mosaic.version = 11 : i64} {
  func.func @_dense_kernel(%arg0: i32, %arg1: memref<32x256xf32, #tpu.memory_space<vmem>>, %arg2: memref<256x128xf32, #tpu.memory_space<vmem>>, %arg3: memref<1x128xf32, #tpu.memory_space<vmem>>, %arg4: memref<32x128xf32, #tpu.memory_space<vmem>>) attributes {dimension_semantics = [#tpu.dimension_semantics<parallel>], iteration_bounds = array<i64: 1>, scalar_prefetch = 0 : i64, scratch_operands = 0 : i64, tpu.core_type = #tpu.core_type<tc>, window_params = [{transform_indices = @transform_0, window_bounds = array<i64: 32, 256>}, {pipeline_mode = #tpu.pipeline_mode<synchronous>, transform_indices = @transform_1, window_bounds = array<i64: 256, 128>}, {pipeline_mode = #tpu.pipeline_mode<synchronous>, transform_indices = @transform_2, window_bounds = array<i64: 1, 128>}, {transform_indices = @transform_3, window_bounds = array<i64: 32, 128>}]} {
    %c0 = arith.constant 0 : index
    %c0_0 = arith.constant 0 : index
    %0 = vector.load %arg1[%c0, %c0_0] : memref<32x256xf32, #tpu.memory_space<vmem>>, vector<32x256xf32>
    %c0_1 = arith.constant 0 : index
    %c0_2 = arith.constant 0 : index
    %1 = vector.load %arg2[%c0_1, %c0_2] : memref<256x128xf32, #tpu.memory_space<vmem>>, vector<256x128xf32>
    %cst = arith.constant dense<0.000000e+00> : vector<32x128xf32>
    %2 = tpu.matmul %0, %1, %cst {dimension_numbers = #tpu.dot_dimension_numbers<[1], [0], [0], [1], [0, 0, 1, 1], [], []>} : vector<32x256xf32>, vector<256x128xf32>, vector<32x128xf32> -> vector<32x128xf32>
    %c0_3 = arith.constant 0 : index
    %c0_4 = arith.constant 0 : index
    %3 = vector.load %arg3[%c0_3, %c0_4] : memref<1x128xf32, #tpu.memory_space<vmem>>, vector<1x128xf32>
    %4 = vector.broadcast %3 : vector<1x128xf32> to vector<32x128xf32>
    %5 = arith.addf %2, %4 : vector<32x128xf32>
    %cst_5 = arith.constant 0.000000e+00 : f32
    %6 = vector.broadcast %cst_5 : f32 to vector<32x128xf32>
    %7 = arith.maximumf %5, %6 : vector<32x128xf32>
    %c0_6 = arith.constant 0 : index
    %c0_7 = arith.constant 0 : index
    %8 = vector.load %arg4[%c0_6, %c0_7] : memref<32x128xf32, #tpu.memory_space<vmem>>, vector<32x128xf32>
    tpu.vector_store %arg4[%c0_6, %c0_7], %7 {strides = array<i32>} : memref<32x128xf32, #tpu.memory_space<vmem>>, vector<32x128xf32>,
    return
  }
  func.func @transform_0(%arg0: i32) -> (i32, i32) {
    %c0_i32 = arith.constant 0 : i32
    %c0_i32_0 = arith.constant 0 : i32
    return %arg0, %c0_i32 : i32, i32
  }
  func.func @transform_1(%arg0: i32) -> (i32, i32) {
    %c0_i32 = arith.constant 0 : i32
    %c0_i32_0 = arith.constant 0 : i32
    %c0_i32_1 = arith.constant 0 : i32
    return %c0_i32, %c0_i32_0 : i32, i32
  }
  func.func @transform_2(%arg0: i32) -> (i32, i32) {
    %c0_i32 = arith.constant 0 : i32
    %c0_i32_0 = arith.constant 0 : i32
    %c0_i32_1 = arith.constant 0 : i32
    return %c0_i32, %c0_i32_0 : i32, i32
  }
  func.func @transform_3(%arg0: i32) -> (i32, i32) {
    %c0_i32 = arith.constant 0 : i32
    %c0_i32_0 = arith.constant 0 : i32
    return %arg0, %c0_i32 : i32, i32
  }
}

module attributes {stable_mosaic.version = 11 : i64} {
  func.func @_head_kernel(%arg0: i32, %arg1: memref<8x128xf32, #tpu.memory_space<vmem>>, %arg2: memref<8x128xf32, #tpu.memory_space<vmem>>, %arg3: memref<128x128xf32, #tpu.memory_space<vmem>>, %arg4: memref<1x128xf32, #tpu.memory_space<vmem>>, %arg5: memref<128x256xf32, #tpu.memory_space<vmem>>, %arg6: memref<128x256xf32, #tpu.memory_space<vmem>>, %arg7: memref<1x256xf32, #tpu.memory_space<vmem>>, %arg8: memref<256x128xf32, #tpu.memory_space<vmem>>, %arg9: memref<1x128xf32, #tpu.memory_space<vmem>>, %arg10: memref<128x128xf32, #tpu.memory_space<vmem>>, %arg11: memref<1x128xf32, #tpu.memory_space<vmem>>, %arg12: memref<128x128xf32, #tpu.memory_space<vmem>>, %arg13: memref<1x128xf32, #tpu.memory_space<vmem>>, %arg14: memref<8x128xf32, #tpu.memory_space<vmem>>) attributes {dimension_semantics = [#tpu.dimension_semantics<arbitrary>], iteration_bounds = array<i64: 1>, scalar_prefetch = 0 : i64, scratch_operands = 0 : i64, tpu.core_type = #tpu.core_type<tc>, window_params = [{pipeline_mode = #tpu.pipeline_mode<synchronous>, transform_indices = @transform_0, window_bounds = array<i64: 8, 128>}, {pipeline_mode = #tpu.pipeline_mode<synchronous>, transform_indices = @transform_1, window_bounds = array<i64: 8, 128>}, {pipeline_mode = #tpu.pipeline_mode<synchronous>, transform_indices = @transform_2, window_bounds = array<i64: 128, 128>}, {pipeline_mode = #tpu.pipeline_mode<synchronous>, transform_indices = @transform_3, window_bounds = array<i64: 1, 128>}, {pipeline_mode = #tpu.pipeline_mode<synchronous>, transform_indices = @transform_4, window_bounds = array<i64: 128, 256>}, {pipeline_mode = #tpu.pipeline_mode<synchronous>, transform_indices = @transform_5, window_bounds = array<i64: 128, 256>}, {pipeline_mode = #tpu.pipeline_mode<synchronous>, transform_indices = @transform_6, window_bounds = array<i64: 1, 256>}, {pipeline_mode = #tpu.pipeline_mode<synchronous>, transform_indices = @transform_7, window_bounds = array<i64: 256, 128>}, {pipeline_mode = #tpu.pipeline_mode<synchronous>, transform_indices = @transform_8, window_bounds = array<i64: 1, 128>}, {pipeline_mode = #tpu.pipeline_mode<synchronous>, transform_indices = @transform_9, window_bounds = array<i64: 128, 128>}, {pipeline_mode = #tpu.pipeline_mode<synchronous>, transform_indices = @transform_10, window_bounds = array<i64: 1, 128>}, {pipeline_mode = #tpu.pipeline_mode<synchronous>, transform_indices = @transform_11, window_bounds = array<i64: 128, 128>}, {pipeline_mode = #tpu.pipeline_mode<synchronous>, transform_indices = @transform_12, window_bounds = array<i64: 1, 128>}, {pipeline_mode = #tpu.pipeline_mode<synchronous>, transform_indices = @transform_13, window_bounds = array<i64: 8, 128>}]} {
    %c0 = arith.constant 0 : index
    %c0_0 = arith.constant 0 : index
    %0 = vector.load %arg2[%c0, %c0_0] : memref<8x128xf32, #tpu.memory_space<vmem>>, vector<8x128xf32>
    %c0_1 = arith.constant 0 : index
    %c0_2 = arith.constant 0 : index
    %1 = vector.load %arg3[%c0_1, %c0_2] : memref<128x128xf32, #tpu.memory_space<vmem>>, vector<128x128xf32>
    %cst = arith.constant dense<0.000000e+00> : vector<8x128xf32>
    %2 = tpu.matmul %0, %1, %cst {dimension_numbers = #tpu.dot_dimension_numbers<[1], [0], [0], [1], [0, 0, 1, 1], [], []>} : vector<8x128xf32>, vector<128x128xf32>, vector<8x128xf32> -> vector<8x128xf32>
    %c0_3 = arith.constant 0 : index
    %c0_4 = arith.constant 0 : index
    %3 = vector.load %arg4[%c0_3, %c0_4] : memref<1x128xf32, #tpu.memory_space<vmem>>, vector<1x128xf32>
    %4 = vector.broadcast %3 : vector<1x128xf32> to vector<8x128xf32>
    %5 = arith.addf %2, %4 : vector<8x128xf32>
    %cst_5 = arith.constant 0.000000e+00 : f32
    %6 = vector.broadcast %cst_5 : f32 to vector<8x128xf32>
    %7 = arith.maximumf %5, %6 : vector<8x128xf32>
    %c0_6 = arith.constant 0 : index
    %c0_7 = arith.constant 0 : index
    %8 = vector.load %arg1[%c0_6, %c0_7] : memref<8x128xf32, #tpu.memory_space<vmem>>, vector<8x128xf32>
    %c0_8 = arith.constant 0 : index
    %c0_9 = arith.constant 0 : index
    %9 = vector.load %arg5[%c0_8, %c0_9] : memref<128x256xf32, #tpu.memory_space<vmem>>, vector<128x256xf32>
    %cst_10 = arith.constant dense<0.000000e+00> : vector<8x256xf32>
    %10 = tpu.matmul %8, %9, %cst_10 {dimension_numbers = #tpu.dot_dimension_numbers<[1], [0], [0], [1], [0, 0, 1, 1], [], []>} : vector<8x128xf32>, vector<128x256xf32>, vector<8x256xf32> -> vector<8x256xf32>
    %c0_11 = arith.constant 0 : index
    %c0_12 = arith.constant 0 : index
    %11 = vector.load %arg6[%c0_11, %c0_12] : memref<128x256xf32, #tpu.memory_space<vmem>>, vector<128x256xf32>
    %cst_13 = arith.constant dense<0.000000e+00> : vector<8x256xf32>
    %12 = tpu.matmul %7, %11, %cst_13 {dimension_numbers = #tpu.dot_dimension_numbers<[1], [0], [0], [1], [0, 0, 1, 1], [], []>} : vector<8x128xf32>, vector<128x256xf32>, vector<8x256xf32> -> vector<8x256xf32>
    %13 = arith.addf %10, %12 : vector<8x256xf32>
    %c0_14 = arith.constant 0 : index
    %c0_15 = arith.constant 0 : index
    %14 = vector.load %arg7[%c0_14, %c0_15] : memref<1x256xf32, #tpu.memory_space<vmem>>, vector<1x256xf32>
    %15 = vector.broadcast %14 : vector<1x256xf32> to vector<8x256xf32>
    %16 = arith.addf %13, %15 : vector<8x256xf32>
    %cst_16 = arith.constant 0.000000e+00 : f32
    %17 = vector.broadcast %cst_16 : f32 to vector<8x256xf32>
    %18 = arith.maximumf %16, %17 : vector<8x256xf32>
    %c0_17 = arith.constant 0 : index
    %c0_18 = arith.constant 0 : index
    %19 = vector.load %arg8[%c0_17, %c0_18] : memref<256x128xf32, #tpu.memory_space<vmem>>, vector<256x128xf32>
    %cst_19 = arith.constant dense<0.000000e+00> : vector<8x128xf32>
    %20 = tpu.matmul %18, %19, %cst_19 {dimension_numbers = #tpu.dot_dimension_numbers<[1], [0], [0], [1], [0, 0, 1, 1], [], []>} : vector<8x256xf32>, vector<256x128xf32>, vector<8x128xf32> -> vector<8x128xf32>
    %c0_20 = arith.constant 0 : index
    %c0_21 = arith.constant 0 : index
    %21 = vector.load %arg9[%c0_20, %c0_21] : memref<1x128xf32, #tpu.memory_space<vmem>>, vector<1x128xf32>
    %22 = vector.broadcast %21 : vector<1x128xf32> to vector<8x128xf32>
    %23 = arith.addf %20, %22 : vector<8x128xf32>
    %cst_22 = arith.constant 0.000000e+00 : f32
    %24 = vector.broadcast %cst_22 : f32 to vector<8x128xf32>
    %25 = arith.maximumf %23, %24 : vector<8x128xf32>
    %c0_23 = arith.constant 0 : index
    %c0_24 = arith.constant 0 : index
    %26 = vector.load %arg10[%c0_23, %c0_24] : memref<128x128xf32, #tpu.memory_space<vmem>>, vector<128x128xf32>
    %cst_25 = arith.constant dense<0.000000e+00> : vector<8x128xf32>
    %27 = tpu.matmul %25, %26, %cst_25 {dimension_numbers = #tpu.dot_dimension_numbers<[1], [0], [0], [1], [0, 0, 1, 1], [], []>} : vector<8x128xf32>, vector<128x128xf32>, vector<8x128xf32> -> vector<8x128xf32>
    %c0_26 = arith.constant 0 : index
    %c0_27 = arith.constant 0 : index
    %28 = vector.load %arg11[%c0_26, %c0_27] : memref<1x128xf32, #tpu.memory_space<vmem>>, vector<1x128xf32>
    %29 = vector.broadcast %28 : vector<1x128xf32> to vector<8x128xf32>
    %30 = arith.addf %27, %29 : vector<8x128xf32>
    %cst_28 = arith.constant 0.000000e+00 : f32
    %31 = vector.broadcast %cst_28 : f32 to vector<8x128xf32>
    %32 = arith.maximumf %30, %31 : vector<8x128xf32>
    %c0_29 = arith.constant 0 : index
    %c0_30 = arith.constant 0 : index
    %33 = vector.load %arg12[%c0_29, %c0_30] : memref<128x128xf32, #tpu.memory_space<vmem>>, vector<128x128xf32>
    %cst_31 = arith.constant dense<0.000000e+00> : vector<8x128xf32>
    %34 = tpu.matmul %32, %33, %cst_31 {dimension_numbers = #tpu.dot_dimension_numbers<[1], [0], [0], [1], [0, 0, 1, 1], [], []>} : vector<8x128xf32>, vector<128x128xf32>, vector<8x128xf32> -> vector<8x128xf32>
    %c0_32 = arith.constant 0 : index
    %c0_33 = arith.constant 0 : index
    %35 = vector.load %arg13[%c0_32, %c0_33] : memref<1x128xf32, #tpu.memory_space<vmem>>, vector<1x128xf32>
    %36 = vector.broadcast %35 : vector<1x128xf32> to vector<8x128xf32>
    %37 = arith.addf %34, %36 : vector<8x128xf32>
    %c0_34 = arith.constant 0 : index
    %c0_35 = arith.constant 0 : index
    %38 = vector.load %arg14[%c0_34, %c0_35] : memref<8x128xf32, #tpu.memory_space<vmem>>, vector<8x128xf32>
    tpu.vector_store %arg14[%c0_34, %c0_35], %37 {strides = array<i32>} : memref<8x128xf32, #tpu.memory_space<vmem>>, vector<8x128xf32>,
    return
  }
  func.func @transform_0(%arg0: i32) -> (i32, i32) {
    %c0_i32 = arith.constant 0 : i32
    %c0_i32_0 = arith.constant 0 : i32
    %c0_i32_1 = arith.constant 0 : i32
    return %c0_i32, %c0_i32_0 : i32, i32
  }
  func.func @transform_1(%arg0: i32) -> (i32, i32) {
    %c0_i32 = arith.constant 0 : i32
    %c0_i32_0 = arith.constant 0 : i32
    %c0_i32_1 = arith.constant 0 : i32
    return %c0_i32, %c0_i32_0 : i32, i32
  }
  func.func @transform_2(%arg0: i32) -> (i32, i32) {
    %c0_i32 = arith.constant 0 : i32
    %c0_i32_0 = arith.constant 0 : i32
    %c0_i32_1 = arith.constant 0 : i32
    return %c0_i32, %c0_i32_0 : i32, i32
  }
  func.func @transform_3(%arg0: i32) -> (i32, i32) {
    %c0_i32 = arith.constant 0 : i32
    %c0_i32_0 = arith.constant 0 : i32
    %c0_i32_1 = arith.constant 0 : i32
    return %c0_i32, %c0_i32_0 : i32, i32
  }
  func.func @transform_4(%arg0: i32) -> (i32, i32) {
    %c0_i32 = arith.constant 0 : i32
    %c0_i32_0 = arith.constant 0 : i32
    %c0_i32_1 = arith.constant 0 : i32
    return %c0_i32, %c0_i32_0 : i32, i32
  }
  func.func @transform_5(%arg0: i32) -> (i32, i32) {
    %c0_i32 = arith.constant 0 : i32
    %c0_i32_0 = arith.constant 0 : i32
    %c0_i32_1 = arith.constant 0 : i32
    return %c0_i32, %c0_i32_0 : i32, i32
  }
  func.func @transform_6(%arg0: i32) -> (i32, i32) {
    %c0_i32 = arith.constant 0 : i32
    %c0_i32_0 = arith.constant 0 : i32
    %c0_i32_1 = arith.constant 0 : i32
    return %c0_i32, %c0_i32_0 : i32, i32
  }
  func.func @transform_7(%arg0: i32) -> (i32, i32) {
    %c0_i32 = arith.constant 0 : i32
    %c0_i32_0 = arith.constant 0 : i32
    %c0_i32_1 = arith.constant 0 : i32
    return %c0_i32, %c0_i32_0 : i32, i32
  }
  func.func @transform_8(%arg0: i32) -> (i32, i32) {
    %c0_i32 = arith.constant 0 : i32
    %c0_i32_0 = arith.constant 0 : i32
    %c0_i32_1 = arith.constant 0 : i32
    return %c0_i32, %c0_i32_0 : i32, i32
  }
  func.func @transform_9(%arg0: i32) -> (i32, i32) {
    %c0_i32 = arith.constant 0 : i32
    %c0_i32_0 = arith.constant 0 : i32
    %c0_i32_1 = arith.constant 0 : i32
    return %c0_i32, %c0_i32_0 : i32, i32
  }
  func.func @transform_10(%arg0: i32) -> (i32, i32) {
    %c0_i32 = arith.constant 0 : i32
    %c0_i32_0 = arith.constant 0 : i32
    %c0_i32_1 = arith.constant 0 : i32
    return %c0_i32, %c0_i32_0 : i32, i32
  }
  func.func @transform_11(%arg0: i32) -> (i32, i32) {
    %c0_i32 = arith.constant 0 : i32
    %c0_i32_0 = arith.constant 0 : i32
    %c0_i32_1 = arith.constant 0 : i32
    return %c0_i32, %c0_i32_0 : i32, i32
  }
  func.func @transform_12(%arg0: i32) -> (i32, i32) {
    %c0_i32 = arith.constant 0 : i32
    %c0_i32_0 = arith.constant 0 : i32
    %c0_i32_1 = arith.constant 0 : i32
    return %c0_i32, %c0_i32_0 : i32, i32
  }
  func.func @transform_13(%arg0: i32) -> (i32, i32) {
    %c0_i32 = arith.constant 0 : i32
    %c0_i32_0 = arith.constant 0 : i32
    %c0_i32_1 = arith.constant 0 : i32
    return %c0_i32, %c0_i32_0 : i32, i32
  }
}

</mosaic_0001>

<llo_original>
// kernel: tetris_nn3_forward.9
$region0: #{tetris_nn3_forward.9}
  #allocation0 [shape = 'u32[]', space=smem, size = 0x4, offset = 0x4, fixed_abs, tag = 'smem constant byte address 0x4 - core index']
  #allocation1 [shape = 'u32[144,128]{1,0:T(1,128)}', space=vmem, size = 0x12000, scoped, tag = 'internal scratch']
  %s0 = inlined_call_operand.vmem [shape: f32[512,128], index: 0, kind: input, shape index: {}]
  %s1 = inlined_call_operand.hbm [shape: f32[128,128], index: 1, kind: input, shape index: {}]
  %s2 = inlined_call_operand.hbm [shape: f32[1,128], index: 2, kind: input, shape index: {}]
  %s3 = inlined_call_operand.vmem [shape: f32[512,128], index: 3, kind: output, shape index: {}]
  %s4 = sld [smem:[#allocation0]]
  $region53: #{tetris_nn3_forward.9} parent=0
    _
  %s6 = ssub.s32 1, %s4
  %s7 = scalar_select 0, %s6, %s4
  $region1: #{tetris_nn3_forward.9} parent=0
    #allocation2 [shape = 'u8[65536]{0}', space=vmem, size = 0x10000, scoped, tag = 'input window, operand 1, single buffered']
    #allocation3 [shape = 's32[2]{0}', space=sflag, size = 0x8, scoped, tag = 'scoped memory for tetris_nn3_forward.9']
    #allocation4 [shape = 'u8[512]{0}', space=vmem, size = 0x400, scoped, tag = 'input window, operand 2, single buffered']
    #allocation5 [shape = 's32[1]{0}', space=sflag, size = 0x4, scoped, tag = 'scoped memory for tetris_nn3_forward.9']
    %8 = vsyncpa [#allocation3], 0
    %9 = vsyncpa [#allocation5], 0
    loop: start=0, step=1, limit=4
    $region2: #{tetris_nn3_forward.9} parent=1 // loop_pre_header
      _
    $region3: #{tetris_nn3_forward.9} parent=1 // loop_header
      %s11 = sphi 0, %s15
      %p12 = scmp.ge.s32.totalorder %s11, 4
      %s21 = sphi 0, %s23
      %s24 = sphi 0, %s21
      %s25 = sphi 0, %s24
      %s41 = sphi 0, %s25
      %s45 = sphi 0, %s45
      %s47 = sphi 0, %s45
      %s48 = sphi 0, %s47
      %s62 = sphi 0, %s48
      %s66 = sphi 0, %s66
      %s68 = sphi 0, %s66
      %s69 = sphi 0, %s68
      %s83 = sphi 0, %s69
      %s89 = sphi 0, %s91
      %s92 = sphi 0, %s89
      %s93 = sphi 0, %s92
      %s109 = sphi 0, %s93
    $region4: #{tetris_nn3_forward.9} parent=1 // loop_header_branch
      %14 = sbr.rel (%p12) target = $region8
    $region5: #{tetris_nn3_forward.9} parent=1 // loop_body
      %s16 = ssub.s32 %s11, 1
      %s17 = ssub.s32 %s11, 2
      %s18 = sadd.s32 %s11, 1
      %s19 = ssub.s32 %s11, %s18
      %p20 = scmp.eq.s32.totalorder %s19, 0
      %s22 = sadd.s32 %s21, 1
      %s23 = scalar_select %p20, %s21, %s22
      %p26 = pneg %p20
      %p27 = scmp.eq.s32.totalorder %s11, 1
      %p28 = por %p26, %p27
      %p29 = scmp.ne.s32.totalorder %s21, %s24
      %p30 = scmp.eq.s32.totalorder %s11, 0
      %p31 = por %p29, %p30
      %p32 = scmp.ne.s32.totalorder %s21, %s24
      %p33 = scmp.eq.s32.totalorder %s16, 1
      %p34 = por %p32, %p33
      %p35 = scmp.ne.s32.totalorder %s24, %s25
      %p36 = scmp.eq.s32.totalorder %s16, 0
      %p37 = por %p35, %p36
      %p38 = scmp.ne.s32.totalorder %s24, %s25
      %p39 = scmp.eq.s32.totalorder %s17, 1
      %p40 = por %p38, %p39
      %p42 = scmp.ne.s32.totalorder %s25, %s41
      %p43 = scmp.eq.s32.totalorder %s17, 0
      %p44 = por %p42, %p43
      %s46 = sadd.s32 %s45, 1
      %p49 = scmp.eq.s32.totalorder %s11, 1
      %p50 = scmp.ne.s32.totalorder %s45, %s47
      %p51 = scmp.eq.s32.totalorder %s11, 0
      %p52 = por %p50, %p51
      %p53 = scmp.ne.s32.totalorder %s45, %s47
      %p54 = scmp.eq.s32.totalorder %s16, 1
      %p55 = por %p53, %p54
      %p56 = scmp.ne.s32.totalorder %s47, %s48
      %p57 = scmp.eq.s32.totalorder %s16, 0
      %p58 = por %p56, %p57
      %p59 = scmp.ne.s32.totalorder %s47, %s48
      %p60 = scmp.eq.s32.totalorder %s17, 1
      %p61 = por %p59, %p60
      %p63 = scmp.ne.s32.totalorder %s48, %s62
      %p64 = scmp.eq.s32.totalorder %s17, 0
      %p65 = por %p63, %p64
      %s67 = sadd.s32 %s66, 1
      %p70 = scmp.eq.s32.totalorder %s11, 1
      %p71 = scmp.ne.s32.totalorder %s66, %s68
      %p72 = scmp.eq.s32.totalorder %s11, 0
      %p73 = por %p71, %p72
      %p74 = scmp.ne.s32.totalorder %s66, %s68
      %p75 = scmp.eq.s32.totalorder %s16, 1
      %p76 = por %p74, %p75
      %p77 = scmp.ne.s32.totalorder %s68, %s69
      %p78 = scmp.eq.s32.totalorder %s16, 0
      %p79 = por %p77, %p78
      %p80 = scmp.ne.s32.totalorder %s68, %s69
      %p81 = scmp.eq.s32.totalorder %s17, 1
      %p82 = por %p80, %p81
      %p84 = scmp.ne.s32.totalorder %s69, %s83
      %p85 = scmp.eq.s32.totalorder %s17, 0
      %p86 = por %p84, %p85
      %s87 = ssub.s32 %s11, %s18
      %p88 = scmp.eq.s32.totalorder %s87, 0
      %s90 = sadd.s32 %s89, 1
      %s91 = scalar_select %p88, %s89, %s90
      %p94 = pneg %p88
      %p95 = scmp.eq.s32.totalorder %s11, 1
      %p96 = por %p94, %p95
      %p97 = scmp.ne.s32.totalorder %s89, %s92
      %p98 = scmp.eq.s32.totalorder %s11, 0
      %p99 = por %p97, %p98
      %p100 = scmp.ne.s32.totalorder %s89, %s92
      %p101 = scmp.eq.s32.totalorder %s16, 1
      %p102 = por %p100, %p101
      %p103 = scmp.ne.s32.totalorder %s92, %s93
      %p104 = scmp.eq.s32.totalorder %s16, 0
      %p105 = por %p103, %p104
      %p106 = scmp.ne.s32.totalorder %s92, %s93
      %p107 = scmp.eq.s32.totalorder %s17, 1
      %p108 = por %p106, %p107
      %p110 = scmp.ne.s32.totalorder %s93, %s109
      %p111 = scmp.eq.s32.totalorder %s17, 0
      %p112 = por %p110, %p111
      %p113 = scmp.le.s32.totalorder 1, %s11
      %p114 = scmp.lt.s32.totalorder %s11, 3
      %p115 = pnand %p113, %p114
      %p116 = pneg %p115
      // Predicated region
      $region9: #{tetris_nn3_forward.9} parent=5 // pred_check
        _
      $region10: #{tetris_nn3_forward.9} parent=5 // pred_check_branch
        %118 = sbr.rel (%p115) target = $region12
      $region11: #{tetris_nn3_forward.9} parent=5 // pred_region
        %s119 = ssub.s32 %s11, 1
        // Predicated region
        $region13: #{tetris_nn3_forward.9} parent=11 // pred_check
          %p120 = pneg %p58
        $region14: #{tetris_nn3_forward.9} parent=11 // pred_check_branch
          %122 = sbr.rel (%p120) target = $region16
        $region15: #{tetris_nn3_forward.9} parent=11 // pred_region
          %s124 = ssub.s32 2048, 2048
          %125 = vsyncadd [#allocation3], %s124
          %s126 = sshll.u32 [#allocation2], 4
          %s127 = int_to_ptr.vmem [resolvable:$true] %s126
          %132 = dma.hbm_to_vmem [thread:$0]  %s1, 2048, %s127, [#allocation3], 128, 128, 8
        $region16: #{tetris_nn3_forward.9} parent=11 // pred_fallthru
          _
        // Predicated region
        $region17: #{tetris_nn3_forward.9} parent=11 // pred_check
          %p133 = pneg %p79
        $region18: #{tetris_nn3_forward.9} parent=11 // pred_check_branch
          %135 = sbr.rel (%p133) target = $region20
        $region19: #{tetris_nn3_forward.9} parent=11 // pred_region
          %s137 = ssub.s32 16, 16
          %138 = vsyncadd [#allocation5], %s137
          %s140 = sshll.u32 [#allocation4], 4
          %s141 = int_to_ptr.vmem [resolvable:$true] %s140
          %143 = dma.hbm_to_vmem [thread:$0]  %s2, 16, %s141, [#allocation5]
        $region20: #{tetris_nn3_forward.9} parent=11 // pred_fallthru
          _
      $region12: #{tetris_nn3_forward.9} parent=5 // pred_fallthru
        _
      %p144 = scmp.lt.s32.totalorder %s11, 2
      // Predicated region
      $region21: #{tetris_nn3_forward.9} parent=5 // pred_check
        %p145 = pneg %p144
      $region22: #{tetris_nn3_forward.9} parent=5 // pred_check_branch
        %147 = sbr.rel (%p145) target = $region24
      $region23: #{tetris_nn3_forward.9} parent=5 // pred_region
        // Predicated region
        $region25: #{tetris_nn3_forward.9} parent=23 // pred_check
          %p148 = pneg %p31
        $region26: #{tetris_nn3_forward.9} parent=23 // pred_check_branch
          %150 = sbr.rel (%p148) target = $region28
        $region27: #{tetris_nn3_forward.9} parent=23 // pred_region
          %s151 = smul.u32 32, %s11
          %p152 = scmp.lt.s32.totalorder %s151, 63
          %s153 = scalar_select %p152, %s151, 63
          %s154 = smul.addr %s153, 8
          %s155 = scalar_lea.vmem %s0, %s154
          %s156 = smul.u32 32, %s11
        $region28: #{tetris_nn3_forward.9} parent=23 // pred_fallthru
          _
      $region24: #{tetris_nn3_forward.9} parent=5 // pred_fallthru
        _
      %p157 = scmp.le.s32.totalorder 1, %s11
      %p158 = scmp.lt.s32.totalorder %s11, 3
      %p159 = pnand %p157, %p158
      %p160 = pneg %p159
      // Predicated region
      $region29: #{tetris_nn3_forward.9} parent=5 // pred_check
        _
      $region30: #{tetris_nn3_forward.9} parent=5 // pred_check_branch
        %162 = sbr.rel (%p159) target = $region32
      $region31: #{tetris_nn3_forward.9} parent=5 // pred_region
        %s163 = ssub.s32 %s11, 1
        // Predicated region
        $region33: #{tetris_nn3_forward.9} parent=31 // pred_check
          %p164 = pneg %p58
        $region34: #{tetris_nn3_forward.9} parent=31 // pred_check_branch
          %166 = sbr.rel (%p164) target = $region36
        $region35: #{tetris_nn3_forward.9} parent=31 // pred_region
          %167 = dma.done [#allocation3], 2048
        $region36: #{tetris_nn3_forward.9} parent=31 // pred_fallthru
          _
        // Predicated region
        $region37: #{tetris_nn3_forward.9} parent=31 // pred_check
          %p168 = pneg %p79
        $region38: #{tetris_nn3_forward.9} parent=31 // pred_check_branch
          %170 = sbr.rel (%p168) target = $region40
        $region39: #{tetris_nn3_forward.9} parent=31 // pred_region
          %171 = dma.done [#allocation5], 16
        $region40: #{tetris_nn3_forward.9} parent=31 // pred_fallthru
          _
        %s172 = smul.u32 32, %s16
        %p173 = scmp.lt.s32.totalorder %s172, 63
        %s174 = scalar_select %p173, %s172, 63
        %s175 = smul.addr %s174, 8
        %s176 = scalar_lea.vmem %s0, %s175
        %p177 = pneg %p37
        %p178 = pneg %p34
        %p179 = pneg %p58
        %p180 = pneg %p55
        %p181 = pneg %p79
        %p182 = pneg %p76
        %p183 = pneg %p105
        %p184 = pneg %p102
        %s185 = smul.u32 32, %s16
        %p186 = scmp.lt.s32.totalorder %s185, 63
        %s187 = scalar_select %p186, %s185, 63
        %s188 = smul.addr %s187, 8
        %s189 = scalar_lea.vmem %s3, %s188
        %s190 = smul.u32 32, %s16
        %p191 = scmp.lt.s32.totalorder %s190, 63
        %s192 = scalar_select %p191, %s190, 63
        %s193 = smul.addr %s192, 8
        %s194 = scalar_lea.vmem %s0, %s193
        %s195 = smul.u32 32, %s16
        %s196 = smul.u32 32, %s16
        %p197 = scmp.lt.s32.totalorder %s196, 63
        %s198 = scalar_select %p197, %s196, 63
        %s199 = smul.addr %s198, 8
        %s200 = scalar_lea.vmem %s3, %s199
        %s201 = smul.u32 32, %s16
        %v202 = vld [vmem:[%s194] sm:$0xff]
        %v203 = vld [vmem:[%s194 + $0x8] sm:$0xff]
        %v204 = vld [vmem:[%s194 + $0x10] sm:$0xff]
        %v205 = vld [vmem:[%s194 + $0x18] sm:$0xff]
        %v206 = vld [vmem:[%s194 + $0x20] sm:$0xff]
        %v207 = vld [vmem:[%s194 + $0x28] sm:$0xff]
        %v208 = vld [vmem:[%s194 + $0x30] sm:$0xff]
        %v209 = vld [vmem:[%s194 + $0x38] sm:$0xff]
        %v210 = vld [vmem:[%s194 + $0x40] sm:$0xff]
        %v211 = vld [vmem:[%s194 + $0x48] sm:$0xff]
        %v212 = vld [vmem:[%s194 + $0x50] sm:$0xff]
        %v213 = vld [vmem:[%s194 + $0x58] sm:$0xff]
        %v214 = vld [vmem:[%s194 + $0x60] sm:$0xff]
        %v215 = vld [vmem:[%s194 + $0x68] sm:$0xff]
        %v216 = vld [vmem:[%s194 + $0x70] sm:$0xff]
        %v217 = vld [vmem:[%s194 + $0x78] sm:$0xff]
        %v218 = vld [vmem:[%s194 + $0x80] sm:$0xff]
        %v219 = vld [vmem:[%s194 + $0x88] sm:$0xff]
        %v220 = vld [vmem:[%s194 + $0x90] sm:$0xff]
        %v221 = vld [vmem:[%s194 + $0x98] sm:$0xff]
        %v222 = vld [vmem:[%s194 + $0xa0] sm:$0xff]
        %v223 = vld [vmem:[%s194 + $0xa8] sm:$0xff]
        %v224 = vld [vmem:[%s194 + $0xb0] sm:$0xff]
        %v225 = vld [vmem:[%s194 + $0xb8] sm:$0xff]
        %v226 = vld [vmem:[%s194 + $0xc0] sm:$0xff]
        %v227 = vld [vmem:[%s194 + $0xc8] sm:$0xff]
        %v228 = vld [vmem:[%s194 + $0xd0] sm:$0xff]
        %v229 = vld [vmem:[%s194 + $0xd8] sm:$0xff]
        %v230 = vld [vmem:[%s194 + $0xe0] sm:$0xff]
        %v231 = vld [vmem:[%s194 + $0xe8] sm:$0xff]
        %v232 = vld [vmem:[%s194 + $0xf0] sm:$0xff]
        %v233 = vld [vmem:[%s194 + $0xf8] sm:$0xff]
        %v234 = vld [vmem:[#allocation2] sm:$0xff]
        %v235 = vld [vmem:[#allocation2 + $0x8] sm:$0xff]
        %v236 = vld [vmem:[#allocation2 + $0x10] sm:$0xff]
        %v237 = vld [vmem:[#allocation2 + $0x18] sm:$0xff]
        %v238 = vld [vmem:[#allocation2 + $0x20] sm:$0xff]
        %v239 = vld [vmem:[#allocation2 + $0x28] sm:$0xff]
        %v240 = vld [vmem:[#allocation2 + $0x30] sm:$0xff]
        %v241 = vld [vmem:[#allocation2 + $0x38] sm:$0xff]
        %v242 = vld [vmem:[#allocation2 + $0x40] sm:$0xff]
        %v243 = vld [vmem:[#allocation2 + $0x48] sm:$0xff]
        %v244 = vld [vmem:[#allocation2 + $0x50] sm:$0xff]
        %v245 = vld [vmem:[#allocation2 + $0x58] sm:$0xff]
        %v246 = vld [vmem:[#allocation2 + $0x60] sm:$0xff]
        %v247 = vld [vmem:[#allocation2 + $0x68] sm:$0xff]
        %v248 = vld [vmem:[#allocation2 + $0x70] sm:$0xff]
        %v249 = vld [vmem:[#allocation2 + $0x78] sm:$0xff]
        %v250 = vld [vmem:[#allocation4] sm:$0x1]
        %v252 = vlaneseq
        %v253 = vshrl.u32 %v252, 7
        %v254 = vsub.s32 0, %v253
        %v255 = vrot.slane %v250, %v254
        %257 = vmatprep.subr.mxu0 0.0
        %258 = vmatpush1.msra.mxu0 %v234
        %259 = vmatprep.subr.mxu0 0.0
        %260 = vmatpush1.msra.mxu0 %v235
        %261 = vmatprep.subr.mxu0 0.0
        %262 = vmatpush1.msra.mxu0 %v236
        %263 = vmatprep.subr.mxu0 0.0
        %264 = vmatpush1.msra.mxu0 %v237
        %265 = vmatprep.subr.mxu0 0.0
        %266 = vmatpush1.msra.mxu0 %v238
        %267 = vmatprep.subr.mxu0 0.0
        %268 = vmatpush1.msra.mxu0 %v239
        %269 = vmatprep.subr.mxu0 0.0
        %270 = vmatpush1.msra.mxu0 %v240
        %271 = vmatprep.subr.mxu0 0.0
        %272 = vmatpush1.msra.mxu0 %v241
        %273 = vmatprep.subr.mxu0 0.0
        %274 = vmatpush1.msra.mxu0 %v242
        %275 = vmatprep.subr.mxu0 0.0
        %276 = vmatpush1.msra.mxu0 %v243
        %277 = vmatprep.subr.mxu0 0.0
        %278 = vmatpush1.msra.mxu0 %v244
        %279 = vmatprep.subr.mxu0 0.0
        %280 = vmatpush1.msra.mxu0 %v245
        %281 = vmatprep.subr.mxu0 0.0
        %282 = vmatpush1.msra.mxu0 %v246
        %283 = vmatprep.subr.mxu0 0.0
        %284 = vmatpush1.msra.mxu0 %v247
        %285 = vmatprep.subr.mxu0 0.0
        %286 = vmatpush1.msra.mxu0 %v248
        %287 = vmatprep.subr.mxu0 0.0
        %288 = vmatpush1.msra.mxu0 %v249
        %289 = vmatprep.subr.mxu0 0.0
        %290 = vmatpush1.msra.mxu0 0.0
        %291 = vmatprep.subr.mxu0 0.0
        %292 = vmatpush1.msra.mxu0 0.0
        %293 = vmatprep.subr.mxu0 0.0
        %294 = vmatpush1.msra.mxu0 0.0
        %295 = vmatprep.subr.mxu0 0.0
        %296 = vmatpush1.msra.mxu0 0.0
        %297 = vmatprep.subr.mxu0 0.0
        %298 = vmatpush1.msra.mxu0 0.0
        %299 = vmatprep.subr.mxu0 0.0
        %300 = vmatpush1.msra.mxu0 0.0
        %301 = vmatprep.subr.mxu0 0.0
        %302 = vmatpush1.msra.mxu0 0.0
        %303 = vmatprep.subr.mxu0 0.0
        %304 = vmatpush1.msra.mxu0 0.0
        %305 = vmatprep.subr.mxu0 0.0
        %306 = vmatpush1.msra.mxu0 0.0
        %307 = vmatprep.subr.mxu0 0.0
        %308 = vmatpush1.msra.mxu0 0.0
        %309 = vmatprep.subr.mxu0 0.0
        %310 = vmatpush1.msra.mxu0 0.0
        %311 = vmatprep.subr.mxu0 0.0
        %312 = vmatpush1.msra.mxu0 0.0
        %313 = vmatprep.subr.mxu0 0.0
        %314 = vmatpush1.msra.mxu0 0.0
        %315 = vmatprep.subr.mxu0 0.0
        %316 = vmatpush1.msra.mxu0 0.0
        %317 = vmatprep.subr.mxu0 0.0
        %318 = vmatpush1.msra.mxu0 0.0
        %319 = vmatprep.subr.mxu0 0.0
        %320 = vmatpush1.msra.mxu0 0.0
        %321 = vmatprep.mubr.f32.mxu0 0.0
        %322 = vmatmul.mubr.f32.gmra.mrb[0].mxu0 %v202
        %v323 = vpop.f32.mrb[0].mxu0
        %v324 = vadd.f32 %v255, %v323
        %v325 = vpop.f32.mrb[0].mxu0
        %326 = vmatprep.mubr.f32.mxu0 0.0
        %327 = vmatmul.mubr.f32.gmra.mrb[0].mxu0 %v203
        %v328 = vpop.f32.mrb[0].mxu0
        %v329 = vadd.f32 %v255, %v328
        %v330 = vpop.f32.mrb[0].mxu0
        %331 = vmatprep.mubr.f32.mxu0 0.0
        %332 = vmatmul.mubr.f32.gmra.mrb[0].mxu0 %v204
        %v333 = vpop.f32.mrb[0].mxu0
        %v334 = vadd.f32 %v255, %v333
        %v335 = vpop.f32.mrb[0].mxu0
        %336 = vmatprep.mubr.f32.mxu0 0.0
        %337 = vmatmul.mubr.f32.gmra.mrb[0].mxu0 %v205
        %v338 = vpop.f32.mrb[0].mxu0
        %v339 = vadd.f32 %v255, %v338
        %v340 = vpop.f32.mrb[0].mxu0
        %341 = vmatprep.mubr.f32.mxu0 0.0
        %342 = vmatmul.mubr.f32.gmra.mrb[0].mxu0 %v206
        %v343 = vpop.f32.mrb[0].mxu0
        %v344 = vadd.f32 %v255, %v343
        %v345 = vpop.f32.mrb[0].mxu0
        %346 = vmatprep.mubr.f32.mxu0 0.0
        %347 = vmatmul.mubr.f32.gmra.mrb[0].mxu0 %v207
        %v348 = vpop.f32.mrb[0].mxu0
        %v349 = vadd.f32 %v255, %v348
        %v350 = vpop.f32.mrb[0].mxu0
        %351 = vmatprep.mubr.f32.mxu0 0.0
        %352 = vmatmul.mubr.f32.gmra.mrb[0].mxu0 %v208
        %v353 = vpop.f32.mrb[0].mxu0
        %v354 = vadd.f32 %v255, %v353
        %v355 = vpop.f32.mrb[0].mxu0
        %356 = vmatprep.mubr.f32.mxu0 0.0
        %357 = vmatmul.mubr.f32.gmra.mrb[0].mxu0 %v209
        %v358 = vpop.f32.mrb[0].mxu0
        %v359 = vadd.f32 %v255, %v358
        %v360 = vpop.f32.mrb[0].mxu0
        %361 = vmatprep.mubr.f32.mxu0 0.0
        %362 = vmatmul.mubr.f32.gmra.mrb[0].mxu0 %v210
        %v363 = vpop.f32.mrb[0].mxu0
        %v364 = vadd.f32 %v255, %v363
        %v365 = vpop.f32.mrb[0].mxu0
        %366 = vmatprep.mubr.f32.mxu0 0.0
        %367 = vmatmul.mubr.f32.gmra.mrb[0].mxu0 %v211
        %v368 = vpop.f32.mrb[0].mxu0
        %v369 = vadd.f32 %v255, %v368
        %v370 = vpop.f32.mrb[0].mxu0
        %371 = vmatprep.mubr.f32.mxu0 0.0
        %372 = vmatmul.mubr.f32.gmra.mrb[0].mxu0 %v212
        %v373 = vpop.f32.mrb[0].mxu0
        %v374 = vadd.f32 %v255, %v373
        %v375 = vpop.f32.mrb[0].mxu0
        %376 = vmatprep.mubr.f32.mxu0 0.0
        %377 = vmatmul.mubr.f32.gmra.mrb[0].mxu0 %v213
        %v378 = vpop.f32.mrb[0].mxu0
        %v379 = vadd.f32 %v255, %v378
        %v380 = vpop.f32.mrb[0].mxu0
        %381 = vmatprep.mubr.f32.mxu0 0.0
        %382 = vmatmul.mubr.f32.gmra.mrb[0].mxu0 %v214
        %v383 = vpop.f32.mrb[0].mxu0
        %v384 = vadd.f32 %v255, %v383
        %v385 = vpop.f32.mrb[0].mxu0
        %386 = vmatprep.mubr.f32.mxu0 0.0
        %387 = vmatmul.mubr.f32.gmra.mrb[0].mxu0 %v215
        %v388 = vpop.f32.mrb[0].mxu0
        %v389 = vadd.f32 %v255, %v388
        %v390 = vpop.f32.mrb[0].mxu0
        %391 = vmatprep.mubr.f32.mxu0 0.0
        %392 = vmatmul.mubr.f32.gmra.mrb[0].mxu0 %v216
        %v393 = vpop.f32.mrb[0].mxu0
        %v394 = vadd.f32 %v255, %v393
        %v395 = vpop.f32.mrb[0].mxu0
        %396 = vmatprep.mubr.f32.mxu0 0.0
        %397 = vmatmul.mubr.f32.gmra.mrb[0].mxu0 %v217
        %v398 = vpop.f32.mrb[0].mxu0
        %v399 = vadd.f32 %v255, %v398
        %v400 = vpop.f32.mrb[0].mxu0
        %401 = vmatprep.mubr.f32.mxu0 0.0
        %402 = vmatmul.mubr.f32.gmra.mrb[0].mxu0 %v218
        %v403 = vpop.f32.mrb[0].mxu0
        %v404 = vadd.f32 %v255, %v403
        %v405 = vpop.f32.mrb[0].mxu0
        %406 = vmatprep.mubr.f32.mxu0 0.0
        %407 = vmatmul.mubr.f32.gmra.mrb[0].mxu0 %v219
        %v408 = vpop.f32.mrb[0].mxu0
        %v409 = vadd.f32 %v255, %v408
        %v410 = vpop.f32.mrb[0].mxu0
        %411 = vmatprep.mubr.f32.mxu0 0.0
        %412 = vmatmul.mubr.f32.gmra.mrb[0].mxu0 %v220
        %v413 = vpop.f32.mrb[0].mxu0
        %v414 = vadd.f32 %v255, %v413
        %v415 = vpop.f32.mrb[0].mxu0
        %416 = vmatprep.mubr.f32.mxu0 0.0
        %417 = vmatmul.mubr.f32.gmra.mrb[0].mxu0 %v221
        %v418 = vpop.f32.mrb[0].mxu0
        %v419 = vadd.f32 %v255, %v418
        %v420 = vpop.f32.mrb[0].mxu0
        %421 = vmatprep.mubr.f32.mxu0 0.0
        %422 = vmatmul.mubr.f32.gmra.mrb[0].mxu0 %v222
        %v423 = vpop.f32.mrb[0].mxu0
        %v424 = vadd.f32 %v255, %v423
        %v425 = vpop.f32.mrb[0].mxu0
        %426 = vmatprep.mubr.f32.mxu0 0.0
        %427 = vmatmul.mubr.f32.gmra.mrb[0].mxu0 %v223
        %v428 = vpop.f32.mrb[0].mxu0
        %v429 = vadd.f32 %v255, %v428
        %v430 = vpop.f32.mrb[0].mxu0
        %431 = vmatprep.mubr.f32.mxu0 0.0
        %432 = vmatmul.mubr.f32.gmra.mrb[0].mxu0 %v224
        %v433 = vpop.f32.mrb[0].mxu0
        %v434 = vadd.f32 %v255, %v433
        %v435 = vpop.f32.mrb[0].mxu0
        %436 = vmatprep.mubr.f32.mxu0 0.0
        %437 = vmatmul.mubr.f32.gmra.mrb[0].mxu0 %v225
        %v438 = vpop.f32.mrb[0].mxu0
        %v439 = vadd.f32 %v255, %v438
        %v440 = vpop.f32.mrb[0].mxu0
        %441 = vmatprep.mubr.f32.mxu0 0.0
        %442 = vmatmul.mubr.f32.gmra.mrb[0].mxu0 %v226
        %v443 = vpop.f32.mrb[0].mxu0
        %v444 = vadd.f32 %v255, %v443
        %v445 = vpop.f32.mrb[0].mxu0
        %446 = vmatprep.mubr.f32.mxu0 0.0
        %447 = vmatmul.mubr.f32.gmra.mrb[0].mxu0 %v227
        %v448 = vpop.f32.mrb[0].mxu0
        %v449 = vadd.f32 %v255, %v448
        %v450 = vpop.f32.mrb[0].mxu0
        %451 = vmatprep.mubr.f32.mxu0 0.0
        %452 = vmatmul.mubr.f32.gmra.mrb[0].mxu0 %v228
        %v453 = vpop.f32.mrb[0].mxu0
        %v454 = vadd.f32 %v255, %v453
        %v455 = vpop.f32.mrb[0].mxu0
        %456 = vmatprep.mubr.f32.mxu0 0.0
        %457 = vmatmul.mubr.f32.gmra.mrb[0].mxu0 %v229
        %v458 = vpop.f32.mrb[0].mxu0
        %v459 = vadd.f32 %v255, %v458
        %v460 = vpop.f32.mrb[0].mxu0
        %461 = vmatprep.mubr.f32.mxu0 0.0
        %462 = vmatmul.mubr.f32.gmra.mrb[0].mxu0 %v230
        %v463 = vpop.f32.mrb[0].mxu0
        %v464 = vadd.f32 %v255, %v463
        %v465 = vpop.f32.mrb[0].mxu0
        %466 = vmatprep.mubr.f32.mxu0 0.0
        %467 = vmatmul.mubr.f32.gmra.mrb[0].mxu0 %v231
        %v468 = vpop.f32.mrb[0].mxu0
        %v469 = vadd.f32 %v255, %v468
        %v470 = vpop.f32.mrb[0].mxu0
        %471 = vmatprep.mubr.f32.mxu0 0.0
        %472 = vmatmul.mubr.f32.gmra.mrb[0].mxu0 %v232
        %v473 = vpop.f32.mrb[0].mxu0
        %v474 = vadd.f32 %v255, %v473
        %v475 = vpop.f32.mrb[0].mxu0
        %476 = vmatprep.mubr.f32.mxu0 0.0
        %477 = vmatmul.mubr.f32.gmra.mrb[0].mxu0 %v233
        %v478 = vpop.f32.mrb[0].mxu0
        %v479 = vadd.f32 %v255, %v478
        %v480 = vpop.f32.mrb[0].mxu0
        %481 = vdwg.mxu0
        %v482 = vmax.f32 %v324, 0.0
        %v483 = vmax.f32 %v329, 0.0
        %v484 = vmax.f32 %v334, 0.0
        %v485 = vmax.f32 %v339, 0.0
        %v486 = vmax.f32 %v344, 0.0
        %v487 = vmax.f32 %v349, 0.0
        %v488 = vmax.f32 %v354, 0.0
        %v489 = vmax.f32 %v359, 0.0
        %v490 = vmax.f32 %v364, 0.0
        %v491 = vmax.f32 %v369, 0.0
        %v492 = vmax.f32 %v374, 0.0
        %v493 = vmax.f32 %v379, 0.0
        %v494 = vmax.f32 %v384, 0.0
        %v495 = vmax.f32 %v389, 0.0
        %v496 = vmax.f32 %v394, 0.0
        %v497 = vmax.f32 %v399, 0.0
        %v498 = vmax.f32 %v404, 0.0
        %v499 = vmax.f32 %v409, 0.0
        %v500 = vmax.f32 %v414, 0.0
        %v501 = vmax.f32 %v419, 0.0
        %v502 = vmax.f32 %v424, 0.0
        %v503 = vmax.f32 %v429, 0.0
        %v504 = vmax.f32 %v434, 0.0
        %v505 = vmax.f32 %v439, 0.0
        %v506 = vmax.f32 %v444, 0.0
        %v507 = vmax.f32 %v449, 0.0
        %v508 = vmax.f32 %v454, 0.0
        %v509 = vmax.f32 %v459, 0.0
        %v510 = vmax.f32 %v464, 0.0
        %v511 = vmax.f32 %v469, 0.0
        %v512 = vmax.f32 %v474, 0.0
        %v513 = vmax.f32 %v479, 0.0
        %514 = vst [vmem:[%s200] sm:$0xff] %v482
        %515 = vst [vmem:[%s200 + $0x8] sm:$0xff] %v483
        %516 = vst [vmem:[%s200 + $0x10] sm:$0xff] %v484
        %517 = vst [vmem:[%s200 + $0x18] sm:$0xff] %v485
        %518 = vst [vmem:[%s200 + $0x20] sm:$0xff] %v486
        %519 = vst [vmem:[%s200 + $0x28] sm:$0xff] %v487
        %520 = vst [vmem:[%s200 + $0x30] sm:$0xff] %v488
        %521 = vst [vmem:[%s200 + $0x38] sm:$0xff] %v489
        %522 = vst [vmem:[%s200 + $0x40] sm:$0xff] %v490
        %523 = vst [vmem:[%s200 + $0x48] sm:$0xff] %v491
        %524 = vst [vmem:[%s200 + $0x50] sm:$0xff] %v492
        %525 = vst [vmem:[%s200 + $0x58] sm:$0xff] %v493
        %526 = vst [vmem:[%s200 + $0x60] sm:$0xff] %v494
        %527 = vst [vmem:[%s200 + $0x68] sm:$0xff] %v495
        %528 = vst [vmem:[%s200 + $0x70] sm:$0xff] %v496
        %529 = vst [vmem:[%s200 + $0x78] sm:$0xff] %v497
        %530 = vst [vmem:[%s200 + $0x80] sm:$0xff] %v498
        %531 = vst [vmem:[%s200 + $0x88] sm:$0xff] %v499
        %532 = vst [vmem:[%s200 + $0x90] sm:$0xff] %v500
        %533 = vst [vmem:[%s200 + $0x98] sm:$0xff] %v501
        %534 = vst [vmem:[%s200 + $0xa0] sm:$0xff] %v502
        %535 = vst [vmem:[%s200 + $0xa8] sm:$0xff] %v503
        %536 = vst [vmem:[%s200 + $0xb0] sm:$0xff] %v504
        %537 = vst [vmem:[%s200 + $0xb8] sm:$0xff] %v505
        %538 = vst [vmem:[%s200 + $0xc0] sm:$0xff] %v506
        %539 = vst [vmem:[%s200 + $0xc8] sm:$0xff] %v507
        %540 = vst [vmem:[%s200 + $0xd0] sm:$0xff] %v508
        %541 = vst [vmem:[%s200 + $0xd8] sm:$0xff] %v509
        %542 = vst [vmem:[%s200 + $0xe0] sm:$0xff] %v510
        %543 = vst [vmem:[%s200 + $0xe8] sm:$0xff] %v511
        %544 = vst [vmem:[%s200 + $0xf0] sm:$0xff] %v512
        %545 = vst [vmem:[%s200 + $0xf8] sm:$0xff] %v513
        %s546 = smul.u32 32, %s16
        %p547 = scmp.lt.s32.totalorder %s546, 63
        %s548 = scalar_select %p547, %s546, 63
        %s549 = smul.addr %s548, 8
        %s550 = scalar_lea.vmem %s3, %s549
        // Predicated region
        $region41: #{tetris_nn3_forward.9} parent=31 // pred_check
          %p551 = pneg %p102
        $region42: #{tetris_nn3_forward.9} parent=31 // pred_check_branch
          %553 = sbr.rel (%p551) target = $region44
        $region43: #{tetris_nn3_forward.9} parent=31 // pred_region
          %s554 = smul.u32 32, %s16
        $region44: #{tetris_nn3_forward.9} parent=31 // pred_fallthru
          _
      $region32: #{tetris_nn3_forward.9} parent=5 // pred_fallthru
        _
      %p555 = scmp.le.s32.totalorder 2, %s11
      // Predicated region
      $region45: #{tetris_nn3_forward.9} parent=5 // pred_check
        %p556 = pneg %p555
      $region46: #{tetris_nn3_forward.9} parent=5 // pred_check_branch
        %558 = sbr.rel (%p556) target = $region48
      $region47: #{tetris_nn3_forward.9} parent=5 // pred_region
        %s559 = ssub.s32 %s11, 2
        // Predicated region
        $region49: #{tetris_nn3_forward.9} parent=47 // pred_check
          %p560 = pneg %p108
        $region50: #{tetris_nn3_forward.9} parent=47 // pred_check_branch
          %562 = sbr.rel (%p560) target = $region52
        $region51: #{tetris_nn3_forward.9} parent=47 // pred_region
          %s563 = smul.u32 32, %s17
          %p564 = scmp.lt.s32.totalorder %s563, 63
          %s565 = scalar_select %p564, %s563, 63
          %s566 = smul.addr %s565, 8
          %s567 = scalar_lea.vmem %s3, %s566
        $region52: #{tetris_nn3_forward.9} parent=47 // pred_fallthru
          _
      $region48: #{tetris_nn3_forward.9} parent=5 // pred_fallthru
        _
    $region6: #{tetris_nn3_forward.9} parent=1 // loop_footer
      %s15 = sadd.s32 1, %s11
    $region7: #{tetris_nn3_forward.9} parent=1 // loop_footer_branch
      %10 = sbr.rel target = $region3
    $region8: #{tetris_nn3_forward.9} parent=1 // loop_exit
      _
    %568 = vsyncpa [#allocation3], 1
    %s569 = scalar_lea.sflag [#allocation3], 1
    %570 = vsyncpa %s569, 1
    %571 = vsyncpa [#allocation5], 1

// kernel: tetris_nn3_forward.10
$region0: #{tetris_nn3_forward.10}
  #allocation0 [shape = 'u32[]', space=smem, size = 0x4, offset = 0x4, fixed_abs, tag = 'smem constant byte address 0x4 - core index']
  #allocation1 [shape = 'u32[144,128]{1,0:T(1,128)}', space=vmem, size = 0x12000, scoped, tag = 'internal scratch']
  %s0 = inlined_call_operand.vmem [shape: f32[512,384], index: 0, kind: input, shape index: {}]
  %s1 = inlined_call_operand.vmem [shape: f32[384,128], index: 1, kind: input, shape index: {}]
  %s2 = inlined_call_operand.vmem [shape: f32[1,128], index: 2, kind: input, shape index: {}]
  %s3 = inlined_call_operand.vmem [shape: f32[512,128], index: 3, kind: output, shape index: {}]
  %s4 = sld [smem:[#allocation0]]
  $region45: #{tetris_nn3_forward.10} parent=0
    _
  %s6 = ssub.s32 1, %s4
  %s7 = scalar_select 0, %s6, %s4
  loop: start=0, step=1, limit=4
  $region2: #{tetris_nn3_forward.10} parent=0 // loop_pre_header
    _
  $region3: #{tetris_nn3_forward.10} parent=0 // loop_header
    %s9 = sphi 0, %s13
    %p10 = scmp.ge.s32.totalorder %s9, 4
    %s19 = sphi 0, %s21
    %s22 = sphi 0, %s19
    %s23 = sphi 0, %s22
    %s39 = sphi 0, %s23
    %s43 = sphi 0, %s43
    %s45 = sphi 0, %s43
    %s46 = sphi 0, %s45
    %s60 = sphi 0, %s46
    %s64 = sphi 0, %s64
    %s66 = sphi 0, %s64
    %s67 = sphi 0, %s66
    %s81 = sphi 0, %s67
    %s87 = sphi 0, %s89
    %s90 = sphi 0, %s87
    %s91 = sphi 0, %s90
    %s107 = sphi 0, %s91
  $region4: #{tetris_nn3_forward.10} parent=0 // loop_header_branch
    %12 = sbr.rel (%p10) target = $region8
  $region5: #{tetris_nn3_forward.10} parent=0 // loop_body
    %s14 = ssub.s32 %s9, 1
    %s15 = ssub.s32 %s9, 2
    %s16 = sadd.s32 %s9, 1
    %s17 = ssub.s32 %s9, %s16
    %p18 = scmp.eq.s32.totalorder %s17, 0
    %s20 = sadd.s32 %s19, 1
    %s21 = scalar_select %p18, %s19, %s20
    %p24 = pneg %p18
    %p25 = scmp.eq.s32.totalorder %s9, 1
    %p26 = por %p24, %p25
    %p27 = scmp.ne.s32.totalorder %s19, %s22
    %p28 = scmp.eq.s32.totalorder %s9, 0
    %p29 = por %p27, %p28
    %p30 = scmp.ne.s32.totalorder %s19, %s22
    %p31 = scmp.eq.s32.totalorder %s14, 1
    %p32 = por %p30, %p31
    %p33 = scmp.ne.s32.totalorder %s22, %s23
    %p34 = scmp.eq.s32.totalorder %s14, 0
    %p35 = por %p33, %p34
    %p36 = scmp.ne.s32.totalorder %s22, %s23
    %p37 = scmp.eq.s32.totalorder %s15, 1
    %p38 = por %p36, %p37
    %p40 = scmp.ne.s32.totalorder %s23, %s39
    %p41 = scmp.eq.s32.totalorder %s15, 0
    %p42 = por %p40, %p41
    %s44 = sadd.s32 %s43, 1
    %p47 = scmp.eq.s32.totalorder %s9, 1
    %p48 = scmp.ne.s32.totalorder %s43, %s45
    %p49 = scmp.eq.s32.totalorder %s9, 0
    %p50 = por %p48, %p49
    %p51 = scmp.ne.s32.totalorder %s43, %s45
    %p52 = scmp.eq.s32.totalorder %s14, 1
    %p53 = por %p51, %p52
    %p54 = scmp.ne.s32.totalorder %s45, %s46
    %p55 = scmp.eq.s32.totalorder %s14, 0
    %p56 = por %p54, %p55
    %p57 = scmp.ne.s32.totalorder %s45, %s46
    %p58 = scmp.eq.s32.totalorder %s15, 1
    %p59 = por %p57, %p58
    %p61 = scmp.ne.s32.totalorder %s46, %s60
    %p62 = scmp.eq.s32.totalorder %s15, 0
    %p63 = por %p61, %p62
    %s65 = sadd.s32 %s64, 1
    %p68 = scmp.eq.s32.totalorder %s9, 1
    %p69 = scmp.ne.s32.totalorder %s64, %s66
    %p70 = scmp.eq.s32.totalorder %s9, 0
    %p71 = por %p69, %p70
    %p72 = scmp.ne.s32.totalorder %s64, %s66
    %p73 = scmp.eq.s32.totalorder %s14, 1
    %p74 = por %p72, %p73
    %p75 = scmp.ne.s32.totalorder %s66, %s67
    %p76 = scmp.eq.s32.totalorder %s14, 0
    %p77 = por %p75, %p76
    %p78 = scmp.ne.s32.totalorder %s66, %s67
    %p79 = scmp.eq.s32.totalorder %s15, 1
    %p80 = por %p78, %p79
    %p82 = scmp.ne.s32.totalorder %s67, %s81
    %p83 = scmp.eq.s32.totalorder %s15, 0
    %p84 = por %p82, %p83
    %s85 = ssub.s32 %s9, %s16
    %p86 = scmp.eq.s32.totalorder %s85, 0
    %s88 = sadd.s32 %s87, 1
    %s89 = scalar_select %p86, %s87, %s88
    %p92 = pneg %p86
    %p93 = scmp.eq.s32.totalorder %s9, 1
    %p94 = por %p92, %p93
    %p95 = scmp.ne.s32.totalorder %s87, %s90
    %p96 = scmp.eq.s32.totalorder %s9, 0
    %p97 = por %p95, %p96
    %p98 = scmp.ne.s32.totalorder %s87, %s90
    %p99 = scmp.eq.s32.totalorder %s14, 1
    %p100 = por %p98, %p99
    %p101 = scmp.ne.s32.totalorder %s90, %s91
    %p102 = scmp.eq.s32.totalorder %s14, 0
    %p103 = por %p101, %p102
    %p104 = scmp.ne.s32.totalorder %s90, %s91
    %p105 = scmp.eq.s32.totalorder %s15, 1
    %p106 = por %p104, %p105
    %p108 = scmp.ne.s32.totalorder %s91, %s107
    %p109 = scmp.eq.s32.totalorder %s15, 0
    %p110 = por %p108, %p109
    %p111 = scmp.le.s32.totalorder 1, %s9
    %p112 = scmp.lt.s32.totalorder %s9, 3
    %p113 = pnand %p111, %p112
    %p114 = pneg %p113
    // Predicated region
    $region9: #{tetris_nn3_forward.10} parent=5 // pred_check
      _
    $region10: #{tetris_nn3_forward.10} parent=5 // pred_check_branch
      %116 = sbr.rel (%p113) target = $region12
    $region11: #{tetris_nn3_forward.10} parent=5 // pred_region
      %s117 = ssub.s32 %s9, 1
      // Predicated region
      $region13: #{tetris_nn3_forward.10} parent=11 // pred_check
        %p118 = pneg %p56
      $region14: #{tetris_nn3_forward.10} parent=11 // pred_check_branch
        %120 = sbr.rel (%p118) target = $region16
      $region15: #{tetris_nn3_forward.10} parent=11 // pred_region
        _
      $region16: #{tetris_nn3_forward.10} parent=11 // pred_fallthru
        _
      // Predicated region
      $region17: #{tetris_nn3_forward.10} parent=11 // pred_check
        %p121 = pneg %p77
      $region18: #{tetris_nn3_forward.10} parent=11 // pred_check_branch
        %123 = sbr.rel (%p121) target = $region20
      $region19: #{tetris_nn3_forward.10} parent=11 // pred_region
        _
      $region20: #{tetris_nn3_forward.10} parent=11 // pred_fallthru
        _
    $region12: #{tetris_nn3_forward.10} parent=5 // pred_fallthru
      _
    %p124 = scmp.lt.s32.totalorder %s9, 2
    // Predicated region
    $region21: #{tetris_nn3_forward.10} parent=5 // pred_check
      %p125 = pneg %p124
    $region22: #{tetris_nn3_forward.10} parent=5 // pred_check_branch
      %127 = sbr.rel (%p125) target = $region24
    $region23: #{tetris_nn3_forward.10} parent=5 // pred_region
      // Predicated region
      $region25: #{tetris_nn3_forward.10} parent=23 // pred_check
        %p128 = pneg %p29
      $region26: #{tetris_nn3_forward.10} parent=23 // pred_check_branch
        %130 = sbr.rel (%p128) target = $region28
      $region27: #{tetris_nn3_forward.10} parent=23 // pred_region
        %s131 = smul.u32 32, %s9
        %p132 = scmp.lt.s32.totalorder %s131, 63
        %s133 = scalar_select %p132, %s131, 63
        %s134 = smul.addr %s133, 3
        %s135 = smul.addr %s134, 8
        %s136 = scalar_lea.vmem %s0, %s135
        %s137 = smul.u32 32, %s9
      $region28: #{tetris_nn3_forward.10} parent=23 // pred_fallthru
        _
    $region24: #{tetris_nn3_forward.10} parent=5 // pred_fallthru
      _
    %p138 = scmp.le.s32.totalorder 1, %s9
    %p139 = scmp.lt.s32.totalorder %s9, 3
    %p140 = pnand %p138, %p139
    %p141 = pneg %p140
    // Predicated region
    $region29: #{tetris_nn3_forward.10} parent=5 // pred_check
      _
    $region30: #{tetris_nn3_forward.10} parent=5 // pred_check_branch
      %143 = sbr.rel (%p140) target = $region32
    $region31: #{tetris_nn3_forward.10} parent=5 // pred_region
      %s144 = ssub.s32 %s9, 1
      %s145 = smul.u32 32, %s14
      %p146 = scmp.lt.s32.totalorder %s145, 63
      %s147 = scalar_select %p146, %s145, 63
      %s148 = smul.addr %s147, 3
      %s149 = smul.addr %s148, 8
      %s150 = scalar_lea.vmem %s0, %s149
      %p151 = pneg %p35
      %p152 = pneg %p32
      %p153 = pneg %p56
      %p154 = pneg %p53
      %p155 = pneg %p77
      %p156 = pneg %p74
      %p157 = pneg %p103
      %p158 = pneg %p100
      %s159 = smul.u32 32, %s14
      %p160 = scmp.lt.s32.totalorder %s159, 63
      %s161 = scalar_select %p160, %s159, 63
      %s162 = smul.addr %s161, 8
      %s163 = scalar_lea.vmem %s3, %s162
      %s164 = smul.u32 32, %s14
      %p165 = scmp.lt.s32.totalorder %s164, 63
      %s166 = scalar_select %p165, %s164, 63
      %s167 = smul.addr %s166, 3
      %s168 = smul.addr %s167, 8
      %s169 = scalar_lea.vmem %s0, %s168
      %s170 = smul.u32 32, %s14
      %s171 = smul.u32 32, %s14
      %p172 = scmp.lt.s32.totalorder %s171, 63
      %s173 = scalar_select %p172, %s171, 63
      %s174 = smul.addr %s173, 8
      %s175 = scalar_lea.vmem %s3, %s174
      %s176 = smul.u32 32, %s14
      %v177 = vld [vmem:[%s169] sm:$0xff]
      %v178 = vld [vmem:[%s169 + $0x8] sm:$0xff]
      %v179 = vld [vmem:[%s169 + $0x10] sm:$0xff]
      %v180 = vld [vmem:[%s169 + $0x18] sm:$0xff]
      %v181 = vld [vmem:[%s169 + $0x20] sm:$0xff]
      %v182 = vld [vmem:[%s169 + $0x28] sm:$0xff]
      %v183 = vld [vmem:[%s169 + $0x30] sm:$0xff]
      %v184 = vld [vmem:[%s169 + $0x38] sm:$0xff]
      %v185 = vld [vmem:[%s169 + $0x40] sm:$0xff]
      %v186 = vld [vmem:[%s169 + $0x48] sm:$0xff]
      %v187 = vld [vmem:[%s169 + $0x50] sm:$0xff]
      %v188 = vld [vmem:[%s169 + $0x58] sm:$0xff]
      %v189 = vld [vmem:[%s169 + $0x60] sm:$0xff]
      %v190 = vld [vmem:[%s169 + $0x68] sm:$0xff]
      %v191 = vld [vmem:[%s169 + $0x70] sm:$0xff]
      %v192 = vld [vmem:[%s169 + $0x78] sm:$0xff]
      %v193 = vld [vmem:[%s169 + $0x80] sm:$0xff]
      %v194 = vld [vmem:[%s169 + $0x88] sm:$0xff]
      %v195 = vld [vmem:[%s169 + $0x90] sm:$0xff]
      %v196 = vld [vmem:[%s169 + $0x98] sm:$0xff]
      %v197 = vld [vmem:[%s169 + $0xa0] sm:$0xff]
      %v198 = vld [vmem:[%s169 + $0xa8] sm:$0xff]
      %v199 = vld [vmem:[%s169 + $0xb0] sm:$0xff]
      %v200 = vld [vmem:[%s169 + $0xb8] sm:$0xff]
      %v201 = vld [vmem:[%s169 + $0xc0] sm:$0xff]
      %v202 = vld [vmem:[%s169 + $0xc8] sm:$0xff]
      %v203 = vld [vmem:[%s169 + $0xd0] sm:$0xff]
      %v204 = vld [vmem:[%s169 + $0xd8] sm:$0xff]
      %v205 = vld [vmem:[%s169 + $0xe0] sm:$0xff]
      %v206 = vld [vmem:[%s169 + $0xe8] sm:$0xff]
      %v207 = vld [vmem:[%s169 + $0xf0] sm:$0xff]
      %v208 = vld [vmem:[%s169 + $0xf8] sm:$0xff]
      %v209 = vld [vmem:[%s169 + $0x100] sm:$0xff]
      %v210 = vld [vmem:[%s169 + $0x108] sm:$0xff]
      %v211 = vld [vmem:[%s169 + $0x110] sm:$0xff]
      %v212 = vld [vmem:[%s169 + $0x118] sm:$0xff]
      %v213 = vld [vmem:[%s169 + $0x120] sm:$0xff]
      %v214 = vld [vmem:[%s169 + $0x128] sm:$0xff]
      %v215 = vld [vmem:[%s169 + $0x130] sm:$0xff]
      %v216 = vld [vmem:[%s169 + $0x138] sm:$0xff]
      %v217 = vld [vmem:[%s169 + $0x140] sm:$0xff]
      %v218 = vld [vmem:[%s169 + $0x148] sm:$0xff]
      %v219 = vld [vmem:[%s169 + $0x150] sm:$0xff]
      %v220 = vld [vmem:[%s169 + $0x158] sm:$0xff]
      %v221 = vld [vmem:[%s169 + $0x160] sm:$0xff]
      %v222 = vld [vmem:[%s169 + $0x168] sm:$0xff]
      %v223 = vld [vmem:[%s169 + $0x170] sm:$0xff]
      %v224 = vld [vmem:[%s169 + $0x178] sm:$0xff]
      %v225 = vld [vmem:[%s169 + $0x180] sm:$0xff]
      %v226 = vld [vmem:[%s169 + $0x188] sm:$0xff]
      %v227 = vld [vmem:[%s169 + $0x190] sm:$0xff]
      %v228 = vld [vmem:[%s169 + $0x198] sm:$0xff]
      %v229 = vld [vmem:[%s169 + $0x1a0] sm:$0xff]
      %v230 = vld [vmem:[%s169 + $0x1a8] sm:$0xff]
      %v231 = vld [vmem:[%s169 + $0x1b0] sm:$0xff]
      %v232 = vld [vmem:[%s169 + $0x1b8] sm:$0xff]
      %v233 = vld [vmem:[%s169 + $0x1c0] sm:$0xff]
      %v234 = vld [vmem:[%s169 + $0x1c8] sm:$0xff]
      %v235 = vld [vmem:[%s169 + $0x1d0] sm:$0xff]
      %v236 = vld [vmem:[%s169 + $0x1d8] sm:$0xff]
      %v237 = vld [vmem:[%s169 + $0x1e0] sm:$0xff]
      %v238 = vld [vmem:[%s169 + $0x1e8] sm:$0xff]
      %v239 = vld [vmem:[%s169 + $0x1f0] sm:$0xff]
      %v240 = vld [vmem:[%s169 + $0x1f8] sm:$0xff]
      %v241 = vld [vmem:[%s169 + $0x200] sm:$0xff]
      %v242 = vld [vmem:[%s169 + $0x208] sm:$0xff]
      %v243 = vld [vmem:[%s169 + $0x210] sm:$0xff]
      %v244 = vld [vmem:[%s169 + $0x218] sm:$0xff]
      %v245 = vld [vmem:[%s169 + $0x220] sm:$0xff]
      %v246 = vld [vmem:[%s169 + $0x228] sm:$0xff]
      %v247 = vld [vmem:[%s169 + $0x230] sm:$0xff]
      %v248 = vld [vmem:[%s169 + $0x238] sm:$0xff]
      %v249 = vld [vmem:[%s169 + $0x240] sm:$0xff]
      %v250 = vld [vmem:[%s169 + $0x248] sm:$0xff]
      %v251 = vld [vmem:[%s169 + $0x250] sm:$0xff]
      %v252 = vld [vmem:[%s169 + $0x258] sm:$0xff]
      %v253 = vld [vmem:[%s169 + $0x260] sm:$0xff]
      %v254 = vld [vmem:[%s169 + $0x268] sm:$0xff]
      %v255 = vld [vmem:[%s169 + $0x270] sm:$0xff]
      %v256 = vld [vmem:[%s169 + $0x278] sm:$0xff]
      %v257 = vld [vmem:[%s169 + $0x280] sm:$0xff]
      %v258 = vld [vmem:[%s169 + $0x288] sm:$0xff]
      %v259 = vld [vmem:[%s169 + $0x290] sm:$0xff]
      %v260 = vld [vmem:[%s169 + $0x298] sm:$0xff]
      %v261 = vld [vmem:[%s169 + $0x2a0] sm:$0xff]
      %v262 = vld [vmem:[%s169 + $0x2a8] sm:$0xff]
      %v263 = vld [vmem:[%s169 + $0x2b0] sm:$0xff]
      %v264 = vld [vmem:[%s169 + $0x2b8] sm:$0xff]
      %v265 = vld [vmem:[%s169 + $0x2c0] sm:$0xff]
      %v266 = vld [vmem:[%s169 + $0x2c8] sm:$0xff]
      %v267 = vld [vmem:[%s169 + $0x2d0] sm:$0xff]
      %v268 = vld [vmem:[%s169 + $0x2d8] sm:$0xff]
      %v269 = vld [vmem:[%s169 + $0x2e0] sm:$0xff]
      %v270 = vld [vmem:[%s169 + $0x2e8] sm:$0xff]
      %v271 = vld [vmem:[%s169 + $0x2f0] sm:$0xff]
      %v272 = vld [vmem:[%s169 + $0x2f8] sm:$0xff]
      %v273 = vld [vmem:[%s1] sm:$0xff]
      %v274 = vld [vmem:[%s1 + $0x8] sm:$0xff]
      %v275 = vld [vmem:[%s1 + $0x10] sm:$0xff]
      %v276 = vld [vmem:[%s1 + $0x18] sm:$0xff]
      %v277 = vld [vmem:[%s1 + $0x20] sm:$0xff]
      %v278 = vld [vmem:[%s1 + $0x28] sm:$0xff]
      %v279 = vld [vmem:[%s1 + $0x30] sm:$0xff]
      %v280 = vld [vmem:[%s1 + $0x38] sm:$0xff]
      %v281 = vld [vmem:[%s1 + $0x40] sm:$0xff]
      %v282 = vld [vmem:[%s1 + $0x48] sm:$0xff]
      %v283 = vld [vmem:[%s1 + $0x50] sm:$0xff]
      %v284 = vld [vmem:[%s1 + $0x58] sm:$0xff]
      %v285 = vld [vmem:[%s1 + $0x60] sm:$0xff]
      %v286 = vld [vmem:[%s1 + $0x68] sm:$0xff]
      %v287 = vld [vmem:[%s1 + $0x70] sm:$0xff]
      %v288 = vld [vmem:[%s1 + $0x78] sm:$0xff]
      %v289 = vld [vmem:[%s1 + $0x80] sm:$0xff]
      %v290 = vld [vmem:[%s1 + $0x88] sm:$0xff]
      %v291 = vld [vmem:[%s1 + $0x90] sm:$0xff]
      %v292 = vld [vmem:[%s1 + $0x98] sm:$0xff]
      %v293 = vld [vmem:[%s1 + $0xa0] sm:$0xff]
      %v294 = vld [vmem:[%s1 + $0xa8] sm:$0xff]
      %v295 = vld [vmem:[%s1 + $0xb0] sm:$0xff]
      %v296 = vld [vmem:[%s1 + $0xb8] sm:$0xff]
      %v297 = vld [vmem:[%s1 + $0xc0] sm:$0xff]
      %v298 = vld [vmem:[%s1 + $0xc8] sm:$0xff]
      %v299 = vld [vmem:[%s1 + $0xd0] sm:$0xff]
      %v300 = vld [vmem:[%s1 + $0xd8] sm:$0xff]
      %v301 = vld [vmem:[%s1 + $0xe0] sm:$0xff]
      %v302 = vld [vmem:[%s1 + $0xe8] sm:$0xff]
      %v303 = vld [vmem:[%s1 + $0xf0] sm:$0xff]
      %v304 = vld [vmem:[%s1 + $0xf8] sm:$0xff]
      %v305 = vld [vmem:[%s1 + $0x100] sm:$0xff]
      %v306 = vld [vmem:[%s1 + $0x108] sm:$0xff]
      %v307 = vld [vmem:[%s1 + $0x110] sm:$0xff]
      %v308 = vld [vmem:[%s1 + $0x118] sm:$0xff]
      %v309 = vld [vmem:[%s1 + $0x120] sm:$0xff]
      %v310 = vld [vmem:[%s1 + $0x128] sm:$0xff]
      %v311 = vld [vmem:[%s1 + $0x130] sm:$0xff]
      %v312 = vld [vmem:[%s1 + $0x138] sm:$0xff]
      %v313 = vld [vmem:[%s1 + $0x140] sm:$0xff]
      %v314 = vld [vmem:[%s1 + $0x148] sm:$0xff]
      %v315 = vld [vmem:[%s1 + $0x150] sm:$0xff]
      %v316 = vld [vmem:[%s1 + $0x158] sm:$0xff]
      %v317 = vld [vmem:[%s1 + $0x160] sm:$0xff]
      %v318 = vld [vmem:[%s1 + $0x168] sm:$0xff]
      %v319 = vld [vmem:[%s1 + $0x170] sm:$0xff]
      %v320 = vld [vmem:[%s1 + $0x178] sm:$0xff]
      %v321 = vld [vmem:[%s2] sm:$0x1]
      %v323 = vlaneseq
      %v324 = vshrl.u32 %v323, 7
      %v325 = vsub.s32 0, %v324
      %v326 = vrot.slane %v321, %v325
      %328 = vmatprep.subr.mxu0 0.0
      %329 = vmatpush1.msra.mxu0 %v273
      %330 = vmatprep.subr.mxu0 0.0
      %331 = vmatpush1.msra.mxu0 %v274
      %332 = vmatprep.subr.mxu0 0.0
      %333 = vmatpush1.msra.mxu0 %v275
      %334 = vmatprep.subr.mxu0 0.0
      %335 = vmatpush1.msra.mxu0 %v276
      %336 = vmatprep.subr.mxu0 0.0
      %337 = vmatpush1.msra.mxu0 %v277
      %338 = vmatprep.subr.mxu0 0.0
      %339 = vmatpush1.msra.mxu0 %v278
      %340 = vmatprep.subr.mxu0 0.0
      %341 = vmatpush1.msra.mxu0 %v279
      %342 = vmatprep.subr.mxu0 0.0
      %343 = vmatpush1.msra.mxu0 %v280
      %344 = vmatprep.subr.mxu0 0.0
      %345 = vmatpush1.msra.mxu0 %v281
      %346 = vmatprep.subr.mxu0 0.0
      %347 = vmatpush1.msra.mxu0 %v282
      %348 = vmatprep.subr.mxu0 0.0
      %349 = vmatpush1.msra.mxu0 %v283
      %350 = vmatprep.subr.mxu0 0.0
      %351 = vmatpush1.msra.mxu0 %v284
      %352 = vmatprep.subr.mxu0 0.0
      %353 = vmatpush1.msra.mxu0 %v285
      %354 = vmatprep.subr.mxu0 0.0
      %355 = vmatpush1.msra.mxu0 %v286
      %356 = vmatprep.subr.mxu0 0.0
      %357 = vmatpush1.msra.mxu0 %v287
      %358 = vmatprep.subr.mxu0 0.0
      %359 = vmatpush1.msra.mxu0 %v288
      %360 = vmatprep.subr.mxu0 0.0
      %361 = vmatpush1.msra.mxu0 %v289
      %362 = vmatprep.subr.mxu0 0.0
      %363 = vmatpush1.msra.mxu0 %v290
      %364 = vmatprep.subr.mxu0 0.0
      %365 = vmatpush1.msra.mxu0 %v291
      %366 = vmatprep.subr.mxu0 0.0
      %367 = vmatpush1.msra.mxu0 %v292
      %368 = vmatprep.subr.mxu0 0.0
      %369 = vmatpush1.msra.mxu0 %v293
      %370 = vmatprep.subr.mxu0 0.0
      %371 = vmatpush1.msra.mxu0 %v294
      %372 = vmatprep.subr.mxu0 0.0
      %373 = vmatpush1.msra.mxu0 %v295
      %374 = vmatprep.subr.mxu0 0.0
      %375 = vmatpush1.msra.mxu0 %v296
      %376 = vmatprep.subr.mxu0 0.0
      %377 = vmatpush1.msra.mxu0 %v297
      %378 = vmatprep.subr.mxu0 0.0
      %379 = vmatpush1.msra.mxu0 %v298
      %380 = vmatprep.subr.mxu0 0.0
      %381 = vmatpush1.msra.mxu0 %v299
      %382 = vmatprep.subr.mxu0 0.0
      %383 = vmatpush1.msra.mxu0 %v300
      %384 = vmatprep.subr.mxu0 0.0
      %385 = vmatpush1.msra.mxu0 %v301
      %386 = vmatprep.subr.mxu0 0.0
      %387 = vmatpush1.msra.mxu0 %v302
      %388 = vmatprep.subr.mxu0 0.0
      %389 = vmatpush1.msra.mxu0 %v303
      %390 = vmatprep.subr.mxu0 0.0
      %391 = vmatpush1.msra.mxu0 %v304
      %392 = vmatprep.mubr.f32.mxu0 %v178
      %393 = vmatmul.mubr.f32.gmra.mrb[0].mxu0 %v177
      %v394 = vpop.f32.mrb[0].mxu0
      %v395 = vadd.f32 %v326, %v394
      %v396 = vpop.f32.mrb[0].mxu0
      %397 = vmatprep.mubr.f32.mxu0 %v181
      %398 = vmatmul.mubr.f32.gmra.mrb[0].mxu0 %v180
      %v399 = vpop.f32.mrb[0].mxu0
      %v400 = vadd.f32 %v326, %v399
      %v401 = vpop.f32.mrb[0].mxu0
      %402 = vmatprep.mubr.f32.mxu0 %v184
      %403 = vmatmul.mubr.f32.gmra.mrb[0].mxu0 %v183
      %v404 = vpop.f32.mrb[0].mxu0
      %v405 = vadd.f32 %v326, %v404
      %v406 = vpop.f32.mrb[0].mxu0
      %407 = vmatprep.mubr.f32.mxu0 %v187
      %408 = vmatmul.mubr.f32.gmra.mrb[0].mxu0 %v186
      %v409 = vpop.f32.mrb[0].mxu0
      %v410 = vadd.f32 %v326, %v409
      %v411 = vpop.f32.mrb[0].mxu0
      %412 = vmatprep.mubr.f32.mxu0 %v190
      %413 = vmatmul.mubr.f32.gmra.mrb[0].mxu0 %v189
      %v414 = vpop.f32.mrb[0].mxu0
      %v415 = vadd.f32 %v326, %v414
      %v416 = vpop.f32.mrb[0].mxu0
      %417 = vmatprep.mubr.f32.mxu0 %v193
      %418 = vmatmul.mubr.f32.gmra.mrb[0].mxu0 %v192
      %v419 = vpop.f32.mrb[0].mxu0
      %v420 = vadd.f32 %v326, %v419
      %v421 = vpop.f32.mrb[0].mxu0
      %422 = vmatprep.mubr.f32.mxu0 %v196
      %423 = vmatmul.mubr.f32.gmra.mrb[0].mxu0 %v195
      %v424 = vpop.f32.mrb[0].mxu0
      %v425 = vadd.f32 %v326, %v424
      %v426 = vpop.f32.mrb[0].mxu0
      %427 = vmatprep.mubr.f32.mxu0 %v199
      %428 = vmatmul.mubr.f32.gmra.mrb[0].mxu0 %v198
      %v429 = vpop.f32.mrb[0].mxu0
      %v430 = vadd.f32 %v326, %v429
      %v431 = vpop.f32.mrb[0].mxu0
      %432 = vmatprep.mubr.f32.mxu0 %v202
      %433 = vmatmul.mubr.f32.gmra.mrb[0].mxu0 %v201
      %v434 = vpop.f32.mrb[0].mxu0
      %v435 = vadd.f32 %v326, %v434
      %v436 = vpop.f32.mrb[0].mxu0
      %437 = vmatprep.mubr.f32.mxu0 %v205
      %438 = vmatmul.mubr.f32.gmra.mrb[0].mxu0 %v204
      %v439 = vpop.f32.mrb[0].mxu0
      %v440 = vadd.f32 %v326, %v439
      %v441 = vpop.f32.mrb[0].mxu0
      %442 = vmatprep.mubr.f32.mxu0 %v208
      %443 = vmatmul.mubr.f32.gmra.mrb[0].mxu0 %v207
      %v444 = vpop.f32.mrb[0].mxu0
      %v445 = vadd.f32 %v326, %v444
      %v446 = vpop.f32.mrb[0].mxu0
      %447 = vmatprep.mubr.f32.mxu0 %v211
      %448 = vmatmul.mubr.f32.gmra.mrb[0].mxu0 %v210
      %v449 = vpop.f32.mrb[0].mxu0
      %v450 = vadd.f32 %v326, %v449
      %v451 = vpop.f32.mrb[0].mxu0
      %452 = vmatprep.mubr.f32.mxu0 %v214
      %453 = vmatmul.mubr.f32.gmra.mrb[0].mxu0 %v213
      %v454 = vpop.f32.mrb[0].mxu0
      %v455 = vadd.f32 %v326, %v454
      %v456 = vpop.f32.mrb[0].mxu0
      %457 = vmatprep.mubr.f32.mxu0 %v217
      %458 = vmatmul.mubr.f32.gmra.mrb[0].mxu0 %v216
      %v459 = vpop.f32.mrb[0].mxu0
      %v460 = vadd.f32 %v326, %v459
      %v461 = vpop.f32.mrb[0].mxu0
      %462 = vmatprep.mubr.f32.mxu0 %v220
      %463 = vmatmul.mubr.f32.gmra.mrb[0].mxu0 %v219
      %v464 = vpop.f32.mrb[0].mxu0
      %v465 = vadd.f32 %v326, %v464
      %v466 = vpop.f32.mrb[0].mxu0
      %467 = vmatprep.mubr.f32.mxu0 %v223
      %468 = vmatmul.mubr.f32.gmra.mrb[0].mxu0 %v222
      %v469 = vpop.f32.mrb[0].mxu0
      %v470 = vadd.f32 %v326, %v469
      %v471 = vpop.f32.mrb[0].mxu0
      %472 = vmatprep.mubr.f32.mxu0 %v226
      %473 = vmatmul.mubr.f32.gmra.mrb[0].mxu0 %v225
      %v474 = vpop.f32.mrb[0].mxu0
      %v475 = vadd.f32 %v326, %v474
      %v476 = vpop.f32.mrb[0].mxu0
      %477 = vmatprep.mubr.f32.mxu0 %v229
      %478 = vmatmul.mubr.f32.gmra.mrb[0].mxu0 %v228
      %v479 = vpop.f32.mrb[0].mxu0
      %v480 = vadd.f32 %v326, %v479
      %v481 = vpop.f32.mrb[0].mxu0
      %482 = vmatprep.mubr.f32.mxu0 %v232
      %483 = vmatmul.mubr.f32.gmra.mrb[0].mxu0 %v231
      %v484 = vpop.f32.mrb[0].mxu0
      %v485 = vadd.f32 %v326, %v484
      %v486 = vpop.f32.mrb[0].mxu0
      %487 = vmatprep.mubr.f32.mxu0 %v235
      %488 = vmatmul.mubr.f32.gmra.mrb[0].mxu0 %v234
      %v489 = vpop.f32.mrb[0].mxu0
      %v490 = vadd.f32 %v326, %v489
      %v491 = vpop.f32.mrb[0].mxu0
      %492 = vmatprep.mubr.f32.mxu0 %v238
      %493 = vmatmul.mubr.f32.gmra.mrb[0].mxu0 %v237
      %v494 = vpop.f32.mrb[0].mxu0
      %v495 = vadd.f32 %v326, %v494
      %v496 = vpop.f32.mrb[0].mxu0
      %497 = vmatprep.mubr.f32.mxu0 %v241
      %498 = vmatmul.mubr.f32.gmra.mrb[0].mxu0 %v240
      %v499 = vpop.f32.mrb[0].mxu0
      %v500 = vadd.f32 %v326, %v499
      %v501 = vpop.f32.mrb[0].mxu0
      %502 = vmatprep.mubr.f32.mxu0 %v244
      %503 = vmatmul.mubr.f32.gmra.mrb[0].mxu0 %v243
      %v504 = vpop.f32.mrb[0].mxu0
      %v505 = vadd.f32 %v326, %v504
      %v506 = vpop.f32.mrb[0].mxu0
      %507 = vmatprep.mubr.f32.mxu0 %v247
      %508 = vmatmul.mubr.f32.gmra.mrb[0].mxu0 %v246
      %v509 = vpop.f32.mrb[0].mxu0
      %v510 = vadd.f32 %v326, %v509
      %v511 = vpop.f32.mrb[0].mxu0
      %512 = vmatprep.mubr.f32.mxu0 %v250
      %513 = vmatmul.mubr.f32.gmra.mrb[0].mxu0 %v249
      %v514 = vpop.f32.mrb[0].mxu0
      %v515 = vadd.f32 %v326, %v514
      %v516 = vpop.f32.mrb[0].mxu0
      %517 = vmatprep.mubr.f32.mxu0 %v253
      %518 = vmatmul.mubr.f32.gmra.mrb[0].mxu0 %v252
      %v519 = vpop.f32.mrb[0].mxu0
      %v520 = vadd.f32 %v326, %v519
      %v521 = vpop.f32.mrb[0].mxu0
      %522 = vmatprep.mubr.f32.mxu0 %v256
      %523 = vmatmul.mubr.f32.gmra.mrb[0].mxu0 %v255
      %v524 = vpop.f32.mrb[0].mxu0
      %v525 = vadd.f32 %v326, %v524
      %v526 = vpop.f32.mrb[0].mxu0
      %527 = vmatprep.mubr.f32.mxu0 %v259
      %528 = vmatmul.mubr.f32.gmra.mrb[0].mxu0 %v258
      %v529 = vpop.f32.mrb[0].mxu0
      %v530 = vadd.f32 %v326, %v529
      %v531 = vpop.f32.mrb[0].mxu0
      %532 = vmatprep.mubr.f32.mxu0 %v262
      %533 = vmatmul.mubr.f32.gmra.mrb[0].mxu0 %v261
      %v534 = vpop.f32.mrb[0].mxu0
      %v535 = vadd.f32 %v326, %v534
      %v536 = vpop.f32.mrb[0].mxu0
      %537 = vmatprep.mubr.f32.mxu0 %v265
      %538 = vmatmul.mubr.f32.gmra.mrb[0].mxu0 %v264
      %v539 = vpop.f32.mrb[0].mxu0
      %v540 = vadd.f32 %v326, %v539
      %v541 = vpop.f32.mrb[0].mxu0
      %542 = vmatprep.mubr.f32.mxu0 %v268
      %543 = vmatmul.mubr.f32.gmra.mrb[0].mxu0 %v267
      %v544 = vpop.f32.mrb[0].mxu0
      %v545 = vadd.f32 %v326, %v544
      %v546 = vpop.f32.mrb[0].mxu0
      %547 = vmatprep.mubr.f32.mxu0 %v271
      %548 = vmatmul.mubr.f32.gmra.mrb[0].mxu0 %v270
      %v549 = vpop.f32.mrb[0].mxu0
      %v550 = vadd.f32 %v326, %v549
      %v551 = vpop.f32.mrb[0].mxu0
      %552 = vdwg.mxu0
      %553 = vmatprep.subr.mxu0 0.0
      %554 = vmatpush1.msra.mxu0 %v305
      %555 = vmatprep.subr.mxu0 0.0
      %556 = vmatpush1.msra.mxu0 %v306
      %557 = vmatprep.subr.mxu0 0.0
      %558 = vmatpush1.msra.mxu0 %v307
      %559 = vmatprep.subr.mxu0 0.0
      %560 = vmatpush1.msra.mxu0 %v308
      %561 = vmatprep.subr.mxu0 0.0
      %562 = vmatpush1.msra.mxu0 %v309
      %563 = vmatprep.subr.mxu0 0.0
      %564 = vmatpush1.msra.mxu0 %v310
      %565 = vmatprep.subr.mxu0 0.0
      %566 = vmatpush1.msra.mxu0 %v311
      %567 = vmatprep.subr.mxu0 0.0
      %568 = vmatpush1.msra.mxu0 %v312
      %569 = vmatprep.subr.mxu0 0.0
      %570 = vmatpush1.msra.mxu0 %v313
      %571 = vmatprep.subr.mxu0 0.0
      %572 = vmatpush1.msra.mxu0 %v314
      %573 = vmatprep.subr.mxu0 0.0
      %574 = vmatpush1.msra.mxu0 %v315
      %575 = vmatprep.subr.mxu0 0.0
      %576 = vmatpush1.msra.mxu0 %v316
      %577 = vmatprep.subr.mxu0 0.0
      %578 = vmatpush1.msra.mxu0 %v317
      %579 = vmatprep.subr.mxu0 0.0
      %580 = vmatpush1.msra.mxu0 %v318
      %581 = vmatprep.subr.mxu0 0.0
      %582 = vmatpush1.msra.mxu0 %v319
      %583 = vmatprep.subr.mxu0 0.0
      %584 = vmatpush1.msra.mxu0 %v320
      %585 = vmatprep.subr.mxu0 0.0
      %586 = vmatpush1.msra.mxu0 0.0
      %587 = vmatprep.subr.mxu0 0.0
      %588 = vmatpush1.msra.mxu0 0.0
      %589 = vmatprep.subr.mxu0 0.0
      %590 = vmatpush1.msra.mxu0 0.0
      %591 = vmatprep.subr.mxu0 0.0
      %592 = vmatpush1.msra.mxu0 0.0
      %593 = vmatprep.subr.mxu0 0.0
      %594 = vmatpush1.msra.mxu0 0.0
      %595 = vmatprep.subr.mxu0 0.0
      %596 = vmatpush1.msra.mxu0 0.0
      %597 = vmatprep.subr.mxu0 0.0
      %598 = vmatpush1.msra.mxu0 0.0
      %599 = vmatprep.subr.mxu0 0.0
      %600 = vmatpush1.msra.mxu0 0.0
      %601 = vmatprep.subr.mxu0 0.0
      %602 = vmatpush1.msra.mxu0 0.0
      %603 = vmatprep.subr.mxu0 0.0
      %604 = vmatpush1.msra.mxu0 0.0
      %605 = vmatprep.subr.mxu0 0.0
      %606 = vmatpush1.msra.mxu0 0.0
      %607 = vmatprep.subr.mxu0 0.0
      %608 = vmatpush1.msra.mxu0 0.0
      %609 = vmatprep.subr.mxu0 0.0
      %610 = vmatpush1.msra.mxu0 0.0
      %611 = vmatprep.subr.mxu0 0.0
      %612 = vmatpush1.msra.mxu0 0.0
      %613 = vmatprep.subr.mxu0 0.0
      %614 = vmatpush1.msra.mxu0 0.0
      %615 = vmatprep.subr.mxu0 0.0
      %616 = vmatpush1.msra.mxu0 0.0
      %617 = vmatprep.mubr.f32.mxu0 0.0
      %618 = vmatmul.mubr.f32.gmra.mrb[0].mxu0 %v179
      %v619 = vpop.f32.mrb[0].mxu0
      %v620 = vadd.f32 %v395, %v619
      %v621 = vpop.f32.mrb[0].mxu0
      %622 = vmatprep.mubr.f32.mxu0 0.0
      %623 = vmatmul.mubr.f32.gmra.mrb[0].mxu0 %v182
      %v624 = vpop.f32.mrb[0].mxu0
      %v625 = vadd.f32 %v400, %v624
      %v626 = vpop.f32.mrb[0].mxu0
      %627 = vmatprep.mubr.f32.mxu0 0.0
      %628 = vmatmul.mubr.f32.gmra.mrb[0].mxu0 %v185
      %v629 = vpop.f32.mrb[0].mxu0
      %v630 = vadd.f32 %v405, %v629
      %v631 = vpop.f32.mrb[0].mxu0
      %632 = vmatprep.mubr.f32.mxu0 0.0
      %633 = vmatmul.mubr.f32.gmra.mrb[0].mxu0 %v188
      %v634 = vpop.f32.mrb[0].mxu0
      %v635 = vadd.f32 %v410, %v634
      %v636 = vpop.f32.mrb[0].mxu0
      %637 = vmatprep.mubr.f32.mxu0 0.0
      %638 = vmatmul.mubr.f32.gmra.mrb[0].mxu0 %v191
      %v639 = vpop.f32.mrb[0].mxu0
      %v640 = vadd.f32 %v415, %v639
      %v641 = vpop.f32.mrb[0].mxu0
      %642 = vmatprep.mubr.f32.mxu0 0.0
      %643 = vmatmul.mubr.f32.gmra.mrb[0].mxu0 %v194
      %v644 = vpop.f32.mrb[0].mxu0
      %v645 = vadd.f32 %v420, %v644
      %v646 = vpop.f32.mrb[0].mxu0
      %647 = vmatprep.mubr.f32.mxu0 0.0
      %648 = vmatmul.mubr.f32.gmra.mrb[0].mxu0 %v197
      %v649 = vpop.f32.mrb[0].mxu0
      %v650 = vadd.f32 %v425, %v649
      %v651 = vpop.f32.mrb[0].mxu0
      %652 = vmatprep.mubr.f32.mxu0 0.0
      %653 = vmatmul.mubr.f32.gmra.mrb[0].mxu0 %v200
      %v654 = vpop.f32.mrb[0].mxu0
      %v655 = vadd.f32 %v430, %v654
      %v656 = vpop.f32.mrb[0].mxu0
      %657 = vmatprep.mubr.f32.mxu0 0.0
      %658 = vmatmul.mubr.f32.gmra.mrb[0].mxu0 %v203
      %v659 = vpop.f32.mrb[0].mxu0
      %v660 = vadd.f32 %v435, %v659
      %v661 = vpop.f32.mrb[0].mxu0
      %662 = vmatprep.mubr.f32.mxu0 0.0
      %663 = vmatmul.mubr.f32.gmra.mrb[0].mxu0 %v206
      %v664 = vpop.f32.mrb[0].mxu0
      %v665 = vadd.f32 %v440, %v664
      %v666 = vpop.f32.mrb[0].mxu0
      %667 = vmatprep.mubr.f32.mxu0 0.0
      %668 = vmatmul.mubr.f32.gmra.mrb[0].mxu0 %v209
      %v669 = vpop.f32.mrb[0].mxu0
      %v670 = vadd.f32 %v445, %v669
      %v671 = vpop.f32.mrb[0].mxu0
      %672 = vmatprep.mubr.f32.mxu0 0.0
      %673 = vmatmul.mubr.f32.gmra.mrb[0].mxu0 %v212
      %v674 = vpop.f32.mrb[0].mxu0
      %v675 = vadd.f32 %v450, %v674
      %v676 = vpop.f32.mrb[0].mxu0
      %677 = vmatprep.mubr.f32.mxu0 0.0
      %678 = vmatmul.mubr.f32.gmra.mrb[0].mxu0 %v215
      %v679 = vpop.f32.mrb[0].mxu0
      %v680 = vadd.f32 %v455, %v679
      %v681 = vpop.f32.mrb[0].mxu0
      %682 = vmatprep.mubr.f32.mxu0 0.0
      %683 = vmatmul.mubr.f32.gmra.mrb[0].mxu0 %v218
      %v684 = vpop.f32.mrb[0].mxu0
      %v685 = vadd.f32 %v460, %v684
      %v686 = vpop.f32.mrb[0].mxu0
      %687 = vmatprep.mubr.f32.mxu0 0.0
      %688 = vmatmul.mubr.f32.gmra.mrb[0].mxu0 %v221
      %v689 = vpop.f32.mrb[0].mxu0
      %v690 = vadd.f32 %v465, %v689
      %v691 = vpop.f32.mrb[0].mxu0
      %692 = vmatprep.mubr.f32.mxu0 0.0
      %693 = vmatmul.mubr.f32.gmra.mrb[0].mxu0 %v224
      %v694 = vpop.f32.mrb[0].mxu0
      %v695 = vadd.f32 %v470, %v694
      %v696 = vpop.f32.mrb[0].mxu0
      %697 = vmatprep.mubr.f32.mxu0 0.0
      %698 = vmatmul.mubr.f32.gmra.mrb[0].mxu0 %v227
      %v699 = vpop.f32.mrb[0].mxu0
      %v700 = vadd.f32 %v475, %v699
      %v701 = vpop.f32.mrb[0].mxu0
      %702 = vmatprep.mubr.f32.mxu0 0.0
      %703 = vmatmul.mubr.f32.gmra.mrb[0].mxu0 %v230
      %v704 = vpop.f32.mrb[0].mxu0
      %v705 = vadd.f32 %v480, %v704
      %v706 = vpop.f32.mrb[0].mxu0
      %707 = vmatprep.mubr.f32.mxu0 0.0
      %708 = vmatmul.mubr.f32.gmra.mrb[0].mxu0 %v233
      %v709 = vpop.f32.mrb[0].mxu0
      %v710 = vadd.f32 %v485, %v709
      %v711 = vpop.f32.mrb[0].mxu0
      %712 = vmatprep.mubr.f32.mxu0 0.0
      %713 = vmatmul.mubr.f32.gmra.mrb[0].mxu0 %v236
      %v714 = vpop.f32.mrb[0].mxu0
      %v715 = vadd.f32 %v490, %v714
      %v716 = vpop.f32.mrb[0].mxu0
      %717 = vmatprep.mubr.f32.mxu0 0.0
      %718 = vmatmul.mubr.f32.gmra.mrb[0].mxu0 %v239
      %v719 = vpop.f32.mrb[0].mxu0
      %v720 = vadd.f32 %v495, %v719
      %v721 = vpop.f32.mrb[0].mxu0
      %722 = vmatprep.mubr.f32.mxu0 0.0
      %723 = vmatmul.mubr.f32.gmra.mrb[0].mxu0 %v242
      %v724 = vpop.f32.mrb[0].mxu0
      %v725 = vadd.f32 %v500, %v724
      %v726 = vpop.f32.mrb[0].mxu0
      %727 = vmatprep.mubr.f32.mxu0 0.0
      %728 = vmatmul.mubr.f32.gmra.mrb[0].mxu0 %v245
      %v729 = vpop.f32.mrb[0].mxu0
      %v730 = vadd.f32 %v505, %v729
      %v731 = vpop.f32.mrb[0].mxu0
      %732 = vmatprep.mubr.f32.mxu0 0.0
      %733 = vmatmul.mubr.f32.gmra.mrb[0].mxu0 %v248
      %v734 = vpop.f32.mrb[0].mxu0
      %v735 = vadd.f32 %v510, %v734
      %v736 = vpop.f32.mrb[0].mxu0
      %737 = vmatprep.mubr.f32.mxu0 0.0
      %738 = vmatmul.mubr.f32.gmra.mrb[0].mxu0 %v251
      %v739 = vpop.f32.mrb[0].mxu0
      %v740 = vadd.f32 %v515, %v739
      %v741 = vpop.f32.mrb[0].mxu0
      %742 = vmatprep.mubr.f32.mxu0 0.0
      %743 = vmatmul.mubr.f32.gmra.mrb[0].mxu0 %v254
      %v744 = vpop.f32.mrb[0].mxu0
      %v745 = vadd.f32 %v520, %v744
      %v746 = vpop.f32.mrb[0].mxu0
      %747 = vmatprep.mubr.f32.mxu0 0.0
      %748 = vmatmul.mubr.f32.gmra.mrb[0].mxu0 %v257
      %v749 = vpop.f32.mrb[0].mxu0
      %v750 = vadd.f32 %v525, %v749
      %v751 = vpop.f32.mrb[0].mxu0
      %752 = vmatprep.mubr.f32.mxu0 0.0
      %753 = vmatmul.mubr.f32.gmra.mrb[0].mxu0 %v260
      %v754 = vpop.f32.mrb[0].mxu0
      %v755 = vadd.f32 %v530, %v754
      %v756 = vpop.f32.mrb[0].mxu0
      %757 = vmatprep.mubr.f32.mxu0 0.0
      %758 = vmatmul.mubr.f32.gmra.mrb[0].mxu0 %v263
      %v759 = vpop.f32.mrb[0].mxu0
      %v760 = vadd.f32 %v535, %v759
      %v761 = vpop.f32.mrb[0].mxu0
      %762 = vmatprep.mubr.f32.mxu0 0.0
      %763 = vmatmul.mubr.f32.gmra.mrb[0].mxu0 %v266
      %v764 = vpop.f32.mrb[0].mxu0
      %v765 = vadd.f32 %v540, %v764
      %v766 = vpop.f32.mrb[0].mxu0
      %767 = vmatprep.mubr.f32.mxu0 0.0
      %768 = vmatmul.mubr.f32.gmra.mrb[0].mxu0 %v269
      %v769 = vpop.f32.mrb[0].mxu0
      %v770 = vadd.f32 %v545, %v769
      %v771 = vpop.f32.mrb[0].mxu0
      %772 = vmatprep.mubr.f32.mxu0 0.0
      %773 = vmatmul.mubr.f32.gmra.mrb[0].mxu0 %v272
      %v774 = vpop.f32.mrb[0].mxu0
      %v775 = vadd.f32 %v550, %v774
      %v776 = vpop.f32.mrb[0].mxu0
      %777 = vdwg.mxu0
      %v778 = vmax.f32 %v620, 0.0
      %v779 = vmax.f32 %v625, 0.0
      %v780 = vmax.f32 %v630, 0.0
      %v781 = vmax.f32 %v635, 0.0
      %v782 = vmax.f32 %v640, 0.0
      %v783 = vmax.f32 %v645, 0.0
      %v784 = vmax.f32 %v650, 0.0
      %v785 = vmax.f32 %v655, 0.0
      %v786 = vmax.f32 %v660, 0.0
      %v787 = vmax.f32 %v665, 0.0
      %v788 = vmax.f32 %v670, 0.0
      %v789 = vmax.f32 %v675, 0.0
      %v790 = vmax.f32 %v680, 0.0
      %v791 = vmax.f32 %v685, 0.0
      %v792 = vmax.f32 %v690, 0.0
      %v793 = vmax.f32 %v695, 0.0
      %v794 = vmax.f32 %v700, 0.0
      %v795 = vmax.f32 %v705, 0.0
      %v796 = vmax.f32 %v710, 0.0
      %v797 = vmax.f32 %v715, 0.0
      %v798 = vmax.f32 %v720, 0.0
      %v799 = vmax.f32 %v725, 0.0
      %v800 = vmax.f32 %v730, 0.0
      %v801 = vmax.f32 %v735, 0.0
      %v802 = vmax.f32 %v740, 0.0
      %v803 = vmax.f32 %v745, 0.0
      %v804 = vmax.f32 %v750, 0.0
      %v805 = vmax.f32 %v755, 0.0
      %v806 = vmax.f32 %v760, 0.0
      %v807 = vmax.f32 %v765, 0.0
      %v808 = vmax.f32 %v770, 0.0
      %v809 = vmax.f32 %v775, 0.0
      %810 = vst [vmem:[%s175] sm:$0xff] %v778
      %811 = vst [vmem:[%s175 + $0x8] sm:$0xff] %v779
      %812 = vst [vmem:[%s175 + $0x10] sm:$0xff] %v780
      %813 = vst [vmem:[%s175 + $0x18] sm:$0xff] %v781
      %814 = vst [vmem:[%s175 + $0x20] sm:$0xff] %v782
      %815 = vst [vmem:[%s175 + $0x28] sm:$0xff] %v783
      %816 = vst [vmem:[%s175 + $0x30] sm:$0xff] %v784
      %817 = vst [vmem:[%s175 + $0x38] sm:$0xff] %v785
      %818 = vst [vmem:[%s175 + $0x40] sm:$0xff] %v786
      %819 = vst [vmem:[%s175 + $0x48] sm:$0xff] %v787
      %820 = vst [vmem:[%s175 + $0x50] sm:$0xff] %v788
      %821 = vst [vmem:[%s175 + $0x58] sm:$0xff] %v789
      %822 = vst [vmem:[%s175 + $0x60] sm:$0xff] %v790
      %823 = vst [vmem:[%s175 + $0x68] sm:$0xff] %v791
      %824 = vst [vmem:[%s175 + $0x70] sm:$0xff] %v792
      %825 = vst [vmem:[%s175 + $0x78] sm:$0xff] %v793
      %826 = vst [vmem:[%s175 + $0x80] sm:$0xff] %v794
      %827 = vst [vmem:[%s175 + $0x88] sm:$0xff] %v795
      %828 = vst [vmem:[%s175 + $0x90] sm:$0xff] %v796
      %829 = vst [vmem:[%s175 + $0x98] sm:$0xff] %v797
      %830 = vst [vmem:[%s175 + $0xa0] sm:$0xff] %v798
      %831 = vst [vmem:[%s175 + $0xa8] sm:$0xff] %v799
      %832 = vst [vmem:[%s175 + $0xb0] sm:$0xff] %v800
      %833 = vst [vmem:[%s175 + $0xb8] sm:$0xff] %v801
      %834 = vst [vmem:[%s175 + $0xc0] sm:$0xff] %v802
      %835 = vst [vmem:[%s175 + $0xc8] sm:$0xff] %v803
      %836 = vst [vmem:[%s175 + $0xd0] sm:$0xff] %v804
      %837 = vst [vmem:[%s175 + $0xd8] sm:$0xff] %v805
      %838 = vst [vmem:[%s175 + $0xe0] sm:$0xff] %v806
      %839 = vst [vmem:[%s175 + $0xe8] sm:$0xff] %v807
      %840 = vst [vmem:[%s175 + $0xf0] sm:$0xff] %v808
      %841 = vst [vmem:[%s175 + $0xf8] sm:$0xff] %v809
      %s842 = smul.u32 32, %s14
      %p843 = scmp.lt.s32.totalorder %s842, 63
      %s844 = scalar_select %p843, %s842, 63
      %s845 = smul.addr %s844, 8
      %s846 = scalar_lea.vmem %s3, %s845
      // Predicated region
      $region33: #{tetris_nn3_forward.10} parent=31 // pred_check
        %p847 = pneg %p100
      $region34: #{tetris_nn3_forward.10} parent=31 // pred_check_branch
        %849 = sbr.rel (%p847) target = $region36
      $region35: #{tetris_nn3_forward.10} parent=31 // pred_region
        %s850 = smul.u32 32, %s14
      $region36: #{tetris_nn3_forward.10} parent=31 // pred_fallthru
        _
    $region32: #{tetris_nn3_forward.10} parent=5 // pred_fallthru
      _
    %p851 = scmp.le.s32.totalorder 2, %s9
    // Predicated region
    $region37: #{tetris_nn3_forward.10} parent=5 // pred_check
      %p852 = pneg %p851
    $region38: #{tetris_nn3_forward.10} parent=5 // pred_check_branch
      %854 = sbr.rel (%p852) target = $region40
    $region39: #{tetris_nn3_forward.10} parent=5 // pred_region
      %s855 = ssub.s32 %s9, 2
      // Predicated region
      $region41: #{tetris_nn3_forward.10} parent=39 // pred_check
        %p856 = pneg %p106
      $region42: #{tetris_nn3_forward.10} parent=39 // pred_check_branch
        %858 = sbr.rel (%p856) target = $region44
      $region43: #{tetris_nn3_forward.10} parent=39 // pred_region
        %s859 = smul.u32 32, %s15
        %p860 = scmp.lt.s32.totalorder %s859, 63
        %s861 = scalar_select %p860, %s859, 63
        %s862 = smul.addr %s861, 8
        %s863 = scalar_lea.vmem %s3, %s862
      $region44: #{tetris_nn3_forward.10} parent=39 // pred_fallthru
        _
    $region40: #{tetris_nn3_forward.10} parent=5 // pred_fallthru
      _
  $region6: #{tetris_nn3_forward.10} parent=0 // loop_footer
    %s13 = sadd.s32 1, %s9
  $region7: #{tetris_nn3_forward.10} parent=0 // loop_footer_branch
    %8 = sbr.rel target = $region3
  $region8: #{tetris_nn3_forward.10} parent=0 // loop_exit
    _

// kernel: tetris_nn3_forward.11
$region0: #{tetris_nn3_forward.11}
  #allocation0 [shape = 'u32[]', space=smem, size = 0x4, offset = 0x4, fixed_abs, tag = 'smem constant byte address 0x4 - core index']
  #allocation1 [shape = 'u32[144,128]{1,0:T(1,128)}', space=vmem, size = 0x12000, scoped, tag = 'internal scratch']
  %s0 = inlined_call_operand.vmem [shape: f32[128,128], index: 0, kind: input, shape index: {}]
  %s1 = inlined_call_operand.vmem [shape: f32[128,128], index: 1, kind: input, shape index: {}]
  %s2 = inlined_call_operand.vmem [shape: f32[1,128], index: 2, kind: input, shape index: {}]
  %s3 = inlined_call_operand.vmem [shape: f32[128,128], index: 3, kind: output, shape index: {}]
  %s4 = sld [smem:[#allocation0]]
  $region22: #{tetris_nn3_forward.11} parent=0
    _
  %s6 = ssub.s32 1, %s4
  %s7 = scalar_select 0, %s6, %s4
  // Predicated region
  $region2: #{tetris_nn3_forward.11} parent=0 // pred_check
    _
  $region3: #{tetris_nn3_forward.11} parent=0 // pred_check_branch
    %9 = sbr.rel (0) target = $region5
  $region4: #{tetris_nn3_forward.11} parent=0 // pred_region
    _
  $region5: #{tetris_nn3_forward.11} parent=0 // pred_fallthru
    _
  // Predicated region
  $region6: #{tetris_nn3_forward.11} parent=0 // pred_check
    _
  $region7: #{tetris_nn3_forward.11} parent=0 // pred_check_branch
    %11 = sbr.rel (0) target = $region9
  $region8: #{tetris_nn3_forward.11} parent=0 // pred_region
    _
  $region9: #{tetris_nn3_forward.11} parent=0 // pred_fallthru
    _
  // Predicated region
  $region10: #{tetris_nn3_forward.11} parent=0 // pred_check
    _
  $region11: #{tetris_nn3_forward.11} parent=0 // pred_check_branch
    %13 = sbr.rel (0) target = $region13
  $region12: #{tetris_nn3_forward.11} parent=0 // pred_region
    _
  $region13: #{tetris_nn3_forward.11} parent=0 // pred_fallthru
    _
  %v14 = vld [vmem:[%s0] sm:$0xff]
  %v15 = vld [vmem:[%s0 + $0x8] sm:$0xff]
  %v16 = vld [vmem:[%s0 + $0x10] sm:$0xff]
  %v17 = vld [vmem:[%s0 + $0x18] sm:$0xff]
  %v18 = vld [vmem:[%s0 + $0x20] sm:$0xff]
  %v19 = vld [vmem:[%s0 + $0x28] sm:$0xff]
  %v20 = vld [vmem:[%s0 + $0x30] sm:$0xff]
  %v21 = vld [vmem:[%s0 + $0x38] sm:$0xff]
  %v22 = vld [vmem:[%s0 + $0x40] sm:$0xff]
  %v23 = vld [vmem:[%s0 + $0x48] sm:$0xff]
  %v24 = vld [vmem:[%s0 + $0x50] sm:$0xff]
  %v25 = vld [vmem:[%s0 + $0x58] sm:$0xff]
  %v26 = vld [vmem:[%s0 + $0x60] sm:$0xff]
  %v27 = vld [vmem:[%s0 + $0x68] sm:$0xff]
  %v28 = vld [vmem:[%s0 + $0x70] sm:$0xff]
  %v29 = vld [vmem:[%s0 + $0x78] sm:$0xff]
  %v30 = vld [vmem:[%s1] sm:$0xff]
  %v31 = vld [vmem:[%s1 + $0x8] sm:$0xff]
  %v32 = vld [vmem:[%s1 + $0x10] sm:$0xff]
  %v33 = vld [vmem:[%s1 + $0x18] sm:$0xff]
  %v34 = vld [vmem:[%s1 + $0x20] sm:$0xff]
  %v35 = vld [vmem:[%s1 + $0x28] sm:$0xff]
  %v36 = vld [vmem:[%s1 + $0x30] sm:$0xff]
  %v37 = vld [vmem:[%s1 + $0x38] sm:$0xff]
  %v38 = vld [vmem:[%s1 + $0x40] sm:$0xff]
  %v39 = vld [vmem:[%s1 + $0x48] sm:$0xff]
  %v40 = vld [vmem:[%s1 + $0x50] sm:$0xff]
  %v41 = vld [vmem:[%s1 + $0x58] sm:$0xff]
  %v42 = vld [vmem:[%s1 + $0x60] sm:$0xff]
  %v43 = vld [vmem:[%s1 + $0x68] sm:$0xff]
  %v44 = vld [vmem:[%s1 + $0x70] sm:$0xff]
  %v45 = vld [vmem:[%s1 + $0x78] sm:$0xff]
  %v46 = vld [vmem:[%s2] sm:$0x1]
  %v48 = vlaneseq
  %v49 = vshrl.u32 %v48, 7
  %v50 = vsub.s32 0, %v49
  %v51 = vrot.slane %v46, %v50
  %53 = vmatprep.subr.mxu0 0.0
  %54 = vmatpush1.msra.mxu0 %v30
  %55 = vmatprep.subr.mxu0 0.0
  %56 = vmatpush1.msra.mxu0 %v31
  %57 = vmatprep.subr.mxu0 0.0
  %58 = vmatpush1.msra.mxu0 %v32
  %59 = vmatprep.subr.mxu0 0.0
  %60 = vmatpush1.msra.mxu0 %v33
  %61 = vmatprep.subr.mxu0 0.0
  %62 = vmatpush1.msra.mxu0 %v34
  %63 = vmatprep.subr.mxu0 0.0
  %64 = vmatpush1.msra.mxu0 %v35
  %65 = vmatprep.subr.mxu0 0.0
  %66 = vmatpush1.msra.mxu0 %v36
  %67 = vmatprep.subr.mxu0 0.0
  %68 = vmatpush1.msra.mxu0 %v37
  %69 = vmatprep.subr.mxu0 0.0
  %70 = vmatpush1.msra.mxu0 %v38
  %71 = vmatprep.subr.mxu0 0.0
  %72 = vmatpush1.msra.mxu0 %v39
  %73 = vmatprep.subr.mxu0 0.0
  %74 = vmatpush1.msra.mxu0 %v40
  %75 = vmatprep.subr.mxu0 0.0
  %76 = vmatpush1.msra.mxu0 %v41
  %77 = vmatprep.subr.mxu0 0.0
  %78 = vmatpush1.msra.mxu0 %v42
  %79 = vmatprep.subr.mxu0 0.0
  %80 = vmatpush1.msra.mxu0 %v43
  %81 = vmatprep.subr.mxu0 0.0
  %82 = vmatpush1.msra.mxu0 %v44
  %83 = vmatprep.subr.mxu0 0.0
  %84 = vmatpush1.msra.mxu0 %v45
  %85 = vmatprep.subr.mxu0 0.0
  %86 = vmatpush1.msra.mxu0 0.0
  %87 = vmatprep.subr.mxu0 0.0
  %88 = vmatpush1.msra.mxu0 0.0
  %89 = vmatprep.subr.mxu0 0.0
  %90 = vmatpush1.msra.mxu0 0.0
  %91 = vmatprep.subr.mxu0 0.0
  %92 = vmatpush1.msra.mxu0 0.0
  %93 = vmatprep.subr.mxu0 0.0
  %94 = vmatpush1.msra.mxu0 0.0
  %95 = vmatprep.subr.mxu0 0.0
  %96 = vmatpush1.msra.mxu0 0.0
  %97 = vmatprep.subr.mxu0 0.0
  %98 = vmatpush1.msra.mxu0 0.0
  %99 = vmatprep.subr.mxu0 0.0
  %100 = vmatpush1.msra.mxu0 0.0
  %101 = vmatprep.subr.mxu0 0.0
  %102 = vmatpush1.msra.mxu0 0.0
  %103 = vmatprep.subr.mxu0 0.0
  %104 = vmatpush1.msra.mxu0 0.0
  %105 = vmatprep.subr.mxu0 0.0
  %106 = vmatpush1.msra.mxu0 0.0
  %107 = vmatprep.subr.mxu0 0.0
  %108 = vmatpush1.msra.mxu0 0.0
  %109 = vmatprep.subr.mxu0 0.0
  %110 = vmatpush1.msra.mxu0 0.0
  %111 = vmatprep.subr.mxu0 0.0
  %112 = vmatpush1.msra.mxu0 0.0
  %113 = vmatprep.subr.mxu0 0.0
  %114 = vmatpush1.msra.mxu0 0.0
  %115 = vmatprep.subr.mxu0 0.0
  %116 = vmatpush1.msra.mxu0 0.0
  %117 = vmatprep.mubr.f32.mxu0 0.0
  %118 = vmatmul.mubr.f32.gmra.mrb[0].mxu0 %v14
  %v119 = vpop.f32.mrb[0].mxu0
  %v120 = vadd.f32 %v51, %v119
  %v121 = vpop.f32.mrb[0].mxu0
  %122 = vmatprep.mubr.f32.mxu0 0.0
  %123 = vmatmul.mubr.f32.gmra.mrb[0].mxu0 %v15
  %v124 = vpop.f32.mrb[0].mxu0
  %v125 = vadd.f32 %v51, %v124
  %v126 = vpop.f32.mrb[0].mxu0
  %127 = vmatprep.mubr.f32.mxu0 0.0
  %128 = vmatmul.mubr.f32.gmra.mrb[0].mxu0 %v16
  %v129 = vpop.f32.mrb[0].mxu0
  %v130 = vadd.f32 %v51, %v129
  %v131 = vpop.f32.mrb[0].mxu0
  %132 = vmatprep.mubr.f32.mxu0 0.0
  %133 = vmatmul.mubr.f32.gmra.mrb[0].mxu0 %v17
  %v134 = vpop.f32.mrb[0].mxu0
  %v135 = vadd.f32 %v51, %v134
  %v136 = vpop.f32.mrb[0].mxu0
  %137 = vmatprep.mubr.f32.mxu0 0.0
  %138 = vmatmul.mubr.f32.gmra.mrb[0].mxu0 %v18
  %v139 = vpop.f32.mrb[0].mxu0
  %v140 = vadd.f32 %v51, %v139
  %v141 = vpop.f32.mrb[0].mxu0
  %142 = vmatprep.mubr.f32.mxu0 0.0
  %143 = vmatmul.mubr.f32.gmra.mrb[0].mxu0 %v19
  %v144 = vpop.f32.mrb[0].mxu0
  %v145 = vadd.f32 %v51, %v144
  %v146 = vpop.f32.mrb[0].mxu0
  %147 = vmatprep.mubr.f32.mxu0 0.0
  %148 = vmatmul.mubr.f32.gmra.mrb[0].mxu0 %v20
  %v149 = vpop.f32.mrb[0].mxu0
  %v150 = vadd.f32 %v51, %v149
  %v151 = vpop.f32.mrb[0].mxu0
  %152 = vmatprep.mubr.f32.mxu0 0.0
  %153 = vmatmul.mubr.f32.gmra.mrb[0].mxu0 %v21
  %v154 = vpop.f32.mrb[0].mxu0
  %v155 = vadd.f32 %v51, %v154
  %v156 = vpop.f32.mrb[0].mxu0
  %157 = vmatprep.mubr.f32.mxu0 0.0
  %158 = vmatmul.mubr.f32.gmra.mrb[0].mxu0 %v22
  %v159 = vpop.f32.mrb[0].mxu0
  %v160 = vadd.f32 %v51, %v159
  %v161 = vpop.f32.mrb[0].mxu0
  %162 = vmatprep.mubr.f32.mxu0 0.0
  %163 = vmatmul.mubr.f32.gmra.mrb[0].mxu0 %v23
  %v164 = vpop.f32.mrb[0].mxu0
  %v165 = vadd.f32 %v51, %v164
  %v166 = vpop.f32.mrb[0].mxu0
  %167 = vmatprep.mubr.f32.mxu0 0.0
  %168 = vmatmul.mubr.f32.gmra.mrb[0].mxu0 %v24
  %v169 = vpop.f32.mrb[0].mxu0
  %v170 = vadd.f32 %v51, %v169
  %v171 = vpop.f32.mrb[0].mxu0
  %172 = vmatprep.mubr.f32.mxu0 0.0
  %173 = vmatmul.mubr.f32.gmra.mrb[0].mxu0 %v25
  %v174 = vpop.f32.mrb[0].mxu0
  %v175 = vadd.f32 %v51, %v174
  %v176 = vpop.f32.mrb[0].mxu0
  %177 = vmatprep.mubr.f32.mxu0 0.0
  %178 = vmatmul.mubr.f32.gmra.mrb[0].mxu0 %v26
  %v179 = vpop.f32.mrb[0].mxu0
  %v180 = vadd.f32 %v51, %v179
  %v181 = vpop.f32.mrb[0].mxu0
  %182 = vmatprep.mubr.f32.mxu0 0.0
  %183 = vmatmul.mubr.f32.gmra.mrb[0].mxu0 %v27
  %v184 = vpop.f32.mrb[0].mxu0
  %v185 = vadd.f32 %v51, %v184
  %v186 = vpop.f32.mrb[0].mxu0
  %187 = vmatprep.mubr.f32.mxu0 0.0
  %188 = vmatmul.mubr.f32.gmra.mrb[0].mxu0 %v28
  %v189 = vpop.f32.mrb[0].mxu0
  %v190 = vadd.f32 %v51, %v189
  %v191 = vpop.f32.mrb[0].mxu0
  %192 = vmatprep.mubr.f32.mxu0 0.0
  %193 = vmatmul.mubr.f32.gmra.mrb[0].mxu0 %v29
  %v194 = vpop.f32.mrb[0].mxu0
  %v195 = vadd.f32 %v51, %v194
  %v196 = vpop.f32.mrb[0].mxu0
  %197 = vdwg.mxu0
  %v198 = vmax.f32 %v120, 0.0
  %v199 = vmax.f32 %v125, 0.0
  %v200 = vmax.f32 %v130, 0.0
  %v201 = vmax.f32 %v135, 0.0
  %v202 = vmax.f32 %v140, 0.0
  %v203 = vmax.f32 %v145, 0.0
  %v204 = vmax.f32 %v150, 0.0
  %v205 = vmax.f32 %v155, 0.0
  %v206 = vmax.f32 %v160, 0.0
  %v207 = vmax.f32 %v165, 0.0
  %v208 = vmax.f32 %v170, 0.0
  %v209 = vmax.f32 %v175, 0.0
  %v210 = vmax.f32 %v180, 0.0
  %v211 = vmax.f32 %v185, 0.0
  %v212 = vmax.f32 %v190, 0.0
  %v213 = vmax.f32 %v195, 0.0
  %214 = vst [vmem:[%s3] sm:$0xff] %v198
  %215 = vst [vmem:[%s3 + $0x8] sm:$0xff] %v199
  %216 = vst [vmem:[%s3 + $0x10] sm:$0xff] %v200
  %217 = vst [vmem:[%s3 + $0x18] sm:$0xff] %v201
  %218 = vst [vmem:[%s3 + $0x20] sm:$0xff] %v202
  %219 = vst [vmem:[%s3 + $0x28] sm:$0xff] %v203
  %220 = vst [vmem:[%s3 + $0x30] sm:$0xff] %v204
  %221 = vst [vmem:[%s3 + $0x38] sm:$0xff] %v205
  %222 = vst [vmem:[%s3 + $0x40] sm:$0xff] %v206
  %223 = vst [vmem:[%s3 + $0x48] sm:$0xff] %v207
  %224 = vst [vmem:[%s3 + $0x50] sm:$0xff] %v208
  %225 = vst [vmem:[%s3 + $0x58] sm:$0xff] %v209
  %226 = vst [vmem:[%s3 + $0x60] sm:$0xff] %v210
  %227 = vst [vmem:[%s3 + $0x68] sm:$0xff] %v211
  %228 = vst [vmem:[%s3 + $0x70] sm:$0xff] %v212
  %229 = vst [vmem:[%s3 + $0x78] sm:$0xff] %v213
  // Predicated region
  $region14: #{tetris_nn3_forward.11} parent=0 // pred_check
    _
  $region15: #{tetris_nn3_forward.11} parent=0 // pred_check_branch
    %231 = sbr.rel (0) target = $region17
  $region16: #{tetris_nn3_forward.11} parent=0 // pred_region
    _
  $region17: #{tetris_nn3_forward.11} parent=0 // pred_fallthru
    _
  // Predicated region
  $region18: #{tetris_nn3_forward.11} parent=0 // pred_check
    _
  $region19: #{tetris_nn3_forward.11} parent=0 // pred_check_branch
    %233 = sbr.rel (0) target = $region21
  $region20: #{tetris_nn3_forward.11} parent=0 // pred_region
    _
  $region21: #{tetris_nn3_forward.11} parent=0 // pred_fallthru
    _

// kernel: tetris_nn3_forward.12
$region0: #{tetris_nn3_forward.12}
  #allocation0 [shape = 'u32[]', space=smem, size = 0x4, offset = 0x4, fixed_abs, tag = 'smem constant byte address 0x4 - core index']
  #allocation1 [shape = 'u32[144,128]{1,0:T(1,128)}', space=vmem, size = 0x12000, scoped, tag = 'internal scratch']
  %s0 = inlined_call_operand.vmem [shape: f32[128,1664], index: 0, kind: input, shape index: {}]
  %s1 = inlined_call_operand.vmem [shape: f32[1664,128], index: 1, kind: input, shape index: {}]
  %s2 = inlined_call_operand.vmem [shape: f32[1,128], index: 2, kind: input, shape index: {}]
  %s3 = inlined_call_operand.vmem [shape: f32[128,128], index: 3, kind: output, shape index: {}]
  %s4 = sld [smem:[#allocation0]]
  $region22: #{tetris_nn3_forward.12} parent=0
    _
  %s6 = ssub.s32 1, %s4
  %s7 = scalar_select 0, %s6, %s4
  // Predicated region
  $region2: #{tetris_nn3_forward.12} parent=0 // pred_check
    _
  $region3: #{tetris_nn3_forward.12} parent=0 // pred_check_branch
    %9 = sbr.rel (0) target = $region5
  $region4: #{tetris_nn3_forward.12} parent=0 // pred_region
    _
  $region5: #{tetris_nn3_forward.12} parent=0 // pred_fallthru
    _
  // Predicated region
  $region6: #{tetris_nn3_forward.12} parent=0 // pred_check
    _
  $region7: #{tetris_nn3_forward.12} parent=0 // pred_check_branch
    %11 = sbr.rel (0) target = $region9
  $region8: #{tetris_nn3_forward.12} parent=0 // pred_region
    _
  $region9: #{tetris_nn3_forward.12} parent=0 // pred_fallthru
    _
  // Predicated region
  $region10: #{tetris_nn3_forward.12} parent=0 // pred_check
    _
  $region11: #{tetris_nn3_forward.12} parent=0 // pred_check_branch
    %13 = sbr.rel (0) target = $region13
  $region12: #{tetris_nn3_forward.12} parent=0 // pred_region
    _
  $region13: #{tetris_nn3_forward.12} parent=0 // pred_fallthru
    _
  %v14 = vld [vmem:[%s0] sm:$0xff]
  %v15 = vld [vmem:[%s0 + $0x8] sm:$0xff]
  %v16 = vld [vmem:[%s0 + $0x10] sm:$0xff]
  %v17 = vld [vmem:[%s0 + $0x18] sm:$0xff]
  %v18 = vld [vmem:[%s0 + $0x20] sm:$0xff]
  %v19 = vld [vmem:[%s0 + $0x28] sm:$0xff]
  %v20 = vld [vmem:[%s0 + $0x30] sm:$0xff]
  %v21 = vld [vmem:[%s0 + $0x38] sm:$0xff]
  %v22 = vld [vmem:[%s0 + $0x40] sm:$0xff]
  %v23 = vld [vmem:[%s0 + $0x48] sm:$0xff]
  %v24 = vld [vmem:[%s0 + $0x50] sm:$0xff]
  %v25 = vld [vmem:[%s0 + $0x58] sm:$0xff]
  %v26 = vld [vmem:[%s0 + $0x60] sm:$0xff]
  %v27 = vld [vmem:[%s0 + $0x68] sm:$0xff]
  %v28 = vld [vmem:[%s0 + $0x70] sm:$0xff]
  %v29 = vld [vmem:[%s0 + $0x78] sm:$0xff]
  %v30 = vld [vmem:[%s0 + $0x80] sm:$0xff]
  %v31 = vld [vmem:[%s0 + $0x88] sm:$0xff]
  %v32 = vld [vmem:[%s0 + $0x90] sm:$0xff]
  %v33 = vld [vmem:[%s0 + $0x98] sm:$0xff]
  %v34 = vld [vmem:[%s0 + $0xa0] sm:$0xff]
  %v35 = vld [vmem:[%s0 + $0xa8] sm:$0xff]
  %v36 = vld [vmem:[%s0 + $0xb0] sm:$0xff]
  %v37 = vld [vmem:[%s0 + $0xb8] sm:$0xff]
  %v38 = vld [vmem:[%s0 + $0xc0] sm:$0xff]
  %v39 = vld [vmem:[%s0 + $0xc8] sm:$0xff]
  %v40 = vld [vmem:[%s0 + $0xd0] sm:$0xff]
  %v41 = vld [vmem:[%s0 + $0xd8] sm:$0xff]
  %v42 = vld [vmem:[%s0 + $0xe0] sm:$0xff]
  %v43 = vld [vmem:[%s0 + $0xe8] sm:$0xff]
  %v44 = vld [vmem:[%s0 + $0xf0] sm:$0xff]
  %v45 = vld [vmem:[%s0 + $0xf8] sm:$0xff]
  %v46 = vld [vmem:[%s0 + $0x100] sm:$0xff]
  %v47 = vld [vmem:[%s0 + $0x108] sm:$0xff]
  %v48 = vld [vmem:[%s0 + $0x110] sm:$0xff]
  %v49 = vld [vmem:[%s0 + $0x118] sm:$0xff]
  %v50 = vld [vmem:[%s0 + $0x120] sm:$0xff]
  %v51 = vld [vmem:[%s0 + $0x128] sm:$0xff]
  %v52 = vld [vmem:[%s0 + $0x130] sm:$0xff]
  %v53 = vld [vmem:[%s0 + $0x138] sm:$0xff]
  %v54 = vld [vmem:[%s0 + $0x140] sm:$0xff]
  %v55 = vld [vmem:[%s0 + $0x148] sm:$0xff]
  %v56 = vld [vmem:[%s0 + $0x150] sm:$0xff]
  %v57 = vld [vmem:[%s0 + $0x158] sm:$0xff]
  %v58 = vld [vmem:[%s0 + $0x160] sm:$0xff]
  %v59 = vld [vmem:[%s0 + $0x168] sm:$0xff]
  %v60 = vld [vmem:[%s0 + $0x170] sm:$0xff]
  %v61 = vld [vmem:[%s0 + $0x178] sm:$0xff]
  %v62 = vld [vmem:[%s0 + $0x180] sm:$0xff]
  %v63 = vld [vmem:[%s0 + $0x188] sm:$0xff]
  %v64 = vld [vmem:[%s0 + $0x190] sm:$0xff]
  %v65 = vld [vmem:[%s0 + $0x198] sm:$0xff]
  %v66 = vld [vmem:[%s0 + $0x1a0] sm:$0xff]
  %v67 = vld [vmem:[%s0 + $0x1a8] sm:$0xff]
  %v68 = vld [vmem:[%s0 + $0x1b0] sm:$0xff]
  %v69 = vld [vmem:[%s0 + $0x1b8] sm:$0xff]
  %v70 = vld [vmem:[%s0 + $0x1c0] sm:$0xff]
  %v71 = vld [vmem:[%s0 + $0x1c8] sm:$0xff]
  %v72 = vld [vmem:[%s0 + $0x1d0] sm:$0xff]
  %v73 = vld [vmem:[%s0 + $0x1d8] sm:$0xff]
  %v74 = vld [vmem:[%s0 + $0x1e0] sm:$0xff]
  %v75 = vld [vmem:[%s0 + $0x1e8] sm:$0xff]
  %v76 = vld [vmem:[%s0 + $0x1f0] sm:$0xff]
  %v77 = vld [vmem:[%s0 + $0x1f8] sm:$0xff]
  %v78 = vld [vmem:[%s0 + $0x200] sm:$0xff]
  %v79 = vld [vmem:[%s0 + $0x208] sm:$0xff]
  %v80 = vld [vmem:[%s0 + $0x210] sm:$0xff]
  %v81 = vld [vmem:[%s0 + $0x218] sm:$0xff]
  %v82 = vld [vmem:[%s0 + $0x220] sm:$0xff]
  %v83 = vld [vmem:[%s0 + $0x228] sm:$0xff]
  %v84 = vld [vmem:[%s0 + $0x230] sm:$0xff]
  %v85 = vld [vmem:[%s0 + $0x238] sm:$0xff]
  %v86 = vld [vmem:[%s0 + $0x240] sm:$0xff]
  %v87 = vld [vmem:[%s0 + $0x248] sm:$0xff]
  %v88 = vld [vmem:[%s0 + $0x250] sm:$0xff]
  %v89 = vld [vmem:[%s0 + $0x258] sm:$0xff]
  %v90 = vld [vmem:[%s0 + $0x260] sm:$0xff]
  %v91 = vld [vmem:[%s0 + $0x268] sm:$0xff]
  %v92 = vld [vmem:[%s0 + $0x270] sm:$0xff]
  %v93 = vld [vmem:[%s0 + $0x278] sm:$0xff]
  %v94 = vld [vmem:[%s0 + $0x280] sm:$0xff]
  %v95 = vld [vmem:[%s0 + $0x288] sm:$0xff]
  %v96 = vld [vmem:[%s0 + $0x290] sm:$0xff]
  %v97 = vld [vmem:[%s0 + $0x298] sm:$0xff]
  %v98 = vld [vmem:[%s0 + $0x2a0] sm:$0xff]
  %v99 = vld [vmem:[%s0 + $0x2a8] sm:$0xff]
  %v100 = vld [vmem:[%s0 + $0x2b0] sm:$0xff]
  %v101 = vld [vmem:[%s0 + $0x2b8] sm:$0xff]
  %v102 = vld [vmem:[%s0 + $0x2c0] sm:$0xff]
  %v103 = vld [vmem:[%s0 + $0x2c8] sm:$0xff]
  %v104 = vld [vmem:[%s0 + $0x2d0] sm:$0xff]
  %v105 = vld [vmem:[%s0 + $0x2d8] sm:$0xff]
  %v106 = vld [vmem:[%s0 + $0x2e0] sm:$0xff]
  %v107 = vld [vmem:[%s0 + $0x2e8] sm:$0xff]
  %v108 = vld [vmem:[%s0 + $0x2f0] sm:$0xff]
  %v109 = vld [vmem:[%s0 + $0x2f8] sm:$0xff]
  %v110 = vld [vmem:[%s0 + $0x300] sm:$0xff]
  %v111 = vld [vmem:[%s0 + $0x308] sm:$0xff]
  %v112 = vld [vmem:[%s0 + $0x310] sm:$0xff]
  %v113 = vld [vmem:[%s0 + $0x318] sm:$0xff]
  %v114 = vld [vmem:[%s0 + $0x320] sm:$0xff]
  %v115 = vld [vmem:[%s0 + $0x328] sm:$0xff]
  %v116 = vld [vmem:[%s0 + $0x330] sm:$0xff]
  %v117 = vld [vmem:[%s0 + $0x338] sm:$0xff]
  %v118 = vld [vmem:[%s0 + $0x340] sm:$0xff]
  %v119 = vld [vmem:[%s0 + $0x348] sm:$0xff]
  %v120 = vld [vmem:[%s0 + $0x350] sm:$0xff]
  %v121 = vld [vmem:[%s0 + $0x358] sm:$0xff]
  %v122 = vld [vmem:[%s0 + $0x360] sm:$0xff]
  %v123 = vld [vmem:[%s0 + $0x368] sm:$0xff]
  %v124 = vld [vmem:[%s0 + $0x370] sm:$0xff]
  %v125 = vld [vmem:[%s0 + $0x378] sm:$0xff]
  %v126 = vld [vmem:[%s0 + $0x380] sm:$0xff]
  %v127 = vld [vmem:[%s0 + $0x388] sm:$0xff]
  %v128 = vld [vmem:[%s0 + $0x390] sm:$0xff]
  %v129 = vld [vmem:[%s0 + $0x398] sm:$0xff]
  %v130 = vld [vmem:[%s0 + $0x3a0] sm:$0xff]
  %v131 = vld [vmem:[%s0 + $0x3a8] sm:$0xff]
  %v132 = vld [vmem:[%s0 + $0x3b0] sm:$0xff]
  %v133 = vld [vmem:[%s0 + $0x3b8] sm:$0xff]
  %v134 = vld [vmem:[%s0 + $0x3c0] sm:$0xff]
  %v135 = vld [vmem:[%s0 + $0x3c8] sm:$0xff]
  %v136 = vld [vmem:[%s0 + $0x3d0] sm:$0xff]
  %v137 = vld [vmem:[%s0 + $0x3d8] sm:$0xff]
  %v138 = vld [vmem:[%s0 + $0x3e0] sm:$0xff]
  %v139 = vld [vmem:[%s0 + $0x3e8] sm:$0xff]
  %v140 = vld [vmem:[%s0 + $0x3f0] sm:$0xff]
  %v141 = vld [vmem:[%s0 + $0x3f8] sm:$0xff]
  %v142 = vld [vmem:[%s0 + $0x400] sm:$0xff]
  %v143 = vld [vmem:[%s0 + $0x408] sm:$0xff]
  %v144 = vld [vmem:[%s0 + $0x410] sm:$0xff]
  %v145 = vld [vmem:[%s0 + $0x418] sm:$0xff]
  %v146 = vld [vmem:[%s0 + $0x420] sm:$0xff]
  %v147 = vld [vmem:[%s0 + $0x428] sm:$0xff]
  %v148 = vld [vmem:[%s0 + $0x430] sm:$0xff]
  %v149 = vld [vmem:[%s0 + $0x438] sm:$0xff]
  %v150 = vld [vmem:[%s0 + $0x440] sm:$0xff]
  %v151 = vld [vmem:[%s0 + $0x448] sm:$0xff]
  %v152 = vld [vmem:[%s0 + $0x450] sm:$0xff]
  %v153 = vld [vmem:[%s0 + $0x458] sm:$0xff]
  %v154 = vld [vmem:[%s0 + $0x460] sm:$0xff]
  %v155 = vld [vmem:[%s0 + $0x468] sm:$0xff]
  %v156 = vld [vmem:[%s0 + $0x470] sm:$0xff]
  %v157 = vld [vmem:[%s0 + $0x478] sm:$0xff]
  %v158 = vld [vmem:[%s0 + $0x480] sm:$0xff]
  %v159 = vld [vmem:[%s0 + $0x488] sm:$0xff]
  %v160 = vld [vmem:[%s0 + $0x490] sm:$0xff]
  %v161 = vld [vmem:[%s0 + $0x498] sm:$0xff]
  %v162 = vld [vmem:[%s0 + $0x4a0] sm:$0xff]
  %v163 = vld [vmem:[%s0 + $0x4a8] sm:$0xff]
  %v164 = vld [vmem:[%s0 + $0x4b0] sm:$0xff]
  %v165 = vld [vmem:[%s0 + $0x4b8] sm:$0xff]
  %v166 = vld [vmem:[%s0 + $0x4c0] sm:$0xff]
  %v167 = vld [vmem:[%s0 + $0x4c8] sm:$0xff]
  %v168 = vld [vmem:[%s0 + $0x4d0] sm:$0xff]
  %v169 = vld [vmem:[%s0 + $0x4d8] sm:$0xff]
  %v170 = vld [vmem:[%s0 + $0x4e0] sm:$0xff]
  %v171 = vld [vmem:[%s0 + $0x4e8] sm:$0xff]
  %v172 = vld [vmem:[%s0 + $0x4f0] sm:$0xff]
  %v173 = vld [vmem:[%s0 + $0x4f8] sm:$0xff]
  %v174 = vld [vmem:[%s0 + $0x500] sm:$0xff]
  %v175 = vld [vmem:[%s0 + $0x508] sm:$0xff]
  %v176 = vld [vmem:[%s0 + $0x510] sm:$0xff]
  %v177 = vld [vmem:[%s0 + $0x518] sm:$0xff]
  %v178 = vld [vmem:[%s0 + $0x520] sm:$0xff]
  %v179 = vld [vmem:[%s0 + $0x528] sm:$0xff]
  %v180 = vld [vmem:[%s0 + $0x530] sm:$0xff]
  %v181 = vld [vmem:[%s0 + $0x538] sm:$0xff]
  %v182 = vld [vmem:[%s0 + $0x540] sm:$0xff]
  %v183 = vld [vmem:[%s0 + $0x548] sm:$0xff]
  %v184 = vld [vmem:[%s0 + $0x550] sm:$0xff]
  %v185 = vld [vmem:[%s0 + $0x558] sm:$0xff]
  %v186 = vld [vmem:[%s0 + $0x560] sm:$0xff]
  %v187 = vld [vmem:[%s0 + $0x568] sm:$0xff]
  %v188 = vld [vmem:[%s0 + $0x570] sm:$0xff]
  %v189 = vld [vmem:[%s0 + $0x578] sm:$0xff]
  %v190 = vld [vmem:[%s0 + $0x580] sm:$0xff]
  %v191 = vld [vmem:[%s0 + $0x588] sm:$0xff]
  %v192 = vld [vmem:[%s0 + $0x590] sm:$0xff]
  %v193 = vld [vmem:[%s0 + $0x598] sm:$0xff]
  %v194 = vld [vmem:[%s0 + $0x5a0] sm:$0xff]
  %v195 = vld [vmem:[%s0 + $0x5a8] sm:$0xff]
  %v196 = vld [vmem:[%s0 + $0x5b0] sm:$0xff]
  %v197 = vld [vmem:[%s0 + $0x5b8] sm:$0xff]
  %v198 = vld [vmem:[%s0 + $0x5c0] sm:$0xff]
  %v199 = vld [vmem:[%s0 + $0x5c8] sm:$0xff]
  %v200 = vld [vmem:[%s0 + $0x5d0] sm:$0xff]
  %v201 = vld [vmem:[%s0 + $0x5d8] sm:$0xff]
  %v202 = vld [vmem:[%s0 + $0x5e0] sm:$0xff]
  %v203 = vld [vmem:[%s0 + $0x5e8] sm:$0xff]
  %v204 = vld [vmem:[%s0 + $0x5f0] sm:$0xff]
  %v205 = vld [vmem:[%s0 + $0x5f8] sm:$0xff]
  %v206 = vld [vmem:[%s0 + $0x600] sm:$0xff]
  %v207 = vld [vmem:[%s0 + $0x608] sm:$0xff]
  %v208 = vld [vmem:[%s0 + $0x610] sm:$0xff]
  %v209 = vld [vmem:[%s0 + $0x618] sm:$0xff]
  %v210 = vld [vmem:[%s0 + $0x620] sm:$0xff]
  %v211 = vld [vmem:[%s0 + $0x628] sm:$0xff]
  %v212 = vld [vmem:[%s0 + $0x630] sm:$0xff]
  %v213 = vld [vmem:[%s0 + $0x638] sm:$0xff]
  %v214 = vld [vmem:[%s0 + $0x640] sm:$0xff]
  %v215 = vld [vmem:[%s0 + $0x648] sm:$0xff]
  %v216 = vld [vmem:[%s0 + $0x650] sm:$0xff]
  %v217 = vld [vmem:[%s0 + $0x658] sm:$0xff]
  %v218 = vld [vmem:[%s0 + $0x660] sm:$0xff]
  %v219 = vld [vmem:[%s0 + $0x668] sm:$0xff]
  %v220 = vld [vmem:[%s0 + $0x670] sm:$0xff]
  %v221 = vld [vmem:[%s0 + $0x678] sm:$0xff]
  %v222 = vld [vmem:[%s1] sm:$0xff]
  %v223 = vld [vmem:[%s1 + $0x8] sm:$0xff]
  %v224 = vld [vmem:[%s1 + $0x10] sm:$0xff]
  %v225 = vld [vmem:[%s1 + $0x18] sm:$0xff]
  %v226 = vld [vmem:[%s1 + $0x20] sm:$0xff]
  %v227 = vld [vmem:[%s1 + $0x28] sm:$0xff]
  %v228 = vld [vmem:[%s1 + $0x30] sm:$0xff]
  %v229 = vld [vmem:[%s1 + $0x38] sm:$0xff]
  %v230 = vld [vmem:[%s1 + $0x40] sm:$0xff]
  %v231 = vld [vmem:[%s1 + $0x48] sm:$0xff]
  %v232 = vld [vmem:[%s1 + $0x50] sm:$0xff]
  %v233 = vld [vmem:[%s1 + $0x58] sm:$0xff]
  %v234 = vld [vmem:[%s1 + $0x60] sm:$0xff]
  %v235 = vld [vmem:[%s1 + $0x68] sm:$0xff]
  %v236 = vld [vmem:[%s1 + $0x70] sm:$0xff]
  %v237 = vld [vmem:[%s1 + $0x78] sm:$0xff]
  %v238 = vld [vmem:[%s1 + $0x80] sm:$0xff]
  %v239 = vld [vmem:[%s1 + $0x88] sm:$0xff]
  %v240 = vld [vmem:[%s1 + $0x90] sm:$0xff]
  %v241 = vld [vmem:[%s1 + $0x98] sm:$0xff]
  %v242 = vld [vmem:[%s1 + $0xa0] sm:$0xff]
  %v243 = vld [vmem:[%s1 + $0xa8] sm:$0xff]
  %v244 = vld [vmem:[%s1 + $0xb0] sm:$0xff]
  %v245 = vld [vmem:[%s1 + $0xb8] sm:$0xff]
  %v246 = vld [vmem:[%s1 + $0xc0] sm:$0xff]
  %v247 = vld [vmem:[%s1 + $0xc8] sm:$0xff]
  %v248 = vld [vmem:[%s1 + $0xd0] sm:$0xff]
  %v249 = vld [vmem:[%s1 + $0xd8] sm:$0xff]
  %v250 = vld [vmem:[%s1 + $0xe0] sm:$0xff]
  %v251 = vld [vmem:[%s1 + $0xe8] sm:$0xff]
  %v252 = vld [vmem:[%s1 + $0xf0] sm:$0xff]
  %v253 = vld [vmem:[%s1 + $0xf8] sm:$0xff]
  %v254 = vld [vmem:[%s1 + $0x100] sm:$0xff]
  %v255 = vld [vmem:[%s1 + $0x108] sm:$0xff]
  %v256 = vld [vmem:[%s1 + $0x110] sm:$0xff]
  %v257 = vld [vmem:[%s1 + $0x118] sm:$0xff]
  %v258 = vld [vmem:[%s1 + $0x120] sm:$0xff]
  %v259 = vld [vmem:[%s1 + $0x128] sm:$0xff]
  %v260 = vld [vmem:[%s1 + $0x130] sm:$0xff]
  %v261 = vld [vmem:[%s1 + $0x138] sm:$0xff]
  %v262 = vld [vmem:[%s1 + $0x140] sm:$0xff]
  %v263 = vld [vmem:[%s1 + $0x148] sm:$0xff]
  %v264 = vld [vmem:[%s1 + $0x150] sm:$0xff]
  %v265 = vld [vmem:[%s1 + $0x158] sm:$0xff]
  %v266 = vld [vmem:[%s1 + $0x160] sm:$0xff]
  %v267 = vld [vmem:[%s1 + $0x168] sm:$0xff]
  %v268 = vld [vmem:[%s1 + $0x170] sm:$0xff]
  %v269 = vld [vmem:[%s1 + $0x178] sm:$0xff]
  %v270 = vld [vmem:[%s1 + $0x180] sm:$0xff]
  %v271 = vld [vmem:[%s1 + $0x188] sm:$0xff]
  %v272 = vld [vmem:[%s1 + $0x190] sm:$0xff]
  %v273 = vld [vmem:[%s1 + $0x198] sm:$0xff]
  %v274 = vld [vmem:[%s1 + $0x1a0] sm:$0xff]
  %v275 = vld [vmem:[%s1 + $0x1a8] sm:$0xff]
  %v276 = vld [vmem:[%s1 + $0x1b0] sm:$0xff]
  %v277 = vld [vmem:[%s1 + $0x1b8] sm:$0xff]
  %v278 = vld [vmem:[%s1 + $0x1c0] sm:$0xff]
  %v279 = vld [vmem:[%s1 + $0x1c8] sm:$0xff]
  %v280 = vld [vmem:[%s1 + $0x1d0] sm:$0xff]
  %v281 = vld [vmem:[%s1 + $0x1d8] sm:$0xff]
  %v282 = vld [vmem:[%s1 + $0x1e0] sm:$0xff]
  %v283 = vld [vmem:[%s1 + $0x1e8] sm:$0xff]
  %v284 = vld [vmem:[%s1 + $0x1f0] sm:$0xff]
  %v285 = vld [vmem:[%s1 + $0x1f8] sm:$0xff]
  %v286 = vld [vmem:[%s1 + $0x200] sm:$0xff]
  %v287 = vld [vmem:[%s1 + $0x208] sm:$0xff]
  %v288 = vld [vmem:[%s1 + $0x210] sm:$0xff]
  %v289 = vld [vmem:[%s1 + $0x218] sm:$0xff]
  %v290 = vld [vmem:[%s1 + $0x220] sm:$0xff]
  %v291 = vld [vmem:[%s1 + $0x228] sm:$0xff]
  %v292 = vld [vmem:[%s1 + $0x230] sm:$0xff]
  %v293 = vld [vmem:[%s1 + $0x238] sm:$0xff]
  %v294 = vld [vmem:[%s1 + $0x240] sm:$0xff]
  %v295 = vld [vmem:[%s1 + $0x248] sm:$0xff]
  %v296 = vld [vmem:[%s1 + $0x250] sm:$0xff]
  %v297 = vld [vmem:[%s1 + $0x258] sm:$0xff]
  %v298 = vld [vmem:[%s1 + $0x260] sm:$0xff]
  %v299 = vld [vmem:[%s1 + $0x268] sm:$0xff]
  %v300 = vld [vmem:[%s1 + $0x270] sm:$0xff]
  %v301 = vld [vmem:[%s1 + $0x278] sm:$0xff]
  %v302 = vld [vmem:[%s1 + $0x280] sm:$0xff]
  %v303 = vld [vmem:[%s1 + $0x288] sm:$0xff]
  %v304 = vld [vmem:[%s1 + $0x290] sm:$0xff]
  %v305 = vld [vmem:[%s1 + $0x298] sm:$0xff]
  %v306 = vld [vmem:[%s1 + $0x2a0] sm:$0xff]
  %v307 = vld [vmem:[%s1 + $0x2a8] sm:$0xff]
  %v308 = vld [vmem:[%s1 + $0x2b0] sm:$0xff]
  %v309 = vld [vmem:[%s1 + $0x2b8] sm:$0xff]
  %v310 = vld [vmem:[%s1 + $0x2c0] sm:$0xff]
  %v311 = vld [vmem:[%s1 + $0x2c8] sm:$0xff]
  %v312 = vld [vmem:[%s1 + $0x2d0] sm:$0xff]
  %v313 = vld [vmem:[%s1 + $0x2d8] sm:$0xff]
  %v314 = vld [vmem:[%s1 + $0x2e0] sm:$0xff]
  %v315 = vld [vmem:[%s1 + $0x2e8] sm:$0xff]
  %v316 = vld [vmem:[%s1 + $0x2f0] sm:$0xff]
  %v317 = vld [vmem:[%s1 + $0x2f8] sm:$0xff]
  %v318 = vld [vmem:[%s1 + $0x300] sm:$0xff]
  %v319 = vld [vmem:[%s1 + $0x308] sm:$0xff]
  %v320 = vld [vmem:[%s1 + $0x310] sm:$0xff]
  %v321 = vld [vmem:[%s1 + $0x318] sm:$0xff]
  %v322 = vld [vmem:[%s1 + $0x320] sm:$0xff]
  %v323 = vld [vmem:[%s1 + $0x328] sm:$0xff]
  %v324 = vld [vmem:[%s1 + $0x330] sm:$0xff]
  %v325 = vld [vmem:[%s1 + $0x338] sm:$0xff]
  %v326 = vld [vmem:[%s1 + $0x340] sm:$0xff]
  %v327 = vld [vmem:[%s1 + $0x348] sm:$0xff]
  %v328 = vld [vmem:[%s1 + $0x350] sm:$0xff]
  %v329 = vld [vmem:[%s1 + $0x358] sm:$0xff]
  %v330 = vld [vmem:[%s1 + $0x360] sm:$0xff]
  %v331 = vld [vmem:[%s1 + $0x368] sm:$0xff]
  %v332 = vld [vmem:[%s1 + $0x370] sm:$0xff]
  %v333 = vld [vmem:[%s1 + $0x378] sm:$0xff]
  %v334 = vld [vmem:[%s1 + $0x380] sm:$0xff]
  %v335 = vld [vmem:[%s1 + $0x388] sm:$0xff]
  %v336 = vld [vmem:[%s1 + $0x390] sm:$0xff]
  %v337 = vld [vmem:[%s1 + $0x398] sm:$0xff]
  %v338 = vld [vmem:[%s1 + $0x3a0] sm:$0xff]
  %v339 = vld [vmem:[%s1 + $0x3a8] sm:$0xff]
  %v340 = vld [vmem:[%s1 + $0x3b0] sm:$0xff]
  %v341 = vld [vmem:[%s1 + $0x3b8] sm:$0xff]
  %v342 = vld [vmem:[%s1 + $0x3c0] sm:$0xff]
  %v343 = vld [vmem:[%s1 + $0x3c8] sm:$0xff]
  %v344 = vld [vmem:[%s1 + $0x3d0] sm:$0xff]
  %v345 = vld [vmem:[%s1 + $0x3d8] sm:$0xff]
  %v346 = vld [vmem:[%s1 + $0x3e0] sm:$0xff]
  %v347 = vld [vmem:[%s1 + $0x3e8] sm:$0xff]
  %v348 = vld [vmem:[%s1 + $0x3f0] sm:$0xff]
  %v349 = vld [vmem:[%s1 + $0x3f8] sm:$0xff]
  %v350 = vld [vmem:[%s1 + $0x400] sm:$0xff]
  %v351 = vld [vmem:[%s1 + $0x408] sm:$0xff]
  %v352 = vld [vmem:[%s1 + $0x410] sm:$0xff]
  %v353 = vld [vmem:[%s1 + $0x418] sm:$0xff]
  %v354 = vld [vmem:[%s1 + $0x420] sm:$0xff]
  %v355 = vld [vmem:[%s1 + $0x428] sm:$0xff]
  %v356 = vld [vmem:[%s1 + $0x430] sm:$0xff]
  %v357 = vld [vmem:[%s1 + $0x438] sm:$0xff]
  %v358 = vld [vmem:[%s1 + $0x440] sm:$0xff]
  %v359 = vld [vmem:[%s1 + $0x448] sm:$0xff]
  %v360 = vld [vmem:[%s1 + $0x450] sm:$0xff]
  %v361 = vld [vmem:[%s1 + $0x458] sm:$0xff]
  %v362 = vld [vmem:[%s1 + $0x460] sm:$0xff]
  %v363 = vld [vmem:[%s1 + $0x468] sm:$0xff]
  %v364 = vld [vmem:[%s1 + $0x470] sm:$0xff]
  %v365 = vld [vmem:[%s1 + $0x478] sm:$0xff]
  %v366 = vld [vmem:[%s1 + $0x480] sm:$0xff]
  %v367 = vld [vmem:[%s1 + $0x488] sm:$0xff]
  %v368 = vld [vmem:[%s1 + $0x490] sm:$0xff]
  %v369 = vld [vmem:[%s1 + $0x498] sm:$0xff]
  %v370 = vld [vmem:[%s1 + $0x4a0] sm:$0xff]
  %v371 = vld [vmem:[%s1 + $0x4a8] sm:$0xff]
  %v372 = vld [vmem:[%s1 + $0x4b0] sm:$0xff]
  %v373 = vld [vmem:[%s1 + $0x4b8] sm:$0xff]
  %v374 = vld [vmem:[%s1 + $0x4c0] sm:$0xff]
  %v375 = vld [vmem:[%s1 + $0x4c8] sm:$0xff]
  %v376 = vld [vmem:[%s1 + $0x4d0] sm:$0xff]
  %v377 = vld [vmem:[%s1 + $0x4d8] sm:$0xff]
  %v378 = vld [vmem:[%s1 + $0x4e0] sm:$0xff]
  %v379 = vld [vmem:[%s1 + $0x4e8] sm:$0xff]
  %v380 = vld [vmem:[%s1 + $0x4f0] sm:$0xff]
  %v381 = vld [vmem:[%s1 + $0x4f8] sm:$0xff]
  %v382 = vld [vmem:[%s1 + $0x500] sm:$0xff]
  %v383 = vld [vmem:[%s1 + $0x508] sm:$0xff]
  %v384 = vld [vmem:[%s1 + $0x510] sm:$0xff]
  %v385 = vld [vmem:[%s1 + $0x518] sm:$0xff]
  %v386 = vld [vmem:[%s1 + $0x520] sm:$0xff]
  %v387 = vld [vmem:[%s1 + $0x528] sm:$0xff]
  %v388 = vld [vmem:[%s1 + $0x530] sm:$0xff]
  %v389 = vld [vmem:[%s1 + $0x538] sm:$0xff]
  %v390 = vld [vmem:[%s1 + $0x540] sm:$0xff]
  %v391 = vld [vmem:[%s1 + $0x548] sm:$0xff]
  %v392 = vld [vmem:[%s1 + $0x550] sm:$0xff]
  %v393 = vld [vmem:[%s1 + $0x558] sm:$0xff]
  %v394 = vld [vmem:[%s1 + $0x560] sm:$0xff]
  %v395 = vld [vmem:[%s1 + $0x568] sm:$0xff]
  %v396 = vld [vmem:[%s1 + $0x570] sm:$0xff]
  %v397 = vld [vmem:[%s1 + $0x578] sm:$0xff]
  %v398 = vld [vmem:[%s1 + $0x580] sm:$0xff]
  %v399 = vld [vmem:[%s1 + $0x588] sm:$0xff]
  %v400 = vld [vmem:[%s1 + $0x590] sm:$0xff]
  %v401 = vld [vmem:[%s1 + $0x598] sm:$0xff]
  %v402 = vld [vmem:[%s1 + $0x5a0] sm:$0xff]
  %v403 = vld [vmem:[%s1 + $0x5a8] sm:$0xff]
  %v404 = vld [vmem:[%s1 + $0x5b0] sm:$0xff]
  %v405 = vld [vmem:[%s1 + $0x5b8] sm:$0xff]
  %v406 = vld [vmem:[%s1 + $0x5c0] sm:$0xff]
  %v407 = vld [vmem:[%s1 + $0x5c8] sm:$0xff]
  %v408 = vld [vmem:[%s1 + $0x5d0] sm:$0xff]
  %v409 = vld [vmem:[%s1 + $0x5d8] sm:$0xff]
  %v410 = vld [vmem:[%s1 + $0x5e0] sm:$0xff]
  %v411 = vld [vmem:[%s1 + $0x5e8] sm:$0xff]
  %v412 = vld [vmem:[%s1 + $0x5f0] sm:$0xff]
  %v413 = vld [vmem:[%s1 + $0x5f8] sm:$0xff]
  %v414 = vld [vmem:[%s1 + $0x600] sm:$0xff]
  %v415 = vld [vmem:[%s1 + $0x608] sm:$0xff]
  %v416 = vld [vmem:[%s1 + $0x610] sm:$0xff]
  %v417 = vld [vmem:[%s1 + $0x618] sm:$0xff]
  %v418 = vld [vmem:[%s1 + $0x620] sm:$0xff]
  %v419 = vld [vmem:[%s1 + $0x628] sm:$0xff]
  %v420 = vld [vmem:[%s1 + $0x630] sm:$0xff]
  %v421 = vld [vmem:[%s1 + $0x638] sm:$0xff]
  %v422 = vld [vmem:[%s1 + $0x640] sm:$0xff]
  %v423 = vld [vmem:[%s1 + $0x648] sm:$0xff]
  %v424 = vld [vmem:[%s1 + $0x650] sm:$0xff]
  %v425 = vld [vmem:[%s1 + $0x658] sm:$0xff]
  %v426 = vld [vmem:[%s1 + $0x660] sm:$0xff]
  %v427 = vld [vmem:[%s1 + $0x668] sm:$0xff]
  %v428 = vld [vmem:[%s1 + $0x670] sm:$0xff]
  %v429 = vld [vmem:[%s1 + $0x678] sm:$0xff]
  %v430 = vld [vmem:[%s2] sm:$0x1]
  %v432 = vlaneseq
  %v433 = vshrl.u32 %v432, 7
  %v434 = vsub.s32 0, %v433
  %v435 = vrot.slane %v430, %v434
  %437 = vmatprep.subr.mxu0 0.0
  %438 = vmatpush1.msra.mxu0 %v222
  %439 = vmatprep.subr.mxu0 0.0
  %440 = vmatpush1.msra.mxu0 %v223
  %441 = vmatprep.subr.mxu0 0.0
  %442 = vmatpush1.msra.mxu0 %v224
  %443 = vmatprep.subr.mxu0 0.0
  %444 = vmatpush1.msra.mxu0 %v225
  %445 = vmatprep.subr.mxu0 0.0
  %446 = vmatpush1.msra.mxu0 %v226
  %447 = vmatprep.subr.mxu0 0.0
  %448 = vmatpush1.msra.mxu0 %v227
  %449 = vmatprep.subr.mxu0 0.0
  %450 = vmatpush1.msra.mxu0 %v228
  %451 = vmatprep.subr.mxu0 0.0
  %452 = vmatpush1.msra.mxu0 %v229
  %453 = vmatprep.subr.mxu0 0.0
  %454 = vmatpush1.msra.mxu0 %v230
  %455 = vmatprep.subr.mxu0 0.0
  %456 = vmatpush1.msra.mxu0 %v231
  %457 = vmatprep.subr.mxu0 0.0
  %458 = vmatpush1.msra.mxu0 %v232
  %459 = vmatprep.subr.mxu0 0.0
  %460 = vmatpush1.msra.mxu0 %v233
  %461 = vmatprep.subr.mxu0 0.0
  %462 = vmatpush1.msra.mxu0 %v234
  %463 = vmatprep.subr.mxu0 0.0
  %464 = vmatpush1.msra.mxu0 %v235
  %465 = vmatprep.subr.mxu0 0.0
  %466 = vmatpush1.msra.mxu0 %v236
  %467 = vmatprep.subr.mxu0 0.0
  %468 = vmatpush1.msra.mxu0 %v237
  %469 = vmatprep.subr.mxu0 0.0
  %470 = vmatpush1.msra.mxu0 %v238
  %471 = vmatprep.subr.mxu0 0.0
  %472 = vmatpush1.msra.mxu0 %v239
  %473 = vmatprep.subr.mxu0 0.0
  %474 = vmatpush1.msra.mxu0 %v240
  %475 = vmatprep.subr.mxu0 0.0
  %476 = vmatpush1.msra.mxu0 %v241
  %477 = vmatprep.subr.mxu0 0.0
  %478 = vmatpush1.msra.mxu0 %v242
  %479 = vmatprep.subr.mxu0 0.0
  %480 = vmatpush1.msra.mxu0 %v243
  %481 = vmatprep.subr.mxu0 0.0
  %482 = vmatpush1.msra.mxu0 %v244
  %483 = vmatprep.subr.mxu0 0.0
  %484 = vmatpush1.msra.mxu0 %v245
  %485 = vmatprep.subr.mxu0 0.0
  %486 = vmatpush1.msra.mxu0 %v246
  %487 = vmatprep.subr.mxu0 0.0
  %488 = vmatpush1.msra.mxu0 %v247
  %489 = vmatprep.subr.mxu0 0.0
  %490 = vmatpush1.msra.mxu0 %v248
  %491 = vmatprep.subr.mxu0 0.0
  %492 = vmatpush1.msra.mxu0 %v249
  %493 = vmatprep.subr.mxu0 0.0
  %494 = vmatpush1.msra.mxu0 %v250
  %495 = vmatprep.subr.mxu0 0.0
  %496 = vmatpush1.msra.mxu0 %v251
  %497 = vmatprep.subr.mxu0 0.0
  %498 = vmatpush1.msra.mxu0 %v252
  %499 = vmatprep.subr.mxu0 0.0
  %500 = vmatpush1.msra.mxu0 %v253
  %501 = vmatprep.mubr.f32.mxu0 %v15
  %502 = vmatmul.mubr.f32.gmra.mrb[0].mxu0 %v14
  %v503 = vpop.f32.mrb[0].mxu0
  %v504 = vadd.f32 %v435, %v503
  %v505 = vpop.f32.mrb[0].mxu0
  %506 = vmatprep.mubr.f32.mxu0 %v28
  %507 = vmatmul.mubr.f32.gmra.mrb[0].mxu0 %v27
  %v508 = vpop.f32.mrb[0].mxu0
  %v509 = vadd.f32 %v435, %v508
  %v510 = vpop.f32.mrb[0].mxu0
  %511 = vmatprep.mubr.f32.mxu0 %v41
  %512 = vmatmul.mubr.f32.gmra.mrb[0].mxu0 %v40
  %v513 = vpop.f32.mrb[0].mxu0
  %v514 = vadd.f32 %v435, %v513
  %v515 = vpop.f32.mrb[0].mxu0
  %516 = vmatprep.mubr.f32.mxu0 %v54
  %517 = vmatmul.mubr.f32.gmra.mrb[0].mxu0 %v53
  %v518 = vpop.f32.mrb[0].mxu0
  %v519 = vadd.f32 %v435, %v518
  %v520 = vpop.f32.mrb[0].mxu0
  %521 = vmatprep.mubr.f32.mxu0 %v67
  %522 = vmatmul.mubr.f32.gmra.mrb[0].mxu0 %v66
  %v523 = vpop.f32.mrb[0].mxu0
  %v524 = vadd.f32 %v435, %v523
  %v525 = vpop.f32.mrb[0].mxu0
  %526 = vmatprep.mubr.f32.mxu0 %v80
  %527 = vmatmul.mubr.f32.gmra.mrb[0].mxu0 %v79
  %v528 = vpop.f32.mrb[0].mxu0
  %v529 = vadd.f32 %v435, %v528
  %v530 = vpop.f32.mrb[0].mxu0
  %531 = vmatprep.mubr.f32.mxu0 %v93
  %532 = vmatmul.mubr.f32.gmra.mrb[0].mxu0 %v92
  %v533 = vpop.f32.mrb[0].mxu0
  %v534 = vadd.f32 %v435, %v533
  %v535 = vpop.f32.mrb[0].mxu0
  %536 = vmatprep.mubr.f32.mxu0 %v106
  %537 = vmatmul.mubr.f32.gmra.mrb[0].mxu0 %v105
  %v538 = vpop.f32.mrb[0].mxu0
  %v539 = vadd.f32 %v435, %v538
  %v540 = vpop.f32.mrb[0].mxu0
  %541 = vmatprep.mubr.f32.mxu0 %v119
  %542 = vmatmul.mubr.f32.gmra.mrb[0].mxu0 %v118
  %v543 = vpop.f32.mrb[0].mxu0
  %v544 = vadd.f32 %v435, %v543
  %v545 = vpop.f32.mrb[0].mxu0
  %546 = vmatprep.mubr.f32.mxu0 %v132
  %547 = vmatmul.mubr.f32.gmra.mrb[0].mxu0 %v131
  %v548 = vpop.f32.mrb[0].mxu0
  %v549 = vadd.f32 %v435, %v548
  %v550 = vpop.f32.mrb[0].mxu0
  %551 = vmatprep.mubr.f32.mxu0 %v145
  %552 = vmatmul.mubr.f32.gmra.mrb[0].mxu0 %v144
  %v553 = vpop.f32.mrb[0].mxu0
  %v554 = vadd.f32 %v435, %v553
  %v555 = vpop.f32.mrb[0].mxu0
  %556 = vmatprep.mubr.f32.mxu0 %v158
  %557 = vmatmul.mubr.f32.gmra.mrb[0].mxu0 %v157
  %v558 = vpop.f32.mrb[0].mxu0
  %v559 = vadd.f32 %v435, %v558
  %v560 = vpop.f32.mrb[0].mxu0
  %561 = vmatprep.mubr.f32.mxu0 %v171
  %562 = vmatmul.mubr.f32.gmra.mrb[0].mxu0 %v170
  %v563 = vpop.f32.mrb[0].mxu0
  %v564 = vadd.f32 %v435, %v563
  %v565 = vpop.f32.mrb[0].mxu0
  %566 = vmatprep.mubr.f32.mxu0 %v184
  %567 = vmatmul.mubr.f32.gmra.mrb[0].mxu0 %v183
  %v568 = vpop.f32.mrb[0].mxu0
  %v569 = vadd.f32 %v435, %v568
  %v570 = vpop.f32.mrb[0].mxu0
  %571 = vmatprep.mubr.f32.mxu0 %v197
  %572 = vmatmul.mubr.f32.gmra.mrb[0].mxu0 %v196
  %v573 = vpop.f32.mrb[0].mxu0
  %v574 = vadd.f32 %v435, %v573
  %v575 = vpop.f32.mrb[0].mxu0
  %576 = vmatprep.mubr.f32.mxu0 %v210
  %577 = vmatmul.mubr.f32.gmra.mrb[0].mxu0 %v209
  %v578 = vpop.f32.mrb[0].mxu0
  %v579 = vadd.f32 %v435, %v578
  %v580 = vpop.f32.mrb[0].mxu0
  %581 = vdwg.mxu0
  %582 = vmatprep.subr.mxu0 0.0
  %583 = vmatpush1.msra.mxu0 %v254
  %584 = vmatprep.subr.mxu0 0.0
  %585 = vmatpush1.msra.mxu0 %v255
  %586 = vmatprep.subr.mxu0 0.0
  %587 = vmatpush1.msra.mxu0 %v256
  %588 = vmatprep.subr.mxu0 0.0
  %589 = vmatpush1.msra.mxu0 %v257
  %590 = vmatprep.subr.mxu0 0.0
  %591 = vmatpush1.msra.mxu0 %v258
  %592 = vmatprep.subr.mxu0 0.0
  %593 = vmatpush1.msra.mxu0 %v259
  %594 = vmatprep.subr.mxu0 0.0
  %595 = vmatpush1.msra.mxu0 %v260
  %596 = vmatprep.subr.mxu0 0.0
  %597 = vmatpush1.msra.mxu0 %v261
  %598 = vmatprep.subr.mxu0 0.0
  %599 = vmatpush1.msra.mxu0 %v262
  %600 = vmatprep.subr.mxu0 0.0
  %601 = vmatpush1.msra.mxu0 %v263
  %602 = vmatprep.subr.mxu0 0.0
  %603 = vmatpush1.msra.mxu0 %v264
  %604 = vmatprep.subr.mxu0 0.0
  %605 = vmatpush1.msra.mxu0 %v265
  %606 = vmatprep.subr.mxu0 0.0
  %607 = vmatpush1.msra.mxu0 %v266
  %608 = vmatprep.subr.mxu0 0.0
  %609 = vmatpush1.msra.mxu0 %v267
  %610 = vmatprep.subr.mxu0 0.0
  %611 = vmatpush1.msra.mxu0 %v268
  %612 = vmatprep.subr.mxu0 0.0
  %613 = vmatpush1.msra.mxu0 %v269
  %614 = vmatprep.subr.mxu0 0.0
  %615 = vmatpush1.msra.mxu0 %v270
  %616 = vmatprep.subr.mxu0 0.0
  %617 = vmatpush1.msra.mxu0 %v271
  %618 = vmatprep.subr.mxu0 0.0
  %619 = vmatpush1.msra.mxu0 %v272
  %620 = vmatprep.subr.mxu0 0.0
  %621 = vmatpush1.msra.mxu0 %v273
  %622 = vmatprep.subr.mxu0 0.0
  %623 = vmatpush1.msra.mxu0 %v274
  %624 = vmatprep.subr.mxu0 0.0
  %625 = vmatpush1.msra.mxu0 %v275
  %626 = vmatprep.subr.mxu0 0.0
  %627 = vmatpush1.msra.mxu0 %v276
  %628 = vmatprep.subr.mxu0 0.0
  %629 = vmatpush1.msra.mxu0 %v277
  %630 = vmatprep.subr.mxu0 0.0
  %631 = vmatpush1.msra.mxu0 %v278
  %632 = vmatprep.subr.mxu0 0.0
  %633 = vmatpush1.msra.mxu0 %v279
  %634 = vmatprep.subr.mxu0 0.0
  %635 = vmatpush1.msra.mxu0 %v280
  %636 = vmatprep.subr.mxu0 0.0
  %637 = vmatpush1.msra.mxu0 %v281
  %638 = vmatprep.subr.mxu0 0.0
  %639 = vmatpush1.msra.mxu0 %v282
  %640 = vmatprep.subr.mxu0 0.0
  %641 = vmatpush1.msra.mxu0 %v283
  %642 = vmatprep.subr.mxu0 0.0
  %643 = vmatpush1.msra.mxu0 %v284
  %644 = vmatprep.subr.mxu0 0.0
  %645 = vmatpush1.msra.mxu0 %v285
  %646 = vmatprep.mubr.f32.mxu0 %v17
  %647 = vmatmul.mubr.f32.gmra.mrb[0].mxu0 %v16
  %v648 = vpop.f32.mrb[0].mxu0
  %v649 = vadd.f32 %v504, %v648
  %v650 = vpop.f32.mrb[0].mxu0
  %651 = vmatprep.mubr.f32.mxu0 %v30
  %652 = vmatmul.mubr.f32.gmra.mrb[0].mxu0 %v29
  %v653 = vpop.f32.mrb[0].mxu0
  %v654 = vadd.f32 %v509, %v653
  %v655 = vpop.f32.mrb[0].mxu0
  %656 = vmatprep.mubr.f32.mxu0 %v43
  %657 = vmatmul.mubr.f32.gmra.mrb[0].mxu0 %v42
  %v658 = vpop.f32.mrb[0].mxu0
  %v659 = vadd.f32 %v514, %v658
  %v660 = vpop.f32.mrb[0].mxu0
  %661 = vmatprep.mubr.f32.mxu0 %v56
  %662 = vmatmul.mubr.f32.gmra.mrb[0].mxu0 %v55
  %v663 = vpop.f32.mrb[0].mxu0
  %v664 = vadd.f32 %v519, %v663
  %v665 = vpop.f32.mrb[0].mxu0
  %666 = vmatprep.mubr.f32.mxu0 %v69
  %667 = vmatmul.mubr.f32.gmra.mrb[0].mxu0 %v68
  %v668 = vpop.f32.mrb[0].mxu0
  %v669 = vadd.f32 %v524, %v668
  %v670 = vpop.f32.mrb[0].mxu0
  %671 = vmatprep.mubr.f32.mxu0 %v82
  %672 = vmatmul.mubr.f32.gmra.mrb[0].mxu0 %v81
  %v673 = vpop.f32.mrb[0].mxu0
  %v674 = vadd.f32 %v529, %v673
  %v675 = vpop.f32.mrb[0].mxu0
  %676 = vmatprep.mubr.f32.mxu0 %v95
  %677 = vmatmul.mubr.f32.gmra.mrb[0].mxu0 %v94
  %v678 = vpop.f32.mrb[0].mxu0
  %v679 = vadd.f32 %v534, %v678
  %v680 = vpop.f32.mrb[0].mxu0
  %681 = vmatprep.mubr.f32.mxu0 %v108
  %682 = vmatmul.mubr.f32.gmra.mrb[0].mxu0 %v107
  %v683 = vpop.f32.mrb[0].mxu0
  %v684 = vadd.f32 %v539, %v683
  %v685 = vpop.f32.mrb[0].mxu0
  %686 = vmatprep.mubr.f32.mxu0 %v121
  %687 = vmatmul.mubr.f32.gmra.mrb[0].mxu0 %v120
  %v688 = vpop.f32.mrb[0].mxu0
  %v689 = vadd.f32 %v544, %v688
  %v690 = vpop.f32.mrb[0].mxu0
  %691 = vmatprep.mubr.f32.mxu0 %v134
  %692 = vmatmul.mubr.f32.gmra.mrb[0].mxu0 %v133
  %v693 = vpop.f32.mrb[0].mxu0
  %v694 = vadd.f32 %v549, %v693
  %v695 = vpop.f32.mrb[0].mxu0
  %696 = vmatprep.mubr.f32.mxu0 %v147
  %697 = vmatmul.mubr.f32.gmra.mrb[0].mxu0 %v146
  %v698 = vpop.f32.mrb[0].mxu0
  %v699 = vadd.f32 %v554, %v698
  %v700 = vpop.f32.mrb[0].mxu0
  %701 = vmatprep.mubr.f32.mxu0 %v160
  %702 = vmatmul.mubr.f32.gmra.mrb[0].mxu0 %v159
  %v703 = vpop.f32.mrb[0].mxu0
  %v704 = vadd.f32 %v559, %v703
  %v705 = vpop.f32.mrb[0].mxu0
  %706 = vmatprep.mubr.f32.mxu0 %v173
  %707 = vmatmul.mubr.f32.gmra.mrb[0].mxu0 %v172
  %v708 = vpop.f32.mrb[0].mxu0
  %v709 = vadd.f32 %v564, %v708
  %v710 = vpop.f32.mrb[0].mxu0
  %711 = vmatprep.mubr.f32.mxu0 %v186
  %712 = vmatmul.mubr.f32.gmra.mrb[0].mxu0 %v185
  %v713 = vpop.f32.mrb[0].mxu0
  %v714 = vadd.f32 %v569, %v713
  %v715 = vpop.f32.mrb[0].mxu0
  %716 = vmatprep.mubr.f32.mxu0 %v199
  %717 = vmatmul.mubr.f32.gmra.mrb[0].mxu0 %v198
  %v718 = vpop.f32.mrb[0].mxu0
  %v719 = vadd.f32 %v574, %v718
  %v720 = vpop.f32.mrb[0].mxu0
  %721 = vmatprep.mubr.f32.mxu0 %v212
  %722 = vmatmul.mubr.f32.gmra.mrb[0].mxu0 %v211
  %v723 = vpop.f32.mrb[0].mxu0
  %v724 = vadd.f32 %v579, %v723
  %v725 = vpop.f32.mrb[0].mxu0
  %726 = vdwg.mxu0
  %727 = vmatprep.subr.mxu0 0.0
  %728 = vmatpush1.msra.mxu0 %v286
  %729 = vmatprep.subr.mxu0 0.0
  %730 = vmatpush1.msra.mxu0 %v287
  %731 = vmatprep.subr.mxu0 0.0
  %732 = vmatpush1.msra.mxu0 %v288
  %733 = vmatprep.subr.mxu0 0.0
  %734 = vmatpush1.msra.mxu0 %v289
  %735 = vmatprep.subr.mxu0 0.0
  %736 = vmatpush1.msra.mxu0 %v290
  %737 = vmatprep.subr.mxu0 0.0
  %738 = vmatpush1.msra.mxu0 %v291
  %739 = vmatprep.subr.mxu0 0.0
  %740 = vmatpush1.msra.mxu0 %v292
  %741 = vmatprep.subr.mxu0 0.0
  %742 = vmatpush1.msra.mxu0 %v293
  %743 = vmatprep.subr.mxu0 0.0
  %744 = vmatpush1.msra.mxu0 %v294
  %745 = vmatprep.subr.mxu0 0.0
  %746 = vmatpush1.msra.mxu0 %v295
  %747 = vmatprep.subr.mxu0 0.0
  %748 = vmatpush1.msra.mxu0 %v296
  %749 = vmatprep.subr.mxu0 0.0
  %750 = vmatpush1.msra.mxu0 %v297
  %751 = vmatprep.subr.mxu0 0.0
  %752 = vmatpush1.msra.mxu0 %v298
  %753 = vmatprep.subr.mxu0 0.0
  %754 = vmatpush1.msra.mxu0 %v299
  %755 = vmatprep.subr.mxu0 0.0
  %756 = vmatpush1.msra.mxu0 %v300
  %757 = vmatprep.subr.mxu0 0.0
  %758 = vmatpush1.msra.mxu0 %v301
  %759 = vmatprep.subr.mxu0 0.0
  %760 = vmatpush1.msra.mxu0 %v302
  %761 = vmatprep.subr.mxu0 0.0
  %762 = vmatpush1.msra.mxu0 %v303
  %763 = vmatprep.subr.mxu0 0.0
  %764 = vmatpush1.msra.mxu0 %v304
  %765 = vmatprep.subr.mxu0 0.0
  %766 = vmatpush1.msra.mxu0 %v305
  %767 = vmatprep.subr.mxu0 0.0
  %768 = vmatpush1.msra.mxu0 %v306
  %769 = vmatprep.subr.mxu0 0.0
  %770 = vmatpush1.msra.mxu0 %v307
  %771 = vmatprep.subr.mxu0 0.0
  %772 = vmatpush1.msra.mxu0 %v308
  %773 = vmatprep.subr.mxu0 0.0
  %774 = vmatpush1.msra.mxu0 %v309
  %775 = vmatprep.subr.mxu0 0.0
  %776 = vmatpush1.msra.mxu0 %v310
  %777 = vmatprep.subr.mxu0 0.0
  %778 = vmatpush1.msra.mxu0 %v311
  %779 = vmatprep.subr.mxu0 0.0
  %780 = vmatpush1.msra.mxu0 %v312
  %781 = vmatprep.subr.mxu0 0.0
  %782 = vmatpush1.msra.mxu0 %v313
  %783 = vmatprep.subr.mxu0 0.0
  %784 = vmatpush1.msra.mxu0 %v314
  %785 = vmatprep.subr.mxu0 0.0
  %786 = vmatpush1.msra.mxu0 %v315
  %787 = vmatprep.subr.mxu0 0.0
  %788 = vmatpush1.msra.mxu0 %v316
  %789 = vmatprep.subr.mxu0 0.0
  %790 = vmatpush1.msra.mxu0 %v317
  %791 = vmatprep.mubr.f32.mxu0 %v19
  %792 = vmatmul.mubr.f32.gmra.mrb[0].mxu0 %v18
  %v793 = vpop.f32.mrb[0].mxu0
  %v794 = vadd.f32 %v649, %v793
  %v795 = vpop.f32.mrb[0].mxu0
  %796 = vmatprep.mubr.f32.mxu0 %v32
  %797 = vmatmul.mubr.f32.gmra.mrb[0].mxu0 %v31
  %v798 = vpop.f32.mrb[0].mxu0
  %v799 = vadd.f32 %v654, %v798
  %v800 = vpop.f32.mrb[0].mxu0
  %801 = vmatprep.mubr.f32.mxu0 %v45
  %802 = vmatmul.mubr.f32.gmra.mrb[0].mxu0 %v44
  %v803 = vpop.f32.mrb[0].mxu0
  %v804 = vadd.f32 %v659, %v803
  %v805 = vpop.f32.mrb[0].mxu0
  %806 = vmatprep.mubr.f32.mxu0 %v58
  %807 = vmatmul.mubr.f32.gmra.mrb[0].mxu0 %v57
  %v808 = vpop.f32.mrb[0].mxu0
  %v809 = vadd.f32 %v664, %v808
  %v810 = vpop.f32.mrb[0].mxu0
  %811 = vmatprep.mubr.f32.mxu0 %v71
  %812 = vmatmul.mubr.f32.gmra.mrb[0].mxu0 %v70
  %v813 = vpop.f32.mrb[0].mxu0
  %v814 = vadd.f32 %v669, %v813
  %v815 = vpop.f32.mrb[0].mxu0
  %816 = vmatprep.mubr.f32.mxu0 %v84
  %817 = vmatmul.mubr.f32.gmra.mrb[0].mxu0 %v83
  %v818 = vpop.f32.mrb[0].mxu0
  %v819 = vadd.f32 %v674, %v818
  %v820 = vpop.f32.mrb[0].mxu0
  %821 = vmatprep.mubr.f32.mxu0 %v97
  %822 = vmatmul.mubr.f32.gmra.mrb[0].mxu0 %v96
  %v823 = vpop.f32.mrb[0].mxu0
  %v824 = vadd.f32 %v679, %v823
  %v825 = vpop.f32.mrb[0].mxu0
  %826 = vmatprep.mubr.f32.mxu0 %v110
  %827 = vmatmul.mubr.f32.gmra.mrb[0].mxu0 %v109
  %v828 = vpop.f32.mrb[0].mxu0
  %v829 = vadd.f32 %v684, %v828
  %v830 = vpop.f32.mrb[0].mxu0
  %831 = vmatprep.mubr.f32.mxu0 %v123
  %832 = vmatmul.mubr.f32.gmra.mrb[0].mxu0 %v122
  %v833 = vpop.f32.mrb[0].mxu0
  %v834 = vadd.f32 %v689, %v833
  %v835 = vpop.f32.mrb[0].mxu0
  %836 = vmatprep.mubr.f32.mxu0 %v136
  %837 = vmatmul.mubr.f32.gmra.mrb[0].mxu0 %v135
  %v838 = vpop.f32.mrb[0].mxu0
  %v839 = vadd.f32 %v694, %v838
  %v840 = vpop.f32.mrb[0].mxu0
  %841 = vmatprep.mubr.f32.mxu0 %v149
  %842 = vmatmul.mubr.f32.gmra.mrb[0].mxu0 %v148
  %v843 = vpop.f32.mrb[0].mxu0
  %v844 = vadd.f32 %v699, %v843
  %v845 = vpop.f32.mrb[0].mxu0
  %846 = vmatprep.mubr.f32.mxu0 %v162
  %847 = vmatmul.mubr.f32.gmra.mrb[0].mxu0 %v161
  %v848 = vpop.f32.mrb[0].mxu0
  %v849 = vadd.f32 %v704, %v848
  %v850 = vpop.f32.mrb[0].mxu0
  %851 = vmatprep.mubr.f32.mxu0 %v175
  %852 = vmatmul.mubr.f32.gmra.mrb[0].mxu0 %v174
  %v853 = vpop.f32.mrb[0].mxu0
  %v854 = vadd.f32 %v709, %v853
  %v855 = vpop.f32.mrb[0].mxu0
  %856 = vmatprep.mubr.f32.mxu0 %v188
  %857 = vmatmul.mubr.f32.gmra.mrb[0].mxu0 %v187
  %v858 = vpop.f32.mrb[0].mxu0
  %v859 = vadd.f32 %v714, %v858
  %v860 = vpop.f32.mrb[0].mxu0
  %861 = vmatprep.mubr.f32.mxu0 %v201
  %862 = vmatmul.mubr.f32.gmra.mrb[0].mxu0 %v200
  %v863 = vpop.f32.mrb[0].mxu0
  %v864 = vadd.f32 %v719, %v863
  %v865 = vpop.f32.mrb[0].mxu0
  %866 = vmatprep.mubr.f32.mxu0 %v214
  %867 = vmatmul.mubr.f32.gmra.mrb[0].mxu0 %v213
  %v868 = vpop.f32.mrb[0].mxu0
  %v869 = vadd.f32 %v724, %v868
  %v870 = vpop.f32.mrb[0].mxu0
  %871 = vdwg.mxu0
  %872 = vmatprep.subr.mxu0 0.0
  %873 = vmatpush1.msra.mxu0 %v318
  %874 = vmatprep.subr.mxu0 0.0
  %875 = vmatpush1.msra.mxu0 %v319
  %876 = vmatprep.subr.mxu0 0.0
  %877 = vmatpush1.msra.mxu0 %v320
  %878 = vmatprep.subr.mxu0 0.0
  %879 = vmatpush1.msra.mxu0 %v321
  %880 = vmatprep.subr.mxu0 0.0
  %881 = vmatpush1.msra.mxu0 %v322
  %882 = vmatprep.subr.mxu0 0.0
  %883 = vmatpush1.msra.mxu0 %v323
  %884 = vmatprep.subr.mxu0 0.0
  %885 = vmatpush1.msra.mxu0 %v324
  %886 = vmatprep.subr.mxu0 0.0
  %887 = vmatpush1.msra.mxu0 %v325
  %888 = vmatprep.subr.mxu0 0.0
  %889 = vmatpush1.msra.mxu0 %v326
  %890 = vmatprep.subr.mxu0 0.0
  %891 = vmatpush1.msra.mxu0 %v327
  %892 = vmatprep.subr.mxu0 0.0
  %893 = vmatpush1.msra.mxu0 %v328
  %894 = vmatprep.subr.mxu0 0.0
  %895 = vmatpush1.msra.mxu0 %v329
  %896 = vmatprep.subr.mxu0 0.0
  %897 = vmatpush1.msra.mxu0 %v330
  %898 = vmatprep.subr.mxu0 0.0
  %899 = vmatpush1.msra.mxu0 %v331
  %900 = vmatprep.subr.mxu0 0.0
  %901 = vmatpush1.msra.mxu0 %v332
  %902 = vmatprep.subr.mxu0 0.0
  %903 = vmatpush1.msra.mxu0 %v333
  %904 = vmatprep.subr.mxu0 0.0
  %905 = vmatpush1.msra.mxu0 %v334
  %906 = vmatprep.subr.mxu0 0.0
  %907 = vmatpush1.msra.mxu0 %v335
  %908 = vmatprep.subr.mxu0 0.0
  %909 = vmatpush1.msra.mxu0 %v336
  %910 = vmatprep.subr.mxu0 0.0
  %911 = vmatpush1.msra.mxu0 %v337
  %912 = vmatprep.subr.mxu0 0.0
  %913 = vmatpush1.msra.mxu0 %v338
  %914 = vmatprep.subr.mxu0 0.0
  %915 = vmatpush1.msra.mxu0 %v339
  %916 = vmatprep.subr.mxu0 0.0
  %917 = vmatpush1.msra.mxu0 %v340
  %918 = vmatprep.subr.mxu0 0.0
  %919 = vmatpush1.msra.mxu0 %v341
  %920 = vmatprep.subr.mxu0 0.0
  %921 = vmatpush1.msra.mxu0 %v342
  %922 = vmatprep.subr.mxu0 0.0
  %923 = vmatpush1.msra.mxu0 %v343
  %924 = vmatprep.subr.mxu0 0.0
  %925 = vmatpush1.msra.mxu0 %v344
  %926 = vmatprep.subr.mxu0 0.0
  %927 = vmatpush1.msra.mxu0 %v345
  %928 = vmatprep.subr.mxu0 0.0
  %929 = vmatpush1.msra.mxu0 %v346
  %930 = vmatprep.subr.mxu0 0.0
  %931 = vmatpush1.msra.mxu0 %v347
  %932 = vmatprep.subr.mxu0 0.0
  %933 = vmatpush1.msra.mxu0 %v348
  %934 = vmatprep.subr.mxu0 0.0
  %935 = vmatpush1.msra.mxu0 %v349
  %936 = vmatprep.mubr.f32.mxu0 %v21
  %937 = vmatmul.mubr.f32.gmra.mrb[0].mxu0 %v20
  %v938 = vpop.f32.mrb[0].mxu0
  %v939 = vadd.f32 %v794, %v938
  %v940 = vpop.f32.mrb[0].mxu0
  %941 = vmatprep.mubr.f32.mxu0 %v34
  %942 = vmatmul.mubr.f32.gmra.mrb[0].mxu0 %v33
  %v943 = vpop.f32.mrb[0].mxu0
  %v944 = vadd.f32 %v799, %v943
  %v945 = vpop.f32.mrb[0].mxu0
  %946 = vmatprep.mubr.f32.mxu0 %v47
  %947 = vmatmul.mubr.f32.gmra.mrb[0].mxu0 %v46
  %v948 = vpop.f32.mrb[0].mxu0
  %v949 = vadd.f32 %v804, %v948
  %v950 = vpop.f32.mrb[0].mxu0
  %951 = vmatprep.mubr.f32.mxu0 %v60
  %952 = vmatmul.mubr.f32.gmra.mrb[0].mxu0 %v59
  %v953 = vpop.f32.mrb[0].mxu0
  %v954 = vadd.f32 %v809, %v953
  %v955 = vpop.f32.mrb[0].mxu0
  %956 = vmatprep.mubr.f32.mxu0 %v73
  %957 = vmatmul.mubr.f32.gmra.mrb[0].mxu0 %v72
  %v958 = vpop.f32.mrb[0].mxu0
  %v959 = vadd.f32 %v814, %v958
  %v960 = vpop.f32.mrb[0].mxu0
  %961 = vmatprep.mubr.f32.mxu0 %v86
  %962 = vmatmul.mubr.f32.gmra.mrb[0].mxu0 %v85
  %v963 = vpop.f32.mrb[0].mxu0
  %v964 = vadd.f32 %v819, %v963
  %v965 = vpop.f32.mrb[0].mxu0
  %966 = vmatprep.mubr.f32.mxu0 %v99
  %967 = vmatmul.mubr.f32.gmra.mrb[0].mxu0 %v98
  %v968 = vpop.f32.mrb[0].mxu0
  %v969 = vadd.f32 %v824, %v968
  %v970 = vpop.f32.mrb[0].mxu0
  %971 = vmatprep.mubr.f32.mxu0 %v112
  %972 = vmatmul.mubr.f32.gmra.mrb[0].mxu0 %v111
  %v973 = vpop.f32.mrb[0].mxu0
  %v974 = vadd.f32 %v829, %v973
  %v975 = vpop.f32.mrb[0].mxu0
  %976 = vmatprep.mubr.f32.mxu0 %v125
  %977 = vmatmul.mubr.f32.gmra.mrb[0].mxu0 %v124
  %v978 = vpop.f32.mrb[0].mxu0
  %v979 = vadd.f32 %v834, %v978
  %v980 = vpop.f32.mrb[0].mxu0
  %981 = vmatprep.mubr.f32.mxu0 %v138
  %982 = vmatmul.mubr.f32.gmra.mrb[0].mxu0 %v137
  %v983 = vpop.f32.mrb[0].mxu0
  %v984 = vadd.f32 %v839, %v983
  %v985 = vpop.f32.mrb[0].mxu0
  %986 = vmatprep.mubr.f32.mxu0 %v151
  %987 = vmatmul.mubr.f32.gmra.mrb[0].mxu0 %v150
  %v988 = vpop.f32.mrb[0].mxu0
  %v989 = vadd.f32 %v844, %v988
  %v990 = vpop.f32.mrb[0].mxu0
  %991 = vmatprep.mubr.f32.mxu0 %v164
  %992 = vmatmul.mubr.f32.gmra.mrb[0].mxu0 %v163
  %v993 = vpop.f32.mrb[0].mxu0
  %v994 = vadd.f32 %v849, %v993
  %v995 = vpop.f32.mrb[0].mxu0
  %996 = vmatprep.mubr.f32.mxu0 %v177
  %997 = vmatmul.mubr.f32.gmra.mrb[0].mxu0 %v176
  %v998 = vpop.f32.mrb[0].mxu0
  %v999 = vadd.f32 %v854, %v998
  %v1000 = vpop.f32.mrb[0].mxu0
  %1001 = vmatprep.mubr.f32.mxu0 %v190
  %1002 = vmatmul.mubr.f32.gmra.mrb[0].mxu0 %v189
  %v1003 = vpop.f32.mrb[0].mxu0
  %v1004 = vadd.f32 %v859, %v1003
  %v1005 = vpop.f32.mrb[0].mxu0
  %1006 = vmatprep.mubr.f32.mxu0 %v203
  %1007 = vmatmul.mubr.f32.gmra.mrb[0].mxu0 %v202
  %v1008 = vpop.f32.mrb[0].mxu0
  %v1009 = vadd.f32 %v864, %v1008
  %v1010 = vpop.f32.mrb[0].mxu0
  %1011 = vmatprep.mubr.f32.mxu0 %v216
  %1012 = vmatmul.mubr.f32.gmra.mrb[0].mxu0 %v215
  %v1013 = vpop.f32.mrb[0].mxu0
  %v1014 = vadd.f32 %v869, %v1013
  %v1015 = vpop.f32.mrb[0].mxu0
  %1016 = vdwg.mxu0
  %1017 = vmatprep.subr.mxu0 0.0
  %1018 = vmatpush1.msra.mxu0 %v350
  %1019 = vmatprep.subr.mxu0 0.0
  %1020 = vmatpush1.msra.mxu0 %v351
  %1021 = vmatprep.subr.mxu0 0.0
  %1022 = vmatpush1.msra.mxu0 %v352
  %1023 = vmatprep.subr.mxu0 0.0
  %1024 = vmatpush1.msra.mxu0 %v353
  %1025 = vmatprep.subr.mxu0 0.0
  %1026 = vmatpush1.msra.mxu0 %v354
  %1027 = vmatprep.subr.mxu0 0.0
  %1028 = vmatpush1.msra.mxu0 %v355
  %1029 = vmatprep.subr.mxu0 0.0
  %1030 = vmatpush1.msra.mxu0 %v356
  %1031 = vmatprep.subr.mxu0 0.0
  %1032 = vmatpush1.msra.mxu0 %v357
  %1033 = vmatprep.subr.mxu0 0.0
  %1034 = vmatpush1.msra.mxu0 %v358
  %1035 = vmatprep.subr.mxu0 0.0
  %1036 = vmatpush1.msra.mxu0 %v359
  %1037 = vmatprep.subr.mxu0 0.0
  %1038 = vmatpush1.msra.mxu0 %v360
  %1039 = vmatprep.subr.mxu0 0.0
  %1040 = vmatpush1.msra.mxu0 %v361
  %1041 = vmatprep.subr.mxu0 0.0
  %1042 = vmatpush1.msra.mxu0 %v362
  %1043 = vmatprep.subr.mxu0 0.0
  %1044 = vmatpush1.msra.mxu0 %v363
  %1045 = vmatprep.subr.mxu0 0.0
  %1046 = vmatpush1.msra.mxu0 %v364
  %1047 = vmatprep.subr.mxu0 0.0
  %1048 = vmatpush1.msra.mxu0 %v365
  %1049 = vmatprep.subr.mxu0 0.0
  %1050 = vmatpush1.msra.mxu0 %v366
  %1051 = vmatprep.subr.mxu0 0.0
  %1052 = vmatpush1.msra.mxu0 %v367
  %1053 = vmatprep.subr.mxu0 0.0
  %1054 = vmatpush1.msra.mxu0 %v368
  %1055 = vmatprep.subr.mxu0 0.0
  %1056 = vmatpush1.msra.mxu0 %v369
  %1057 = vmatprep.subr.mxu0 0.0
  %1058 = vmatpush1.msra.mxu0 %v370
  %1059 = vmatprep.subr.mxu0 0.0
  %1060 = vmatpush1.msra.mxu0 %v371
  %1061 = vmatprep.subr.mxu0 0.0
  %1062 = vmatpush1.msra.mxu0 %v372
  %1063 = vmatprep.subr.mxu0 0.0
  %1064 = vmatpush1.msra.mxu0 %v373
  %1065 = vmatprep.subr.mxu0 0.0
  %1066 = vmatpush1.msra.mxu0 %v374
  %1067 = vmatprep.subr.mxu0 0.0
  %1068 = vmatpush1.msra.mxu0 %v375
  %1069 = vmatprep.subr.mxu0 0.0
  %1070 = vmatpush1.msra.mxu0 %v376
  %1071 = vmatprep.subr.mxu0 0.0
  %1072 = vmatpush1.msra.mxu0 %v377
  %1073 = vmatprep.subr.mxu0 0.0
  %1074 = vmatpush1.msra.mxu0 %v378
  %1075 = vmatprep.subr.mxu0 0.0
  %1076 = vmatpush1.msra.mxu0 %v379
  %1077 = vmatprep.subr.mxu0 0.0
  %1078 = vmatpush1.msra.mxu0 %v380
  %1079 = vmatprep.subr.mxu0 0.0
  %1080 = vmatpush1.msra.mxu0 %v381
  %1081 = vmatprep.mubr.f32.mxu0 %v23
  %1082 = vmatmul.mubr.f32.gmra.mrb[0].mxu0 %v22
  %v1083 = vpop.f32.mrb[0].mxu0
  %v1084 = vadd.f32 %v939, %v1083
  %v1085 = vpop.f32.mrb[0].mxu0
  %1086 = vmatprep.mubr.f32.mxu0 %v36
  %1087 = vmatmul.mubr.f32.gmra.mrb[0].mxu0 %v35
  %v1088 = vpop.f32.mrb[0].mxu0
  %v1089 = vadd.f32 %v944, %v1088
  %v1090 = vpop.f32.mrb[0].mxu0
  %1091 = vmatprep.mubr.f32.mxu0 %v49
  %1092 = vmatmul.mubr.f32.gmra.mrb[0].mxu0 %v48
  %v1093 = vpop.f32.mrb[0].mxu0
  %v1094 = vadd.f32 %v949, %v1093
  %v1095 = vpop.f32.mrb[0].mxu0
  %1096 = vmatprep.mubr.f32.mxu0 %v62
  %1097 = vmatmul.mubr.f32.gmra.mrb[0].mxu0 %v61
  %v1098 = vpop.f32.mrb[0].mxu0
  %v1099 = vadd.f32 %v954, %v1098
  %v1100 = vpop.f32.mrb[0].mxu0
  %1101 = vmatprep.mubr.f32.mxu0 %v75
  %1102 = vmatmul.mubr.f32.gmra.mrb[0].mxu0 %v74
  %v1103 = vpop.f32.mrb[0].mxu0
  %v1104 = vadd.f32 %v959, %v1103
  %v1105 = vpop.f32.mrb[0].mxu0
  %1106 = vmatprep.mubr.f32.mxu0 %v88
  %1107 = vmatmul.mubr.f32.gmra.mrb[0].mxu0 %v87
  %v1108 = vpop.f32.mrb[0].mxu0
  %v1109 = vadd.f32 %v964, %v1108
  %v1110 = vpop.f32.mrb[0].mxu0
  %1111 = vmatprep.mubr.f32.mxu0 %v101
  %1112 = vmatmul.mubr.f32.gmra.mrb[0].mxu0 %v100
  %v1113 = vpop.f32.mrb[0].mxu0
  %v1114 = vadd.f32 %v969, %v1113
  %v1115 = vpop.f32.mrb[0].mxu0
  %1116 = vmatprep.mubr.f32.mxu0 %v114
  %1117 = vmatmul.mubr.f32.gmra.mrb[0].mxu0 %v113
  %v1118 = vpop.f32.mrb[0].mxu0
  %v1119 = vadd.f32 %v974, %v1118
  %v1120 = vpop.f32.mrb[0].mxu0
  %1121 = vmatprep.mubr.f32.mxu0 %v127
  %1122 = vmatmul.mubr.f32.gmra.mrb[0].mxu0 %v126
  %v1123 = vpop.f32.mrb[0].mxu0
  %v1124 = vadd.f32 %v979, %v1123
  %v1125 = vpop.f32.mrb[0].mxu0
  %1126 = vmatprep.mubr.f32.mxu0 %v140
  %1127 = vmatmul.mubr.f32.gmra.mrb[0].mxu0 %v139
  %v1128 = vpop.f32.mrb[0].mxu0
  %v1129 = vadd.f32 %v984, %v1128
  %v1130 = vpop.f32.mrb[0].mxu0
  %1131 = vmatprep.mubr.f32.mxu0 %v153
  %1132 = vmatmul.mubr.f32.gmra.mrb[0].mxu0 %v152
  %v1133 = vpop.f32.mrb[0].mxu0
  %v1134 = vadd.f32 %v989, %v1133
  %v1135 = vpop.f32.mrb[0].mxu0
  %1136 = vmatprep.mubr.f32.mxu0 %v166
  %1137 = vmatmul.mubr.f32.gmra.mrb[0].mxu0 %v165
  %v1138 = vpop.f32.mrb[0].mxu0
  %v1139 = vadd.f32 %v994, %v1138
  %v1140 = vpop.f32.mrb[0].mxu0
  %1141 = vmatprep.mubr.f32.mxu0 %v179
  %1142 = vmatmul.mubr.f32.gmra.mrb[0].mxu0 %v178
  %v1143 = vpop.f32.mrb[0].mxu0
  %v1144 = vadd.f32 %v999, %v1143
  %v1145 = vpop.f32.mrb[0].mxu0
  %1146 = vmatprep.mubr.f32.mxu0 %v192
  %1147 = vmatmul.mubr.f32.gmra.mrb[0].mxu0 %v191
  %v1148 = vpop.f32.mrb[0].mxu0
  %v1149 = vadd.f32 %v1004, %v1148
  %v1150 = vpop.f32.mrb[0].mxu0
  %1151 = vmatprep.mubr.f32.mxu0 %v205
  %1152 = vmatmul.mubr.f32.gmra.mrb[0].mxu0 %v204
  %v1153 = vpop.f32.mrb[0].mxu0
  %v1154 = vadd.f32 %v1009, %v1153
  %v1155 = vpop.f32.mrb[0].mxu0
  %1156 = vmatprep.mubr.f32.mxu0 %v218
  %1157 = vmatmul.mubr.f32.gmra.mrb[0].mxu0 %v217
  %v1158 = vpop.f32.mrb[0].mxu0
  %v1159 = vadd.f32 %v1014, %v1158
  %v1160 = vpop.f32.mrb[0].mxu0
  %1161 = vdwg.mxu0
  %1162 = vmatprep.subr.mxu0 0.0
  %1163 = vmatpush1.msra.mxu0 %v382
  %1164 = vmatprep.subr.mxu0 0.0
  %1165 = vmatpush1.msra.mxu0 %v383
  %1166 = vmatprep.subr.mxu0 0.0
  %1167 = vmatpush1.msra.mxu0 %v384
  %1168 = vmatprep.subr.mxu0 0.0
  %1169 = vmatpush1.msra.mxu0 %v385
  %1170 = vmatprep.subr.mxu0 0.0
  %1171 = vmatpush1.msra.mxu0 %v386
  %1172 = vmatprep.subr.mxu0 0.0
  %1173 = vmatpush1.msra.mxu0 %v387
  %1174 = vmatprep.subr.mxu0 0.0
  %1175 = vmatpush1.msra.mxu0 %v388
  %1176 = vmatprep.subr.mxu0 0.0
  %1177 = vmatpush1.msra.mxu0 %v389
  %1178 = vmatprep.subr.mxu0 0.0
  %1179 = vmatpush1.msra.mxu0 %v390
  %1180 = vmatprep.subr.mxu0 0.0
  %1181 = vmatpush1.msra.mxu0 %v391
  %1182 = vmatprep.subr.mxu0 0.0
  %1183 = vmatpush1.msra.mxu0 %v392
  %1184 = vmatprep.subr.mxu0 0.0
  %1185 = vmatpush1.msra.mxu0 %v393
  %1186 = vmatprep.subr.mxu0 0.0
  %1187 = vmatpush1.msra.mxu0 %v394
  %1188 = vmatprep.subr.mxu0 0.0
  %1189 = vmatpush1.msra.mxu0 %v395
  %1190 = vmatprep.subr.mxu0 0.0
  %1191 = vmatpush1.msra.mxu0 %v396
  %1192 = vmatprep.subr.mxu0 0.0
  %1193 = vmatpush1.msra.mxu0 %v397
  %1194 = vmatprep.subr.mxu0 0.0
  %1195 = vmatpush1.msra.mxu0 %v398
  %1196 = vmatprep.subr.mxu0 0.0
  %1197 = vmatpush1.msra.mxu0 %v399
  %1198 = vmatprep.subr.mxu0 0.0
  %1199 = vmatpush1.msra.mxu0 %v400
  %1200 = vmatprep.subr.mxu0 0.0
  %1201 = vmatpush1.msra.mxu0 %v401
  %1202 = vmatprep.subr.mxu0 0.0
  %1203 = vmatpush1.msra.mxu0 %v402
  %1204 = vmatprep.subr.mxu0 0.0
  %1205 = vmatpush1.msra.mxu0 %v403
  %1206 = vmatprep.subr.mxu0 0.0
  %1207 = vmatpush1.msra.mxu0 %v404
  %1208 = vmatprep.subr.mxu0 0.0
  %1209 = vmatpush1.msra.mxu0 %v405
  %1210 = vmatprep.subr.mxu0 0.0
  %1211 = vmatpush1.msra.mxu0 %v406
  %1212 = vmatprep.subr.mxu0 0.0
  %1213 = vmatpush1.msra.mxu0 %v407
  %1214 = vmatprep.subr.mxu0 0.0
  %1215 = vmatpush1.msra.mxu0 %v408
  %1216 = vmatprep.subr.mxu0 0.0
  %1217 = vmatpush1.msra.mxu0 %v409
  %1218 = vmatprep.subr.mxu0 0.0
  %1219 = vmatpush1.msra.mxu0 %v410
  %1220 = vmatprep.subr.mxu0 0.0
  %1221 = vmatpush1.msra.mxu0 %v411
  %1222 = vmatprep.subr.mxu0 0.0
  %1223 = vmatpush1.msra.mxu0 %v412
  %1224 = vmatprep.subr.mxu0 0.0
  %1225 = vmatpush1.msra.mxu0 %v413
  %1226 = vmatprep.mubr.f32.mxu0 %v25
  %1227 = vmatmul.mubr.f32.gmra.mrb[0].mxu0 %v24
  %v1228 = vpop.f32.mrb[0].mxu0
  %v1229 = vadd.f32 %v1084, %v1228
  %v1230 = vpop.f32.mrb[0].mxu0
  %1231 = vmatprep.mubr.f32.mxu0 %v38
  %1232 = vmatmul.mubr.f32.gmra.mrb[0].mxu0 %v37
  %v1233 = vpop.f32.mrb[0].mxu0
  %v1234 = vadd.f32 %v1089, %v1233
  %v1235 = vpop.f32.mrb[0].mxu0
  %1236 = vmatprep.mubr.f32.mxu0 %v51
  %1237 = vmatmul.mubr.f32.gmra.mrb[0].mxu0 %v50
  %v1238 = vpop.f32.mrb[0].mxu0
  %v1239 = vadd.f32 %v1094, %v1238
  %v1240 = vpop.f32.mrb[0].mxu0
  %1241 = vmatprep.mubr.f32.mxu0 %v64
  %1242 = vmatmul.mubr.f32.gmra.mrb[0].mxu0 %v63
  %v1243 = vpop.f32.mrb[0].mxu0
  %v1244 = vadd.f32 %v1099, %v1243
  %v1245 = vpop.f32.mrb[0].mxu0
  %1246 = vmatprep.mubr.f32.mxu0 %v77
  %1247 = vmatmul.mubr.f32.gmra.mrb[0].mxu0 %v76
  %v1248 = vpop.f32.mrb[0].mxu0
  %v1249 = vadd.f32 %v1104, %v1248
  %v1250 = vpop.f32.mrb[0].mxu0
  %1251 = vmatprep.mubr.f32.mxu0 %v90
  %1252 = vmatmul.mubr.f32.gmra.mrb[0].mxu0 %v89
  %v1253 = vpop.f32.mrb[0].mxu0
  %v1254 = vadd.f32 %v1109, %v1253
  %v1255 = vpop.f32.mrb[0].mxu0
  %1256 = vmatprep.mubr.f32.mxu0 %v103
  %1257 = vmatmul.mubr.f32.gmra.mrb[0].mxu0 %v102
  %v1258 = vpop.f32.mrb[0].mxu0
  %v1259 = vadd.f32 %v1114, %v1258
  %v1260 = vpop.f32.mrb[0].mxu0
  %1261 = vmatprep.mubr.f32.mxu0 %v116
  %1262 = vmatmul.mubr.f32.gmra.mrb[0].mxu0 %v115
  %v1263 = vpop.f32.mrb[0].mxu0
  %v1264 = vadd.f32 %v1119, %v1263
  %v1265 = vpop.f32.mrb[0].mxu0
  %1266 = vmatprep.mubr.f32.mxu0 %v129
  %1267 = vmatmul.mubr.f32.gmra.mrb[0].mxu0 %v128
  %v1268 = vpop.f32.mrb[0].mxu0
  %v1269 = vadd.f32 %v1124, %v1268
  %v1270 = vpop.f32.mrb[0].mxu0
  %1271 = vmatprep.mubr.f32.mxu0 %v142
  %1272 = vmatmul.mubr.f32.gmra.mrb[0].mxu0 %v141
  %v1273 = vpop.f32.mrb[0].mxu0
  %v1274 = vadd.f32 %v1129, %v1273
  %v1275 = vpop.f32.mrb[0].mxu0
  %1276 = vmatprep.mubr.f32.mxu0 %v155
  %1277 = vmatmul.mubr.f32.gmra.mrb[0].mxu0 %v154
  %v1278 = vpop.f32.mrb[0].mxu0
  %v1279 = vadd.f32 %v1134, %v1278
  %v1280 = vpop.f32.mrb[0].mxu0
  %1281 = vmatprep.mubr.f32.mxu0 %v168
  %1282 = vmatmul.mubr.f32.gmra.mrb[0].mxu0 %v167
  %v1283 = vpop.f32.mrb[0].mxu0
  %v1284 = vadd.f32 %v1139, %v1283
  %v1285 = vpop.f32.mrb[0].mxu0
  %1286 = vmatprep.mubr.f32.mxu0 %v181
  %1287 = vmatmul.mubr.f32.gmra.mrb[0].mxu0 %v180
  %v1288 = vpop.f32.mrb[0].mxu0
  %v1289 = vadd.f32 %v1144, %v1288
  %v1290 = vpop.f32.mrb[0].mxu0
  %1291 = vmatprep.mubr.f32.mxu0 %v194
  %1292 = vmatmul.mubr.f32.gmra.mrb[0].mxu0 %v193
  %v1293 = vpop.f32.mrb[0].mxu0
  %v1294 = vadd.f32 %v1149, %v1293
  %v1295 = vpop.f32.mrb[0].mxu0
  %1296 = vmatprep.mubr.f32.mxu0 %v207
  %1297 = vmatmul.mubr.f32.gmra.mrb[0].mxu0 %v206
  %v1298 = vpop.f32.mrb[0].mxu0
  %v1299 = vadd.f32 %v1154, %v1298
  %v1300 = vpop.f32.mrb[0].mxu0
  %1301 = vmatprep.mubr.f32.mxu0 %v220
  %1302 = vmatmul.mubr.f32.gmra.mrb[0].mxu0 %v219
  %v1303 = vpop.f32.mrb[0].mxu0
  %v1304 = vadd.f32 %v1159, %v1303
  %v1305 = vpop.f32.mrb[0].mxu0
  %1306 = vdwg.mxu0
  %1307 = vmatprep.subr.mxu0 0.0
  %1308 = vmatpush1.msra.mxu0 %v414
  %1309 = vmatprep.subr.mxu0 0.0
  %1310 = vmatpush1.msra.mxu0 %v415
  %1311 = vmatprep.subr.mxu0 0.0
  %1312 = vmatpush1.msra.mxu0 %v416
  %1313 = vmatprep.subr.mxu0 0.0
  %1314 = vmatpush1.msra.mxu0 %v417
  %1315 = vmatprep.subr.mxu0 0.0
  %1316 = vmatpush1.msra.mxu0 %v418
  %1317 = vmatprep.subr.mxu0 0.0
  %1318 = vmatpush1.msra.mxu0 %v419
  %1319 = vmatprep.subr.mxu0 0.0
  %1320 = vmatpush1.msra.mxu0 %v420
  %1321 = vmatprep.subr.mxu0 0.0
  %1322 = vmatpush1.msra.mxu0 %v421
  %1323 = vmatprep.subr.mxu0 0.0
  %1324 = vmatpush1.msra.mxu0 %v422
  %1325 = vmatprep.subr.mxu0 0.0
  %1326 = vmatpush1.msra.mxu0 %v423
  %1327 = vmatprep.subr.mxu0 0.0
  %1328 = vmatpush1.msra.mxu0 %v424
  %1329 = vmatprep.subr.mxu0 0.0
  %1330 = vmatpush1.msra.mxu0 %v425
  %1331 = vmatprep.subr.mxu0 0.0
  %1332 = vmatpush1.msra.mxu0 %v426
  %1333 = vmatprep.subr.mxu0 0.0
  %1334 = vmatpush1.msra.mxu0 %v427
  %1335 = vmatprep.subr.mxu0 0.0
  %1336 = vmatpush1.msra.mxu0 %v428
  %1337 = vmatprep.subr.mxu0 0.0
  %1338 = vmatpush1.msra.mxu0 %v429
  %1339 = vmatprep.subr.mxu0 0.0
  %1340 = vmatpush1.msra.mxu0 0.0
  %1341 = vmatprep.subr.mxu0 0.0
  %1342 = vmatpush1.msra.mxu0 0.0
  %1343 = vmatprep.subr.mxu0 0.0
  %1344 = vmatpush1.msra.mxu0 0.0
  %1345 = vmatprep.subr.mxu0 0.0
  %1346 = vmatpush1.msra.mxu0 0.0
  %1347 = vmatprep.subr.mxu0 0.0
  %1348 = vmatpush1.msra.mxu0 0.0
  %1349 = vmatprep.subr.mxu0 0.0
  %1350 = vmatpush1.msra.mxu0 0.0
  %1351 = vmatprep.subr.mxu0 0.0
  %1352 = vmatpush1.msra.mxu0 0.0
  %1353 = vmatprep.subr.mxu0 0.0
  %1354 = vmatpush1.msra.mxu0 0.0
  %1355 = vmatprep.subr.mxu0 0.0
  %1356 = vmatpush1.msra.mxu0 0.0
  %1357 = vmatprep.subr.mxu0 0.0
  %1358 = vmatpush1.msra.mxu0 0.0
  %1359 = vmatprep.subr.mxu0 0.0
  %1360 = vmatpush1.msra.mxu0 0.0
  %1361 = vmatprep.subr.mxu0 0.0
  %1362 = vmatpush1.msra.mxu0 0.0
  %1363 = vmatprep.subr.mxu0 0.0
  %1364 = vmatpush1.msra.mxu0 0.0
  %1365 = vmatprep.subr.mxu0 0.0
  %1366 = vmatpush1.msra.mxu0 0.0
  %1367 = vmatprep.subr.mxu0 0.0
  %1368 = vmatpush1.msra.mxu0 0.0
  %1369 = vmatprep.subr.mxu0 0.0
  %1370 = vmatpush1.msra.mxu0 0.0
  %1371 = vmatprep.mubr.f32.mxu0 0.0
  %1372 = vmatmul.mubr.f32.gmra.mrb[0].mxu0 %v26
  %v1373 = vpop.f32.mrb[0].mxu0
  %v1374 = vadd.f32 %v1229, %v1373
  %v1375 = vpop.f32.mrb[0].mxu0
  %1376 = vmatprep.mubr.f32.mxu0 0.0
  %1377 = vmatmul.mubr.f32.gmra.mrb[0].mxu0 %v39
  %v1378 = vpop.f32.mrb[0].mxu0
  %v1379 = vadd.f32 %v1234, %v1378
  %v1380 = vpop.f32.mrb[0].mxu0
  %1381 = vmatprep.mubr.f32.mxu0 0.0
  %1382 = vmatmul.mubr.f32.gmra.mrb[0].mxu0 %v52
  %v1383 = vpop.f32.mrb[0].mxu0
  %v1384 = vadd.f32 %v1239, %v1383
  %v1385 = vpop.f32.mrb[0].mxu0
  %1386 = vmatprep.mubr.f32.mxu0 0.0
  %1387 = vmatmul.mubr.f32.gmra.mrb[0].mxu0 %v65
  %v1388 = vpop.f32.mrb[0].mxu0
  %v1389 = vadd.f32 %v1244, %v1388
  %v1390 = vpop.f32.mrb[0].mxu0
  %1391 = vmatprep.mubr.f32.mxu0 0.0
  %1392 = vmatmul.mubr.f32.gmra.mrb[0].mxu0 %v78
  %v1393 = vpop.f32.mrb[0].mxu0
  %v1394 = vadd.f32 %v1249, %v1393
  %v1395 = vpop.f32.mrb[0].mxu0
  %1396 = vmatprep.mubr.f32.mxu0 0.0
  %1397 = vmatmul.mubr.f32.gmra.mrb[0].mxu0 %v91
  %v1398 = vpop.f32.mrb[0].mxu0
  %v1399 = vadd.f32 %v1254, %v1398
  %v1400 = vpop.f32.mrb[0].mxu0
  %1401 = vmatprep.mubr.f32.mxu0 0.0
  %1402 = vmatmul.mubr.f32.gmra.mrb[0].mxu0 %v104
  %v1403 = vpop.f32.mrb[0].mxu0
  %v1404 = vadd.f32 %v1259, %v1403
  %v1405 = vpop.f32.mrb[0].mxu0
  %1406 = vmatprep.mubr.f32.mxu0 0.0
  %1407 = vmatmul.mubr.f32.gmra.mrb[0].mxu0 %v117
  %v1408 = vpop.f32.mrb[0].mxu0
  %v1409 = vadd.f32 %v1264, %v1408
  %v1410 = vpop.f32.mrb[0].mxu0
  %1411 = vmatprep.mubr.f32.mxu0 0.0
  %1412 = vmatmul.mubr.f32.gmra.mrb[0].mxu0 %v130
  %v1413 = vpop.f32.mrb[0].mxu0
  %v1414 = vadd.f32 %v1269, %v1413
  %v1415 = vpop.f32.mrb[0].mxu0
  %1416 = vmatprep.mubr.f32.mxu0 0.0
  %1417 = vmatmul.mubr.f32.gmra.mrb[0].mxu0 %v143
  %v1418 = vpop.f32.mrb[0].mxu0
  %v1419 = vadd.f32 %v1274, %v1418
  %v1420 = vpop.f32.mrb[0].mxu0
  %1421 = vmatprep.mubr.f32.mxu0 0.0
  %1422 = vmatmul.mubr.f32.gmra.mrb[0].mxu0 %v156
  %v1423 = vpop.f32.mrb[0].mxu0
  %v1424 = vadd.f32 %v1279, %v1423
  %v1425 = vpop.f32.mrb[0].mxu0
  %1426 = vmatprep.mubr.f32.mxu0 0.0
  %1427 = vmatmul.mubr.f32.gmra.mrb[0].mxu0 %v169
  %v1428 = vpop.f32.mrb[0].mxu0
  %v1429 = vadd.f32 %v1284, %v1428
  %v1430 = vpop.f32.mrb[0].mxu0
  %1431 = vmatprep.mubr.f32.mxu0 0.0
  %1432 = vmatmul.mubr.f32.gmra.mrb[0].mxu0 %v182
  %v1433 = vpop.f32.mrb[0].mxu0
  %v1434 = vadd.f32 %v1289, %v1433
  %v1435 = vpop.f32.mrb[0].mxu0
  %1436 = vmatprep.mubr.f32.mxu0 0.0
  %1437 = vmatmul.mubr.f32.gmra.mrb[0].mxu0 %v195
  %v1438 = vpop.f32.mrb[0].mxu0
  %v1439 = vadd.f32 %v1294, %v1438
  %v1440 = vpop.f32.mrb[0].mxu0
  %1441 = vmatprep.mubr.f32.mxu0 0.0
  %1442 = vmatmul.mubr.f32.gmra.mrb[0].mxu0 %v208
  %v1443 = vpop.f32.mrb[0].mxu0
  %v1444 = vadd.f32 %v1299, %v1443
  %v1445 = vpop.f32.mrb[0].mxu0
  %1446 = vmatprep.mubr.f32.mxu0 0.0
  %1447 = vmatmul.mubr.f32.gmra.mrb[0].mxu0 %v221
  %v1448 = vpop.f32.mrb[0].mxu0
  %v1449 = vadd.f32 %v1304, %v1448
  %v1450 = vpop.f32.mrb[0].mxu0
  %1451 = vdwg.mxu0
  %v1452 = vmax.f32 %v1374, 0.0
  %v1453 = vmax.f32 %v1379, 0.0
  %v1454 = vmax.f32 %v1384, 0.0
  %v1455 = vmax.f32 %v1389, 0.0
  %v1456 = vmax.f32 %v1394, 0.0
  %v1457 = vmax.f32 %v1399, 0.0
  %v1458 = vmax.f32 %v1404, 0.0
  %v1459 = vmax.f32 %v1409, 0.0
  %v1460 = vmax.f32 %v1414, 0.0
  %v1461 = vmax.f32 %v1419, 0.0
  %v1462 = vmax.f32 %v1424, 0.0
  %v1463 = vmax.f32 %v1429, 0.0
  %v1464 = vmax.f32 %v1434, 0.0
  %v1465 = vmax.f32 %v1439, 0.0
  %v1466 = vmax.f32 %v1444, 0.0
  %v1467 = vmax.f32 %v1449, 0.0
  %1468 = vst [vmem:[%s3] sm:$0xff] %v1452
  %1469 = vst [vmem:[%s3 + $0x8] sm:$0xff] %v1453
  %1470 = vst [vmem:[%s3 + $0x10] sm:$0xff] %v1454
  %1471 = vst [vmem:[%s3 + $0x18] sm:$0xff] %v1455
  %1472 = vst [vmem:[%s3 + $0x20] sm:$0xff] %v1456
  %1473 = vst [vmem:[%s3 + $0x28] sm:$0xff] %v1457
  %1474 = vst [vmem:[%s3 + $0x30] sm:$0xff] %v1458
  %1475 = vst [vmem:[%s3 + $0x38] sm:$0xff] %v1459
  %1476 = vst [vmem:[%s3 + $0x40] sm:$0xff] %v1460
  %1477 = vst [vmem:[%s3 + $0x48] sm:$0xff] %v1461
  %1478 = vst [vmem:[%s3 + $0x50] sm:$0xff] %v1462
  %1479 = vst [vmem:[%s3 + $0x58] sm:$0xff] %v1463
  %1480 = vst [vmem:[%s3 + $0x60] sm:$0xff] %v1464
  %1481 = vst [vmem:[%s3 + $0x68] sm:$0xff] %v1465
  %1482 = vst [vmem:[%s3 + $0x70] sm:$0xff] %v1466
  %1483 = vst [vmem:[%s3 + $0x78] sm:$0xff] %v1467
  // Predicated region
  $region14: #{tetris_nn3_forward.12} parent=0 // pred_check
    _
  $region15: #{tetris_nn3_forward.12} parent=0 // pred_check_branch
    %1485 = sbr.rel (0) target = $region17
  $region16: #{tetris_nn3_forward.12} parent=0 // pred_region
    _
  $region17: #{tetris_nn3_forward.12} parent=0 // pred_fallthru
    _
  // Predicated region
  $region18: #{tetris_nn3_forward.12} parent=0 // pred_check
    _
  $region19: #{tetris_nn3_forward.12} parent=0 // pred_check_branch
    %1487 = sbr.rel (0) target = $region21
  $region20: #{tetris_nn3_forward.12} parent=0 // pred_region
    _
  $region21: #{tetris_nn3_forward.12} parent=0 // pred_fallthru
    _

// kernel: tetris_nn3_forward.14
$region0: #{tetris_nn3_forward.14}
  #allocation0 [shape = 'u32[]', space=smem, size = 0x4, offset = 0x4, fixed_abs, tag = 'smem constant byte address 0x4 - core index']
  #allocation1 [shape = 'u32[144,128]{1,0:T(1,128)}', space=vmem, size = 0x12000, scoped, tag = 'internal scratch']
  %s0 = inlined_call_operand.vmem [shape: f32[32,128], index: 0, kind: input, shape index: {}]
  %s1 = inlined_call_operand.vmem [shape: f32[128,128], index: 1, kind: input, shape index: {}]
  %s2 = inlined_call_operand.vmem [shape: f32[1,128], index: 2, kind: input, shape index: {}]
  %s3 = inlined_call_operand.vmem [shape: f32[32,128], index: 3, kind: output, shape index: {}]
  %s4 = sld [smem:[#allocation0]]
  $region22: #{tetris_nn3_forward.14} parent=0
    _
  %s6 = ssub.s32 1, %s4
  %s7 = scalar_select 0, %s6, %s4
  // Predicated region
  $region2: #{tetris_nn3_forward.14} parent=0 // pred_check
    _
  $region3: #{tetris_nn3_forward.14} parent=0 // pred_check_branch
    %9 = sbr.rel (0) target = $region5
  $region4: #{tetris_nn3_forward.14} parent=0 // pred_region
    _
  $region5: #{tetris_nn3_forward.14} parent=0 // pred_fallthru
    _
  // Predicated region
  $region6: #{tetris_nn3_forward.14} parent=0 // pred_check
    _
  $region7: #{tetris_nn3_forward.14} parent=0 // pred_check_branch
    %11 = sbr.rel (0) target = $region9
  $region8: #{tetris_nn3_forward.14} parent=0 // pred_region
    _
  $region9: #{tetris_nn3_forward.14} parent=0 // pred_fallthru
    _
  // Predicated region
  $region10: #{tetris_nn3_forward.14} parent=0 // pred_check
    _
  $region11: #{tetris_nn3_forward.14} parent=0 // pred_check_branch
    %13 = sbr.rel (0) target = $region13
  $region12: #{tetris_nn3_forward.14} parent=0 // pred_region
    _
  $region13: #{tetris_nn3_forward.14} parent=0 // pred_fallthru
    _
  %v14 = vld [vmem:[%s0] sm:$0xff]
  %v15 = vld [vmem:[%s0 + $0x8] sm:$0xff]
  %v16 = vld [vmem:[%s0 + $0x10] sm:$0xff]
  %v17 = vld [vmem:[%s0 + $0x18] sm:$0xff]
  %v18 = vld [vmem:[%s1] sm:$0xff]
  %v19 = vld [vmem:[%s1 + $0x8] sm:$0xff]
  %v20 = vld [vmem:[%s1 + $0x10] sm:$0xff]
  %v21 = vld [vmem:[%s1 + $0x18] sm:$0xff]
  %v22 = vld [vmem:[%s1 + $0x20] sm:$0xff]
  %v23 = vld [vmem:[%s1 + $0x28] sm:$0xff]
  %v24 = vld [vmem:[%s1 + $0x30] sm:$0xff]
  %v25 = vld [vmem:[%s1 + $0x38] sm:$0xff]
  %v26 = vld [vmem:[%s1 + $0x40] sm:$0xff]
  %v27 = vld [vmem:[%s1 + $0x48] sm:$0xff]
  %v28 = vld [vmem:[%s1 + $0x50] sm:$0xff]
  %v29 = vld [vmem:[%s1 + $0x58] sm:$0xff]
  %v30 = vld [vmem:[%s1 + $0x60] sm:$0xff]
  %v31 = vld [vmem:[%s1 + $0x68] sm:$0xff]
  %v32 = vld [vmem:[%s1 + $0x70] sm:$0xff]
  %v33 = vld [vmem:[%s1 + $0x78] sm:$0xff]
  %v34 = vld [vmem:[%s2] sm:$0x1]
  %v36 = vlaneseq
  %v37 = vshrl.u32 %v36, 7
  %v38 = vsub.s32 0, %v37
  %v39 = vrot.slane %v34, %v38
  %41 = vmatprep.subr.mxu0 0.0
  %42 = vmatpush1.msra.mxu0 %v18
  %43 = vmatprep.subr.mxu0 0.0
  %44 = vmatpush1.msra.mxu0 %v19
  %45 = vmatprep.subr.mxu0 0.0
  %46 = vmatpush1.msra.mxu0 %v20
  %47 = vmatprep.subr.mxu0 0.0
  %48 = vmatpush1.msra.mxu0 %v21
  %49 = vmatprep.subr.mxu0 0.0
  %50 = vmatpush1.msra.mxu0 %v22
  %51 = vmatprep.subr.mxu0 0.0
  %52 = vmatpush1.msra.mxu0 %v23
  %53 = vmatprep.subr.mxu0 0.0
  %54 = vmatpush1.msra.mxu0 %v24
  %55 = vmatprep.subr.mxu0 0.0
  %56 = vmatpush1.msra.mxu0 %v25
  %57 = vmatprep.subr.mxu0 0.0
  %58 = vmatpush1.msra.mxu0 %v26
  %59 = vmatprep.subr.mxu0 0.0
  %60 = vmatpush1.msra.mxu0 %v27
  %61 = vmatprep.subr.mxu0 0.0
  %62 = vmatpush1.msra.mxu0 %v28
  %63 = vmatprep.subr.mxu0 0.0
  %64 = vmatpush1.msra.mxu0 %v29
  %65 = vmatprep.subr.mxu0 0.0
  %66 = vmatpush1.msra.mxu0 %v30
  %67 = vmatprep.subr.mxu0 0.0
  %68 = vmatpush1.msra.mxu0 %v31
  %69 = vmatprep.subr.mxu0 0.0
  %70 = vmatpush1.msra.mxu0 %v32
  %71 = vmatprep.subr.mxu0 0.0
  %72 = vmatpush1.msra.mxu0 %v33
  %73 = vmatprep.subr.mxu0 0.0
  %74 = vmatpush1.msra.mxu0 0.0
  %75 = vmatprep.subr.mxu0 0.0
  %76 = vmatpush1.msra.mxu0 0.0
  %77 = vmatprep.subr.mxu0 0.0
  %78 = vmatpush1.msra.mxu0 0.0
  %79 = vmatprep.subr.mxu0 0.0
  %80 = vmatpush1.msra.mxu0 0.0
  %81 = vmatprep.subr.mxu0 0.0
  %82 = vmatpush1.msra.mxu0 0.0
  %83 = vmatprep.subr.mxu0 0.0
  %84 = vmatpush1.msra.mxu0 0.0
  %85 = vmatprep.subr.mxu0 0.0
  %86 = vmatpush1.msra.mxu0 0.0
  %87 = vmatprep.subr.mxu0 0.0
  %88 = vmatpush1.msra.mxu0 0.0
  %89 = vmatprep.subr.mxu0 0.0
  %90 = vmatpush1.msra.mxu0 0.0
  %91 = vmatprep.subr.mxu0 0.0
  %92 = vmatpush1.msra.mxu0 0.0
  %93 = vmatprep.subr.mxu0 0.0
  %94 = vmatpush1.msra.mxu0 0.0
  %95 = vmatprep.subr.mxu0 0.0
  %96 = vmatpush1.msra.mxu0 0.0
  %97 = vmatprep.subr.mxu0 0.0
  %98 = vmatpush1.msra.mxu0 0.0
  %99 = vmatprep.subr.mxu0 0.0
  %100 = vmatpush1.msra.mxu0 0.0
  %101 = vmatprep.subr.mxu0 0.0
  %102 = vmatpush1.msra.mxu0 0.0
  %103 = vmatprep.subr.mxu0 0.0
  %104 = vmatpush1.msra.mxu0 0.0
  %105 = vmatprep.mubr.f32.mxu0 0.0
  %106 = vmatmul.mubr.f32.gmra.mrb[0].mxu0 %v14
  %v107 = vpop.f32.mrb[0].mxu0
  %v108 = vadd.f32 %v39, %v107
  %v109 = vpop.f32.mrb[0].mxu0
  %110 = vmatprep.mubr.f32.mxu0 0.0
  %111 = vmatmul.mubr.f32.gmra.mrb[0].mxu0 %v15
  %v112 = vpop.f32.mrb[0].mxu0
  %v113 = vadd.f32 %v39, %v112
  %v114 = vpop.f32.mrb[0].mxu0
  %115 = vmatprep.mubr.f32.mxu0 0.0
  %116 = vmatmul.mubr.f32.gmra.mrb[0].mxu0 %v16
  %v117 = vpop.f32.mrb[0].mxu0
  %v118 = vadd.f32 %v39, %v117
  %v119 = vpop.f32.mrb[0].mxu0
  %120 = vmatprep.mubr.f32.mxu0 0.0
  %121 = vmatmul.mubr.f32.gmra.mrb[0].mxu0 %v17
  %v122 = vpop.f32.mrb[0].mxu0
  %v123 = vadd.f32 %v39, %v122
  %v124 = vpop.f32.mrb[0].mxu0
  %125 = vdwg.mxu0
  %v126 = vmax.f32 %v108, 0.0
  %v127 = vmax.f32 %v113, 0.0
  %v128 = vmax.f32 %v118, 0.0
  %v129 = vmax.f32 %v123, 0.0
  %130 = vst [vmem:[%s3] sm:$0xff] %v126
  %131 = vst [vmem:[%s3 + $0x8] sm:$0xff] %v127
  %132 = vst [vmem:[%s3 + $0x10] sm:$0xff] %v128
  %133 = vst [vmem:[%s3 + $0x18] sm:$0xff] %v129
  // Predicated region
  $region14: #{tetris_nn3_forward.14} parent=0 // pred_check
    _
  $region15: #{tetris_nn3_forward.14} parent=0 // pred_check_branch
    %135 = sbr.rel (0) target = $region17
  $region16: #{tetris_nn3_forward.14} parent=0 // pred_region
    _
  $region17: #{tetris_nn3_forward.14} parent=0 // pred_fallthru
    _
  // Predicated region
  $region18: #{tetris_nn3_forward.14} parent=0 // pred_check
    _
  $region19: #{tetris_nn3_forward.14} parent=0 // pred_check_branch
    %137 = sbr.rel (0) target = $region21
  $region20: #{tetris_nn3_forward.14} parent=0 // pred_region
    _
  $region21: #{tetris_nn3_forward.14} parent=0 // pred_fallthru
    _

// kernel: tetris_nn3_forward.16
$region0: #{tetris_nn3_forward.16}
  #allocation0 [shape = 'u32[]', space=smem, size = 0x4, offset = 0x4, fixed_abs, tag = 'smem constant byte address 0x4 - core index']
  #allocation1 [shape = 'u32[144,128]{1,0:T(1,128)}', space=vmem, size = 0x12000, scoped, tag = 'internal scratch']
  %s0 = inlined_call_operand.vmem [shape: f32[32,256], index: 0, kind: input, shape index: {}]
  %s1 = inlined_call_operand.vmem [shape: f32[256,128], index: 1, kind: input, shape index: {}]
  %s2 = inlined_call_operand.vmem [shape: f32[1,128], index: 2, kind: input, shape index: {}]
  %s3 = inlined_call_operand.vmem [shape: f32[32,128], index: 3, kind: output, shape index: {}]
  %s4 = sld [smem:[#allocation0]]
  $region22: #{tetris_nn3_forward.16} parent=0
    _
  %s6 = ssub.s32 1, %s4
  %s7 = scalar_select 0, %s6, %s4
  // Predicated region
  $region2: #{tetris_nn3_forward.16} parent=0 // pred_check
    _
  $region3: #{tetris_nn3_forward.16} parent=0 // pred_check_branch
    %9 = sbr.rel (0) target = $region5
  $region4: #{tetris_nn3_forward.16} parent=0 // pred_region
    _
  $region5: #{tetris_nn3_forward.16} parent=0 // pred_fallthru
    _
  // Predicated region
  $region6: #{tetris_nn3_forward.16} parent=0 // pred_check
    _
  $region7: #{tetris_nn3_forward.16} parent=0 // pred_check_branch
    %11 = sbr.rel (0) target = $region9
  $region8: #{tetris_nn3_forward.16} parent=0 // pred_region
    _
  $region9: #{tetris_nn3_forward.16} parent=0 // pred_fallthru
    _
  // Predicated region
  $region10: #{tetris_nn3_forward.16} parent=0 // pred_check
    _
  $region11: #{tetris_nn3_forward.16} parent=0 // pred_check_branch
    %13 = sbr.rel (0) target = $region13
  $region12: #{tetris_nn3_forward.16} parent=0 // pred_region
    _
  $region13: #{tetris_nn3_forward.16} parent=0 // pred_fallthru
    _
  %v14 = vld [vmem:[%s0] sm:$0xff]
  %v15 = vld [vmem:[%s0 + $0x8] sm:$0xff]
  %v16 = vld [vmem:[%s0 + $0x10] sm:$0xff]
  %v17 = vld [vmem:[%s0 + $0x18] sm:$0xff]
  %v18 = vld [vmem:[%s0 + $0x20] sm:$0xff]
  %v19 = vld [vmem:[%s0 + $0x28] sm:$0xff]
  %v20 = vld [vmem:[%s0 + $0x30] sm:$0xff]
  %v21 = vld [vmem:[%s0 + $0x38] sm:$0xff]
  %v22 = vld [vmem:[%s1] sm:$0xff]
  %v23 = vld [vmem:[%s1 + $0x8] sm:$0xff]
  %v24 = vld [vmem:[%s1 + $0x10] sm:$0xff]
  %v25 = vld [vmem:[%s1 + $0x18] sm:$0xff]
  %v26 = vld [vmem:[%s1 + $0x20] sm:$0xff]
  %v27 = vld [vmem:[%s1 + $0x28] sm:$0xff]
  %v28 = vld [vmem:[%s1 + $0x30] sm:$0xff]
  %v29 = vld [vmem:[%s1 + $0x38] sm:$0xff]
  %v30 = vld [vmem:[%s1 + $0x40] sm:$0xff]
  %v31 = vld [vmem:[%s1 + $0x48] sm:$0xff]
  %v32 = vld [vmem:[%s1 + $0x50] sm:$0xff]
  %v33 = vld [vmem:[%s1 + $0x58] sm:$0xff]
  %v34 = vld [vmem:[%s1 + $0x60] sm:$0xff]
  %v35 = vld [vmem:[%s1 + $0x68] sm:$0xff]
  %v36 = vld [vmem:[%s1 + $0x70] sm:$0xff]
  %v37 = vld [vmem:[%s1 + $0x78] sm:$0xff]
  %v38 = vld [vmem:[%s1 + $0x80] sm:$0xff]
  %v39 = vld [vmem:[%s1 + $0x88] sm:$0xff]
  %v40 = vld [vmem:[%s1 + $0x90] sm:$0xff]
  %v41 = vld [vmem:[%s1 + $0x98] sm:$0xff]
  %v42 = vld [vmem:[%s1 + $0xa0] sm:$0xff]
  %v43 = vld [vmem:[%s1 + $0xa8] sm:$0xff]
  %v44 = vld [vmem:[%s1 + $0xb0] sm:$0xff]
  %v45 = vld [vmem:[%s1 + $0xb8] sm:$0xff]
  %v46 = vld [vmem:[%s1 + $0xc0] sm:$0xff]
  %v47 = vld [vmem:[%s1 + $0xc8] sm:$0xff]
  %v48 = vld [vmem:[%s1 + $0xd0] sm:$0xff]
  %v49 = vld [vmem:[%s1 + $0xd8] sm:$0xff]
  %v50 = vld [vmem:[%s1 + $0xe0] sm:$0xff]
  %v51 = vld [vmem:[%s1 + $0xe8] sm:$0xff]
  %v52 = vld [vmem:[%s1 + $0xf0] sm:$0xff]
  %v53 = vld [vmem:[%s1 + $0xf8] sm:$0xff]
  %v54 = vld [vmem:[%s2] sm:$0x1]
  %v56 = vlaneseq
  %v57 = vshrl.u32 %v56, 7
  %v58 = vsub.s32 0, %v57
  %v59 = vrot.slane %v54, %v58
  %61 = vmatprep.subr.mxu0 0.0
  %62 = vmatpush1.msra.mxu0 %v22
  %63 = vmatprep.subr.mxu0 0.0
  %64 = vmatpush1.msra.mxu0 %v23
  %65 = vmatprep.subr.mxu0 0.0
  %66 = vmatpush1.msra.mxu0 %v24
  %67 = vmatprep.subr.mxu0 0.0
  %68 = vmatpush1.msra.mxu0 %v25
  %69 = vmatprep.subr.mxu0 0.0
  %70 = vmatpush1.msra.mxu0 %v26
  %71 = vmatprep.subr.mxu0 0.0
  %72 = vmatpush1.msra.mxu0 %v27
  %73 = vmatprep.subr.mxu0 0.0
  %74 = vmatpush1.msra.mxu0 %v28
  %75 = vmatprep.subr.mxu0 0.0
  %76 = vmatpush1.msra.mxu0 %v29
  %77 = vmatprep.subr.mxu0 0.0
  %78 = vmatpush1.msra.mxu0 %v30
  %79 = vmatprep.subr.mxu0 0.0
  %80 = vmatpush1.msra.mxu0 %v31
  %81 = vmatprep.subr.mxu0 0.0
  %82 = vmatpush1.msra.mxu0 %v32
  %83 = vmatprep.subr.mxu0 0.0
  %84 = vmatpush1.msra.mxu0 %v33
  %85 = vmatprep.subr.mxu0 0.0
  %86 = vmatpush1.msra.mxu0 %v34
  %87 = vmatprep.subr.mxu0 0.0
  %88 = vmatpush1.msra.mxu0 %v35
  %89 = vmatprep.subr.mxu0 0.0
  %90 = vmatpush1.msra.mxu0 %v36
  %91 = vmatprep.subr.mxu0 0.0
  %92 = vmatpush1.msra.mxu0 %v37
  %93 = vmatprep.subr.mxu0 0.0
  %94 = vmatpush1.msra.mxu0 %v38
  %95 = vmatprep.subr.mxu0 0.0
  %96 = vmatpush1.msra.mxu0 %v39
  %97 = vmatprep.subr.mxu0 0.0
  %98 = vmatpush1.msra.mxu0 %v40
  %99 = vmatprep.subr.mxu0 0.0
  %100 = vmatpush1.msra.mxu0 %v41
  %101 = vmatprep.subr.mxu0 0.0
  %102 = vmatpush1.msra.mxu0 %v42
  %103 = vmatprep.subr.mxu0 0.0
  %104 = vmatpush1.msra.mxu0 %v43
  %105 = vmatprep.subr.mxu0 0.0
  %106 = vmatpush1.msra.mxu0 %v44
  %107 = vmatprep.subr.mxu0 0.0
  %108 = vmatpush1.msra.mxu0 %v45
  %109 = vmatprep.subr.mxu0 0.0
  %110 = vmatpush1.msra.mxu0 %v46
  %111 = vmatprep.subr.mxu0 0.0
  %112 = vmatpush1.msra.mxu0 %v47
  %113 = vmatprep.subr.mxu0 0.0
  %114 = vmatpush1.msra.mxu0 %v48
  %115 = vmatprep.subr.mxu0 0.0
  %116 = vmatpush1.msra.mxu0 %v49
  %117 = vmatprep.subr.mxu0 0.0
  %118 = vmatpush1.msra.mxu0 %v50
  %119 = vmatprep.subr.mxu0 0.0
  %120 = vmatpush1.msra.mxu0 %v51
  %121 = vmatprep.subr.mxu0 0.0
  %122 = vmatpush1.msra.mxu0 %v52
  %123 = vmatprep.subr.mxu0 0.0
  %124 = vmatpush1.msra.mxu0 %v53
  %125 = vmatprep.mubr.f32.mxu0 %v15
  %126 = vmatmul.mubr.f32.gmra.mrb[0].mxu0 %v14
  %v127 = vpop.f32.mrb[0].mxu0
  %v128 = vadd.f32 %v59, %v127
  %v129 = vpop.f32.mrb[0].mxu0
  %130 = vmatprep.mubr.f32.mxu0 %v17
  %131 = vmatmul.mubr.f32.gmra.mrb[0].mxu0 %v16
  %v132 = vpop.f32.mrb[0].mxu0
  %v133 = vadd.f32 %v59, %v132
  %v134 = vpop.f32.mrb[0].mxu0
  %135 = vmatprep.mubr.f32.mxu0 %v19
  %136 = vmatmul.mubr.f32.gmra.mrb[0].mxu0 %v18
  %v137 = vpop.f32.mrb[0].mxu0
  %v138 = vadd.f32 %v59, %v137
  %v139 = vpop.f32.mrb[0].mxu0
  %140 = vmatprep.mubr.f32.mxu0 %v21
  %141 = vmatmul.mubr.f32.gmra.mrb[0].mxu0 %v20
  %v142 = vpop.f32.mrb[0].mxu0
  %v143 = vadd.f32 %v59, %v142
  %v144 = vpop.f32.mrb[0].mxu0
  %145 = vdwg.mxu0
  %v146 = vmax.f32 %v128, 0.0
  %v147 = vmax.f32 %v133, 0.0
  %v148 = vmax.f32 %v138, 0.0
  %v149 = vmax.f32 %v143, 0.0
  %150 = vst [vmem:[%s3] sm:$0xff] %v146
  %151 = vst [vmem:[%s3 + $0x8] sm:$0xff] %v147
  %152 = vst [vmem:[%s3 + $0x10] sm:$0xff] %v148
  %153 = vst [vmem:[%s3 + $0x18] sm:$0xff] %v149
  // Predicated region
  $region14: #{tetris_nn3_forward.16} parent=0 // pred_check
    _
  $region15: #{tetris_nn3_forward.16} parent=0 // pred_check_branch
    %155 = sbr.rel (0) target = $region17
  $region16: #{tetris_nn3_forward.16} parent=0 // pred_region
    _
  $region17: #{tetris_nn3_forward.16} parent=0 // pred_fallthru
    _
  // Predicated region
  $region18: #{tetris_nn3_forward.16} parent=0 // pred_check
    _
  $region19: #{tetris_nn3_forward.16} parent=0 // pred_check_branch
    %157 = sbr.rel (0) target = $region21
  $region20: #{tetris_nn3_forward.16} parent=0 // pred_region
    _
  $region21: #{tetris_nn3_forward.16} parent=0 // pred_fallthru
    _

// kernel: tetris_nn3_forward.17
$region0: #{tetris_nn3_forward.17}
  #allocation0 [shape = 'u32[]', space=smem, size = 0x4, offset = 0x4, fixed_abs, tag = 'smem constant byte address 0x4 - core index']
  #allocation1 [shape = 'u32[144,128]{1,0:T(1,128)}', space=vmem, size = 0x12000, scoped, tag = 'internal scratch']
  %s0 = inlined_call_operand.vmem [shape: f32[8,128], index: 0, kind: input, shape index: {}]
  %s1 = inlined_call_operand.vmem [shape: f32[8,128], index: 1, kind: input, shape index: {}]
  %s2 = inlined_call_operand.vmem [shape: f32[128,128], index: 2, kind: input, shape index: {}]
  %s3 = inlined_call_operand.vmem [shape: f32[1,128], index: 3, kind: input, shape index: {}]
  %s4 = inlined_call_operand.vmem [shape: f32[128,256], index: 4, kind: input, shape index: {}]
  %s5 = inlined_call_operand.vmem [shape: f32[128,256], index: 5, kind: input, shape index: {}]
  %s6 = inlined_call_operand.vmem [shape: f32[1,256], index: 6, kind: input, shape index: {}]
  %s7 = inlined_call_operand.vmem [shape: f32[256,128], index: 7, kind: input, shape index: {}]
  %s8 = inlined_call_operand.vmem [shape: f32[1,128], index: 8, kind: input, shape index: {}]
  %s9 = inlined_call_operand.vmem [shape: f32[128,128], index: 9, kind: input, shape index: {}]
  %s10 = inlined_call_operand.vmem [shape: f32[1,128], index: 10, kind: input, shape index: {}]
  %s11 = inlined_call_operand.vmem [shape: f32[128,128], index: 11, kind: input, shape index: {}]
  %s12 = inlined_call_operand.vmem [shape: f32[1,128], index: 12, kind: input, shape index: {}]
  %s13 = inlined_call_operand.vmem [shape: f32[8,128], index: 13, kind: output, shape index: {}]
  %s14 = sld [smem:[#allocation0]]
  $region62: #{tetris_nn3_forward.17} parent=0
    _
  %s16 = ssub.s32 1, %s14
  %s17 = scalar_select 0, %s16, %s14
  // Predicated region
  $region2: #{tetris_nn3_forward.17} parent=0 // pred_check
    _
  $region3: #{tetris_nn3_forward.17} parent=0 // pred_check_branch
    %19 = sbr.rel (0) target = $region5
  $region4: #{tetris_nn3_forward.17} parent=0 // pred_region
    _
  $region5: #{tetris_nn3_forward.17} parent=0 // pred_fallthru
    _
  // Predicated region
  $region6: #{tetris_nn3_forward.17} parent=0 // pred_check
    _
  $region7: #{tetris_nn3_forward.17} parent=0 // pred_check_branch
    %21 = sbr.rel (0) target = $region9
  $region8: #{tetris_nn3_forward.17} parent=0 // pred_region
    _
  $region9: #{tetris_nn3_forward.17} parent=0 // pred_fallthru
    _
  // Predicated region
  $region10: #{tetris_nn3_forward.17} parent=0 // pred_check
    _
  $region11: #{tetris_nn3_forward.17} parent=0 // pred_check_branch
    %23 = sbr.rel (0) target = $region13
  $region12: #{tetris_nn3_forward.17} parent=0 // pred_region
    _
  $region13: #{tetris_nn3_forward.17} parent=0 // pred_fallthru
    _
  // Predicated region
  $region14: #{tetris_nn3_forward.17} parent=0 // pred_check
    _
  $region15: #{tetris_nn3_forward.17} parent=0 // pred_check_branch
    %25 = sbr.rel (0) target = $region17
  $region16: #{tetris_nn3_forward.17} parent=0 // pred_region
    _
  $region17: #{tetris_nn3_forward.17} parent=0 // pred_fallthru
    _
  // Predicated region
  $region18: #{tetris_nn3_forward.17} parent=0 // pred_check
    _
  $region19: #{tetris_nn3_forward.17} parent=0 // pred_check_branch
    %27 = sbr.rel (0) target = $region21
  $region20: #{tetris_nn3_forward.17} parent=0 // pred_region
    _
  $region21: #{tetris_nn3_forward.17} parent=0 // pred_fallthru
    _
  // Predicated region
  $region22: #{tetris_nn3_forward.17} parent=0 // pred_check
    _
  $region23: #{tetris_nn3_forward.17} parent=0 // pred_check_branch
    %29 = sbr.rel (0) target = $region25
  $region24: #{tetris_nn3_forward.17} parent=0 // pred_region
    _
  $region25: #{tetris_nn3_forward.17} parent=0 // pred_fallthru
    _
  // Predicated region
  $region26: #{tetris_nn3_forward.17} parent=0 // pred_check
    _
  $region27: #{tetris_nn3_forward.17} parent=0 // pred_check_branch
    %31 = sbr.rel (0) target = $region29
  $region28: #{tetris_nn3_forward.17} parent=0 // pred_region
    _
  $region29: #{tetris_nn3_forward.17} parent=0 // pred_fallthru
    _
  // Predicated region
  $region30: #{tetris_nn3_forward.17} parent=0 // pred_check
    _
  $region31: #{tetris_nn3_forward.17} parent=0 // pred_check_branch
    %33 = sbr.rel (0) target = $region33
  $region32: #{tetris_nn3_forward.17} parent=0 // pred_region
    _
  $region33: #{tetris_nn3_forward.17} parent=0 // pred_fallthru
    _
  // Predicated region
  $region34: #{tetris_nn3_forward.17} parent=0 // pred_check
    _
  $region35: #{tetris_nn3_forward.17} parent=0 // pred_check_branch
    %35 = sbr.rel (0) target = $region37
  $region36: #{tetris_nn3_forward.17} parent=0 // pred_region
    _
  $region37: #{tetris_nn3_forward.17} parent=0 // pred_fallthru
    _
  // Predicated region
  $region38: #{tetris_nn3_forward.17} parent=0 // pred_check
    _
  $region39: #{tetris_nn3_forward.17} parent=0 // pred_check_branch
    %37 = sbr.rel (0) target = $region41
  $region40: #{tetris_nn3_forward.17} parent=0 // pred_region
    _
  $region41: #{tetris_nn3_forward.17} parent=0 // pred_fallthru
    _
  // Predicated region
  $region42: #{tetris_nn3_forward.17} parent=0 // pred_check
    _
  $region43: #{tetris_nn3_forward.17} parent=0 // pred_check_branch
    %39 = sbr.rel (0) target = $region45
  $region44: #{tetris_nn3_forward.17} parent=0 // pred_region
    _
  $region45: #{tetris_nn3_forward.17} parent=0 // pred_fallthru
    _
  // Predicated region
  $region46: #{tetris_nn3_forward.17} parent=0 // pred_check
    _
  $region47: #{tetris_nn3_forward.17} parent=0 // pred_check_branch
    %41 = sbr.rel (0) target = $region49
  $region48: #{tetris_nn3_forward.17} parent=0 // pred_region
    _
  $region49: #{tetris_nn3_forward.17} parent=0 // pred_fallthru
    _
  // Predicated region
  $region50: #{tetris_nn3_forward.17} parent=0 // pred_check
    _
  $region51: #{tetris_nn3_forward.17} parent=0 // pred_check_branch
    %43 = sbr.rel (0) target = $region53
  $region52: #{tetris_nn3_forward.17} parent=0 // pred_region
    _
  $region53: #{tetris_nn3_forward.17} parent=0 // pred_fallthru
    _
  %v44 = vld [vmem:[%s1] sm:$0xff]
  %v45 = vld [vmem:[%s2] sm:$0xff]
  %v46 = vld [vmem:[%s2 + $0x8] sm:$0xff]
  %v47 = vld [vmem:[%s2 + $0x10] sm:$0xff]
  %v48 = vld [vmem:[%s2 + $0x18] sm:$0xff]
  %v49 = vld [vmem:[%s2 + $0x20] sm:$0xff]
  %v50 = vld [vmem:[%s2 + $0x28] sm:$0xff]
  %v51 = vld [vmem:[%s2 + $0x30] sm:$0xff]
  %v52 = vld [vmem:[%s2 + $0x38] sm:$0xff]
  %v53 = vld [vmem:[%s2 + $0x40] sm:$0xff]
  %v54 = vld [vmem:[%s2 + $0x48] sm:$0xff]
  %v55 = vld [vmem:[%s2 + $0x50] sm:$0xff]
  %v56 = vld [vmem:[%s2 + $0x58] sm:$0xff]
  %v57 = vld [vmem:[%s2 + $0x60] sm:$0xff]
  %v58 = vld [vmem:[%s2 + $0x68] sm:$0xff]
  %v59 = vld [vmem:[%s2 + $0x70] sm:$0xff]
  %v60 = vld [vmem:[%s2 + $0x78] sm:$0xff]
  %v61 = vld [vmem:[%s3] sm:$0x1]
  %v63 = vlaneseq
  %v64 = vshrl.u32 %v63, 7
  %v65 = vsub.s32 0, %v64
  %v66 = vrot.slane %v61, %v65
  %68 = vmatprep.subr.mxu0 0.0
  %69 = vmatpush1.msra.mxu0 %v45
  %70 = vmatprep.subr.mxu0 0.0
  %71 = vmatpush1.msra.mxu0 %v46
  %72 = vmatprep.subr.mxu0 0.0
  %73 = vmatpush1.msra.mxu0 %v47
  %74 = vmatprep.subr.mxu0 0.0
  %75 = vmatpush1.msra.mxu0 %v48
  %76 = vmatprep.subr.mxu0 0.0
  %77 = vmatpush1.msra.mxu0 %v49
  %78 = vmatprep.subr.mxu0 0.0
  %79 = vmatpush1.msra.mxu0 %v50
  %80 = vmatprep.subr.mxu0 0.0
  %81 = vmatpush1.msra.mxu0 %v51
  %82 = vmatprep.subr.mxu0 0.0
  %83 = vmatpush1.msra.mxu0 %v52
  %84 = vmatprep.subr.mxu0 0.0
  %85 = vmatpush1.msra.mxu0 %v53
  %86 = vmatprep.subr.mxu0 0.0
  %87 = vmatpush1.msra.mxu0 %v54
  %88 = vmatprep.subr.mxu0 0.0
  %89 = vmatpush1.msra.mxu0 %v55
  %90 = vmatprep.subr.mxu0 0.0
  %91 = vmatpush1.msra.mxu0 %v56
  %92 = vmatprep.subr.mxu0 0.0
  %93 = vmatpush1.msra.mxu0 %v57
  %94 = vmatprep.subr.mxu0 0.0
  %95 = vmatpush1.msra.mxu0 %v58
  %96 = vmatprep.subr.mxu0 0.0
  %97 = vmatpush1.msra.mxu0 %v59
  %98 = vmatprep.subr.mxu0 0.0
  %99 = vmatpush1.msra.mxu0 %v60
  %100 = vmatprep.subr.mxu0 0.0
  %101 = vmatpush1.msra.mxu0 0.0
  %102 = vmatprep.subr.mxu0 0.0
  %103 = vmatpush1.msra.mxu0 0.0
  %104 = vmatprep.subr.mxu0 0.0
  %105 = vmatpush1.msra.mxu0 0.0
  %106 = vmatprep.subr.mxu0 0.0
  %107 = vmatpush1.msra.mxu0 0.0
  %108 = vmatprep.subr.mxu0 0.0
  %109 = vmatpush1.msra.mxu0 0.0
  %110 = vmatprep.subr.mxu0 0.0
  %111 = vmatpush1.msra.mxu0 0.0
  %112 = vmatprep.subr.mxu0 0.0
  %113 = vmatpush1.msra.mxu0 0.0
  %114 = vmatprep.subr.mxu0 0.0
  %115 = vmatpush1.msra.mxu0 0.0
  %116 = vmatprep.subr.mxu0 0.0
  %117 = vmatpush1.msra.mxu0 0.0
  %118 = vmatprep.subr.mxu0 0.0
  %119 = vmatpush1.msra.mxu0 0.0
  %120 = vmatprep.subr.mxu0 0.0
  %121 = vmatpush1.msra.mxu0 0.0
  %122 = vmatprep.subr.mxu0 0.0
  %123 = vmatpush1.msra.mxu0 0.0
  %124 = vmatprep.subr.mxu0 0.0
  %125 = vmatpush1.msra.mxu0 0.0
  %126 = vmatprep.subr.mxu0 0.0
  %127 = vmatpush1.msra.mxu0 0.0
  %128 = vmatprep.subr.mxu0 0.0
  %129 = vmatpush1.msra.mxu0 0.0
  %130 = vmatprep.subr.mxu0 0.0
  %131 = vmatpush1.msra.mxu0 0.0
  %132 = vmatprep.mubr.f32.mxu0 0.0
  %133 = vmatmul.mubr.f32.gmra.mrb[0].mxu0 %v44
  %v134 = vpop.f32.mrb[0].mxu0
  %v135 = vadd.f32 %v66, %v134
  %v136 = vpop.f32.mrb[0].mxu0
  %137 = vdwg.mxu0
  %v138 = vmax.f32 %v135, 0.0
  %v139 = vld [vmem:[%s0] sm:$0xff]
  %v140 = vld [vmem:[%s4] sm:$0xff]
  %v141 = vld [vmem:[%s4 + $0x8] sm:$0xff]
  %v142 = vld [vmem:[%s4 + $0x10] sm:$0xff]
  %v143 = vld [vmem:[%s4 + $0x18] sm:$0xff]
  %v144 = vld [vmem:[%s4 + $0x20] sm:$0xff]
  %v145 = vld [vmem:[%s4 + $0x28] sm:$0xff]
  %v146 = vld [vmem:[%s4 + $0x30] sm:$0xff]
  %v147 = vld [vmem:[%s4 + $0x38] sm:$0xff]
  %v148 = vld [vmem:[%s4 + $0x40] sm:$0xff]
  %v149 = vld [vmem:[%s4 + $0x48] sm:$0xff]
  %v150 = vld [vmem:[%s4 + $0x50] sm:$0xff]
  %v151 = vld [vmem:[%s4 + $0x58] sm:$0xff]
  %v152 = vld [vmem:[%s4 + $0x60] sm:$0xff]
  %v153 = vld [vmem:[%s4 + $0x68] sm:$0xff]
  %v154 = vld [vmem:[%s4 + $0x70] sm:$0xff]
  %v155 = vld [vmem:[%s4 + $0x78] sm:$0xff]
  %v156 = vld [vmem:[%s4 + $0x80] sm:$0xff]
  %v157 = vld [vmem:[%s4 + $0x88] sm:$0xff]
  %v158 = vld [vmem:[%s4 + $0x90] sm:$0xff]
  %v159 = vld [vmem:[%s4 + $0x98] sm:$0xff]
  %v160 = vld [vmem:[%s4 + $0xa0] sm:$0xff]
  %v161 = vld [vmem:[%s4 + $0xa8] sm:$0xff]
  %v162 = vld [vmem:[%s4 + $0xb0] sm:$0xff]
  %v163 = vld [vmem:[%s4 + $0xb8] sm:$0xff]
  %v164 = vld [vmem:[%s4 + $0xc0] sm:$0xff]
  %v165 = vld [vmem:[%s4 + $0xc8] sm:$0xff]
  %v166 = vld [vmem:[%s4 + $0xd0] sm:$0xff]
  %v167 = vld [vmem:[%s4 + $0xd8] sm:$0xff]
  %v168 = vld [vmem:[%s4 + $0xe0] sm:$0xff]
  %v169 = vld [vmem:[%s4 + $0xe8] sm:$0xff]
  %v170 = vld [vmem:[%s4 + $0xf0] sm:$0xff]
  %v171 = vld [vmem:[%s4 + $0xf8] sm:$0xff]
  %v172 = vld [vmem:[%s5] sm:$0xff]
  %v173 = vld [vmem:[%s5 + $0x8] sm:$0xff]
  %v174 = vld [vmem:[%s5 + $0x10] sm:$0xff]
  %v175 = vld [vmem:[%s5 + $0x18] sm:$0xff]
  %v176 = vld [vmem:[%s5 + $0x20] sm:$0xff]
  %v177 = vld [vmem:[%s5 + $0x28] sm:$0xff]
  %v178 = vld [vmem:[%s5 + $0x30] sm:$0xff]
  %v179 = vld [vmem:[%s5 + $0x38] sm:$0xff]
  %v180 = vld [vmem:[%s5 + $0x40] sm:$0xff]
  %v181 = vld [vmem:[%s5 + $0x48] sm:$0xff]
  %v182 = vld [vmem:[%s5 + $0x50] sm:$0xff]
  %v183 = vld [vmem:[%s5 + $0x58] sm:$0xff]
  %v184 = vld [vmem:[%s5 + $0x60] sm:$0xff]
  %v185 = vld [vmem:[%s5 + $0x68] sm:$0xff]
  %v186 = vld [vmem:[%s5 + $0x70] sm:$0xff]
  %v187 = vld [vmem:[%s5 + $0x78] sm:$0xff]
  %v188 = vld [vmem:[%s5 + $0x80] sm:$0xff]
  %v189 = vld [vmem:[%s5 + $0x88] sm:$0xff]
  %v190 = vld [vmem:[%s5 + $0x90] sm:$0xff]
  %v191 = vld [vmem:[%s5 + $0x98] sm:$0xff]
  %v192 = vld [vmem:[%s5 + $0xa0] sm:$0xff]
  %v193 = vld [vmem:[%s5 + $0xa8] sm:$0xff]
  %v194 = vld [vmem:[%s5 + $0xb0] sm:$0xff]
  %v195 = vld [vmem:[%s5 + $0xb8] sm:$0xff]
  %v196 = vld [vmem:[%s5 + $0xc0] sm:$0xff]
  %v197 = vld [vmem:[%s5 + $0xc8] sm:$0xff]
  %v198 = vld [vmem:[%s5 + $0xd0] sm:$0xff]
  %v199 = vld [vmem:[%s5 + $0xd8] sm:$0xff]
  %v200 = vld [vmem:[%s5 + $0xe0] sm:$0xff]
  %v201 = vld [vmem:[%s5 + $0xe8] sm:$0xff]
  %v202 = vld [vmem:[%s5 + $0xf0] sm:$0xff]
  %v203 = vld [vmem:[%s5 + $0xf8] sm:$0xff]
  %204 = vmatprep.subr.mxu0 %v173
  %205 = vmatpush1.msra.mxu0 %v172
  %206 = vmatprep.subr.mxu0 %v175
  %207 = vmatpush1.msra.mxu0 %v174
  %208 = vmatprep.subr.mxu0 %v177
  %209 = vmatpush1.msra.mxu0 %v176
  %210 = vmatprep.subr.mxu0 %v179
  %211 = vmatpush1.msra.mxu0 %v178
  %212 = vmatprep.subr.mxu0 %v181
  %213 = vmatpush1.msra.mxu0 %v180
  %214 = vmatprep.subr.mxu0 %v183
  %215 = vmatpush1.msra.mxu0 %v182
  %216 = vmatprep.subr.mxu0 %v185
  %217 = vmatpush1.msra.mxu0 %v184
  %218 = vmatprep.subr.mxu0 %v187
  %219 = vmatpush1.msra.mxu0 %v186
  %220 = vmatprep.subr.mxu0 %v189
  %221 = vmatpush1.msra.mxu0 %v188
  %222 = vmatprep.subr.mxu0 %v191
  %223 = vmatpush1.msra.mxu0 %v190
  %224 = vmatprep.subr.mxu0 %v193
  %225 = vmatpush1.msra.mxu0 %v192
  %226 = vmatprep.subr.mxu0 %v195
  %227 = vmatpush1.msra.mxu0 %v194
  %228 = vmatprep.subr.mxu0 %v197
  %229 = vmatpush1.msra.mxu0 %v196
  %230 = vmatprep.subr.mxu0 %v199
  %231 = vmatpush1.msra.mxu0 %v198
  %232 = vmatprep.subr.mxu0 %v201
  %233 = vmatpush1.msra.mxu0 %v200
  %234 = vmatprep.subr.mxu0 %v203
  %235 = vmatpush1.msra.mxu0 %v202
  %236 = vmatprep.subr.mxu0 0.0
  %237 = vmatpush1.msra.mxu0 0.0
  %238 = vmatprep.subr.mxu0 0.0
  %239 = vmatpush1.msra.mxu0 0.0
  %240 = vmatprep.subr.mxu0 0.0
  %241 = vmatpush1.msra.mxu0 0.0
  %242 = vmatprep.subr.mxu0 0.0
  %243 = vmatpush1.msra.mxu0 0.0
  %244 = vmatprep.subr.mxu0 0.0
  %245 = vmatpush1.msra.mxu0 0.0
  %246 = vmatprep.subr.mxu0 0.0
  %247 = vmatpush1.msra.mxu0 0.0
  %248 = vmatprep.subr.mxu0 0.0
  %249 = vmatpush1.msra.mxu0 0.0
  %250 = vmatprep.subr.mxu0 0.0
  %251 = vmatpush1.msra.mxu0 0.0
  %252 = vmatprep.subr.mxu0 0.0
  %253 = vmatpush1.msra.mxu0 0.0
  %254 = vmatprep.subr.mxu0 0.0
  %255 = vmatpush1.msra.mxu0 0.0
  %256 = vmatprep.subr.mxu0 0.0
  %257 = vmatpush1.msra.mxu0 0.0
  %258 = vmatprep.subr.mxu0 0.0
  %259 = vmatpush1.msra.mxu0 0.0
  %260 = vmatprep.subr.mxu0 0.0
  %261 = vmatpush1.msra.mxu0 0.0
  %262 = vmatprep.subr.mxu0 0.0
  %263 = vmatpush1.msra.mxu0 0.0
  %264 = vmatprep.subr.mxu0 0.0
  %265 = vmatpush1.msra.mxu0 0.0
  %266 = vmatprep.subr.mxu0 0.0
  %267 = vmatpush1.msra.mxu0 0.0
  %268 = vmatprep.mubr.f32.mxu0 0.0
  %269 = vmatmul.mubr.f32.gmra.mrb[0].mxu0 %v138
  %v270 = vpop.f32.mrb[0].mxu0
  %v271 = vadd.f32 0.0, %v270
  %v272 = vpop.f32.mrb[0].mxu0
  %v273 = vadd.f32 0.0, %v272
  %274 = vdwg.mxu0
  %275 = vmatprep.subr.mxu0 %v141
  %276 = vmatpush1.msra.mxu0 %v140
  %277 = vmatprep.subr.mxu0 %v143
  %278 = vmatpush1.msra.mxu0 %v142
  %279 = vmatprep.subr.mxu0 %v145
  %280 = vmatpush1.msra.mxu0 %v144
  %281 = vmatprep.subr.mxu0 %v147
  %282 = vmatpush1.msra.mxu0 %v146
  %283 = vmatprep.subr.mxu0 %v149
  %284 = vmatpush1.msra.mxu0 %v148
  %285 = vmatprep.subr.mxu0 %v151
  %286 = vmatpush1.msra.mxu0 %v150
  %287 = vmatprep.subr.mxu0 %v153
  %288 = vmatpush1.msra.mxu0 %v152
  %289 = vmatprep.subr.mxu0 %v155
  %290 = vmatpush1.msra.mxu0 %v154
  %291 = vmatprep.subr.mxu0 %v157
  %292 = vmatpush1.msra.mxu0 %v156
  %293 = vmatprep.subr.mxu0 %v159
  %294 = vmatpush1.msra.mxu0 %v158
  %295 = vmatprep.subr.mxu0 %v161
  %296 = vmatpush1.msra.mxu0 %v160
  %297 = vmatprep.subr.mxu0 %v163
  %298 = vmatpush1.msra.mxu0 %v162
  %299 = vmatprep.subr.mxu0 %v165
  %300 = vmatpush1.msra.mxu0 %v164
  %301 = vmatprep.subr.mxu0 %v167
  %302 = vmatpush1.msra.mxu0 %v166
  %303 = vmatprep.subr.mxu0 %v169
  %304 = vmatpush1.msra.mxu0 %v168
  %305 = vmatprep.subr.mxu0 %v171
  %306 = vmatpush1.msra.mxu0 %v170
  %307 = vmatprep.subr.mxu0 0.0
  %308 = vmatpush1.msra.mxu0 0.0
  %309 = vmatprep.subr.mxu0 0.0
  %310 = vmatpush1.msra.mxu0 0.0
  %311 = vmatprep.subr.mxu0 0.0
  %312 = vmatpush1.msra.mxu0 0.0
  %313 = vmatprep.subr.mxu0 0.0
  %314 = vmatpush1.msra.mxu0 0.0
  %315 = vmatprep.subr.mxu0 0.0
  %316 = vmatpush1.msra.mxu0 0.0
  %317 = vmatprep.subr.mxu0 0.0
  %318 = vmatpush1.msra.mxu0 0.0
  %319 = vmatprep.subr.mxu0 0.0
  %320 = vmatpush1.msra.mxu0 0.0
  %321 = vmatprep.subr.mxu0 0.0
  %322 = vmatpush1.msra.mxu0 0.0
  %323 = vmatprep.subr.mxu0 0.0
  %324 = vmatpush1.msra.mxu0 0.0
  %325 = vmatprep.subr.mxu0 0.0
  %326 = vmatpush1.msra.mxu0 0.0
  %327 = vmatprep.subr.mxu0 0.0
  %328 = vmatpush1.msra.mxu0 0.0
  %329 = vmatprep.subr.mxu0 0.0
  %330 = vmatpush1.msra.mxu0 0.0
  %331 = vmatprep.subr.mxu0 0.0
  %332 = vmatpush1.msra.mxu0 0.0
  %333 = vmatprep.subr.mxu0 0.0
  %334 = vmatpush1.msra.mxu0 0.0
  %335 = vmatprep.subr.mxu0 0.0
  %336 = vmatpush1.msra.mxu0 0.0
  %337 = vmatprep.subr.mxu0 0.0
  %338 = vmatpush1.msra.mxu0 0.0
  %339 = vmatprep.mubr.f32.mxu0 0.0
  %340 = vmatmul.mubr.f32.gmra.mrb[0].mxu0 %v139
  %v341 = vpop.f32.mrb[0].mxu0
  %v342 = vadd.f32 %v271, %v341
  %v343 = vpop.f32.mrb[0].mxu0
  %v344 = vadd.f32 %v273, %v343
  %345 = vdwg.mxu0
  %v346 = vld [vmem:[%s6] sm:$0x3]
  %v348 = vlaneseq
  %v349 = vshrl.u32 %v348, 7
  %v350 = vsub.s32 0, %v349
  %v351 = vrot.slane %v346, %v350
  %v352 = vlaneseq
  %v353 = vshrl.u32 %v352, 7
  %v354 = vsub.s32 1, %v353
  %v355 = vrot.slane %v346, %v354
  %v358 = vadd.f32 %v342, %v351
  %v359 = vadd.f32 %v344, %v355
  %v360 = vmax.f32 %v358, 0.0
  %v361 = vmax.f32 %v359, 0.0
  %v362 = vld [vmem:[%s7] sm:$0xff]
  %v363 = vld [vmem:[%s7 + $0x8] sm:$0xff]
  %v364 = vld [vmem:[%s7 + $0x10] sm:$0xff]
  %v365 = vld [vmem:[%s7 + $0x18] sm:$0xff]
  %v366 = vld [vmem:[%s7 + $0x20] sm:$0xff]
  %v367 = vld [vmem:[%s7 + $0x28] sm:$0xff]
  %v368 = vld [vmem:[%s7 + $0x30] sm:$0xff]
  %v369 = vld [vmem:[%s7 + $0x38] sm:$0xff]
  %v370 = vld [vmem:[%s7 + $0x40] sm:$0xff]
  %v371 = vld [vmem:[%s7 + $0x48] sm:$0xff]
  %v372 = vld [vmem:[%s7 + $0x50] sm:$0xff]
  %v373 = vld [vmem:[%s7 + $0x58] sm:$0xff]
  %v374 = vld [vmem:[%s7 + $0x60] sm:$0xff]
  %v375 = vld [vmem:[%s7 + $0x68] sm:$0xff]
  %v376 = vld [vmem:[%s7 + $0x70] sm:$0xff]
  %v377 = vld [vmem:[%s7 + $0x78] sm:$0xff]
  %v378 = vld [vmem:[%s7 + $0x80] sm:$0xff]
  %v379 = vld [vmem:[%s7 + $0x88] sm:$0xff]
  %v380 = vld [vmem:[%s7 + $0x90] sm:$0xff]
  %v381 = vld [vmem:[%s7 + $0x98] sm:$0xff]
  %v382 = vld [vmem:[%s7 + $0xa0] sm:$0xff]
  %v383 = vld [vmem:[%s7 + $0xa8] sm:$0xff]
  %v384 = vld [vmem:[%s7 + $0xb0] sm:$0xff]
  %v385 = vld [vmem:[%s7 + $0xb8] sm:$0xff]
  %v386 = vld [vmem:[%s7 + $0xc0] sm:$0xff]
  %v387 = vld [vmem:[%s7 + $0xc8] sm:$0xff]
  %v388 = vld [vmem:[%s7 + $0xd0] sm:$0xff]
  %v389 = vld [vmem:[%s7 + $0xd8] sm:$0xff]
  %v390 = vld [vmem:[%s7 + $0xe0] sm:$0xff]
  %v391 = vld [vmem:[%s7 + $0xe8] sm:$0xff]
  %v392 = vld [vmem:[%s7 + $0xf0] sm:$0xff]
  %v393 = vld [vmem:[%s7 + $0xf8] sm:$0xff]
  %v394 = vld [vmem:[%s8] sm:$0x1]
  %v396 = vlaneseq
  %v397 = vshrl.u32 %v396, 7
  %v398 = vsub.s32 0, %v397
  %v399 = vrot.slane %v394, %v398
  %401 = vmatprep.subr.mxu0 0.0
  %402 = vmatpush1.msra.mxu0 %v362
  %403 = vmatprep.subr.mxu0 0.0
  %404 = vmatpush1.msra.mxu0 %v363
  %405 = vmatprep.subr.mxu0 0.0
  %406 = vmatpush1.msra.mxu0 %v364
  %407 = vmatprep.subr.mxu0 0.0
  %408 = vmatpush1.msra.mxu0 %v365
  %409 = vmatprep.subr.mxu0 0.0
  %410 = vmatpush1.msra.mxu0 %v366
  %411 = vmatprep.subr.mxu0 0.0
  %412 = vmatpush1.msra.mxu0 %v367
  %413 = vmatprep.subr.mxu0 0.0
  %414 = vmatpush1.msra.mxu0 %v368
  %415 = vmatprep.subr.mxu0 0.0
  %416 = vmatpush1.msra.mxu0 %v369
  %417 = vmatprep.subr.mxu0 0.0
  %418 = vmatpush1.msra.mxu0 %v370
  %419 = vmatprep.subr.mxu0 0.0
  %420 = vmatpush1.msra.mxu0 %v371
  %421 = vmatprep.subr.mxu0 0.0
  %422 = vmatpush1.msra.mxu0 %v372
  %423 = vmatprep.subr.mxu0 0.0
  %424 = vmatpush1.msra.mxu0 %v373
  %425 = vmatprep.subr.mxu0 0.0
  %426 = vmatpush1.msra.mxu0 %v374
  %427 = vmatprep.subr.mxu0 0.0
  %428 = vmatpush1.msra.mxu0 %v375
  %429 = vmatprep.subr.mxu0 0.0
  %430 = vmatpush1.msra.mxu0 %v376
  %431 = vmatprep.subr.mxu0 0.0
  %432 = vmatpush1.msra.mxu0 %v377
  %433 = vmatprep.subr.mxu0 0.0
  %434 = vmatpush1.msra.mxu0 %v378
  %435 = vmatprep.subr.mxu0 0.0
  %436 = vmatpush1.msra.mxu0 %v379
  %437 = vmatprep.subr.mxu0 0.0
  %438 = vmatpush1.msra.mxu0 %v380
  %439 = vmatprep.subr.mxu0 0.0
  %440 = vmatpush1.msra.mxu0 %v381
  %441 = vmatprep.subr.mxu0 0.0
  %442 = vmatpush1.msra.mxu0 %v382
  %443 = vmatprep.subr.mxu0 0.0
  %444 = vmatpush1.msra.mxu0 %v383
  %445 = vmatprep.subr.mxu0 0.0
  %446 = vmatpush1.msra.mxu0 %v384
  %447 = vmatprep.subr.mxu0 0.0
  %448 = vmatpush1.msra.mxu0 %v385
  %449 = vmatprep.subr.mxu0 0.0
  %450 = vmatpush1.msra.mxu0 %v386
  %451 = vmatprep.subr.mxu0 0.0
  %452 = vmatpush1.msra.mxu0 %v387
  %453 = vmatprep.subr.mxu0 0.0
  %454 = vmatpush1.msra.mxu0 %v388
  %455 = vmatprep.subr.mxu0 0.0
  %456 = vmatpush1.msra.mxu0 %v389
  %457 = vmatprep.subr.mxu0 0.0
  %458 = vmatpush1.msra.mxu0 %v390
  %459 = vmatprep.subr.mxu0 0.0
  %460 = vmatpush1.msra.mxu0 %v391
  %461 = vmatprep.subr.mxu0 0.0
  %462 = vmatpush1.msra.mxu0 %v392
  %463 = vmatprep.subr.mxu0 0.0
  %464 = vmatpush1.msra.mxu0 %v393
  %465 = vmatprep.mubr.f32.mxu0 %v361
  %466 = vmatmul.mubr.f32.gmra.mrb[0].mxu0 %v360
  %v467 = vpop.f32.mrb[0].mxu0
  %v468 = vadd.f32 %v399, %v467
  %v469 = vpop.f32.mrb[0].mxu0
  %470 = vdwg.mxu0
  %v471 = vmax.f32 %v468, 0.0
  %v472 = vld [vmem:[%s9] sm:$0xff]
  %v473 = vld [vmem:[%s9 + $0x8] sm:$0xff]
  %v474 = vld [vmem:[%s9 + $0x10] sm:$0xff]
  %v475 = vld [vmem:[%s9 + $0x18] sm:$0xff]
  %v476 = vld [vmem:[%s9 + $0x20] sm:$0xff]
  %v477 = vld [vmem:[%s9 + $0x28] sm:$0xff]
  %v478 = vld [vmem:[%s9 + $0x30] sm:$0xff]
  %v479 = vld [vmem:[%s9 + $0x38] sm:$0xff]
  %v480 = vld [vmem:[%s9 + $0x40] sm:$0xff]
  %v481 = vld [vmem:[%s9 + $0x48] sm:$0xff]
  %v482 = vld [vmem:[%s9 + $0x50] sm:$0xff]
  %v483 = vld [vmem:[%s9 + $0x58] sm:$0xff]
  %v484 = vld [vmem:[%s9 + $0x60] sm:$0xff]
  %v485 = vld [vmem:[%s9 + $0x68] sm:$0xff]
  %v486 = vld [vmem:[%s9 + $0x70] sm:$0xff]
  %v487 = vld [vmem:[%s9 + $0x78] sm:$0xff]
  %v488 = vld [vmem:[%s10] sm:$0x1]
  %v490 = vlaneseq
  %v491 = vshrl.u32 %v490, 7
  %v492 = vsub.s32 0, %v491
  %v493 = vrot.slane %v488, %v492
  %495 = vmatprep.subr.mxu0 0.0
  %496 = vmatpush1.msra.mxu0 %v472
  %497 = vmatprep.subr.mxu0 0.0
  %498 = vmatpush1.msra.mxu0 %v473
  %499 = vmatprep.subr.mxu0 0.0
  %500 = vmatpush1.msra.mxu0 %v474
  %501 = vmatprep.subr.mxu0 0.0
  %502 = vmatpush1.msra.mxu0 %v475
  %503 = vmatprep.subr.mxu0 0.0
  %504 = vmatpush1.msra.mxu0 %v476
  %505 = vmatprep.subr.mxu0 0.0
  %506 = vmatpush1.msra.mxu0 %v477
  %507 = vmatprep.subr.mxu0 0.0
  %508 = vmatpush1.msra.mxu0 %v478
  %509 = vmatprep.subr.mxu0 0.0
  %510 = vmatpush1.msra.mxu0 %v479
  %511 = vmatprep.subr.mxu0 0.0
  %512 = vmatpush1.msra.mxu0 %v480
  %513 = vmatprep.subr.mxu0 0.0
  %514 = vmatpush1.msra.mxu0 %v481
  %515 = vmatprep.subr.mxu0 0.0
  %516 = vmatpush1.msra.mxu0 %v482
  %517 = vmatprep.subr.mxu0 0.0
  %518 = vmatpush1.msra.mxu0 %v483
  %519 = vmatprep.subr.mxu0 0.0
  %520 = vmatpush1.msra.mxu0 %v484
  %521 = vmatprep.subr.mxu0 0.0
  %522 = vmatpush1.msra.mxu0 %v485
  %523 = vmatprep.subr.mxu0 0.0
  %524 = vmatpush1.msra.mxu0 %v486
  %525 = vmatprep.subr.mxu0 0.0
  %526 = vmatpush1.msra.mxu0 %v487
  %527 = vmatprep.subr.mxu0 0.0
  %528 = vmatpush1.msra.mxu0 0.0
  %529 = vmatprep.subr.mxu0 0.0
  %530 = vmatpush1.msra.mxu0 0.0
  %531 = vmatprep.subr.mxu0 0.0
  %532 = vmatpush1.msra.mxu0 0.0
  %533 = vmatprep.subr.mxu0 0.0
  %534 = vmatpush1.msra.mxu0 0.0
  %535 = vmatprep.subr.mxu0 0.0
  %536 = vmatpush1.msra.mxu0 0.0
  %537 = vmatprep.subr.mxu0 0.0
  %538 = vmatpush1.msra.mxu0 0.0
  %539 = vmatprep.subr.mxu0 0.0
  %540 = vmatpush1.msra.mxu0 0.0
  %541 = vmatprep.subr.mxu0 0.0
  %542 = vmatpush1.msra.mxu0 0.0
  %543 = vmatprep.subr.mxu0 0.0
  %544 = vmatpush1.msra.mxu0 0.0
  %545 = vmatprep.subr.mxu0 0.0
  %546 = vmatpush1.msra.mxu0 0.0
  %547 = vmatprep.subr.mxu0 0.0
  %548 = vmatpush1.msra.mxu0 0.0
  %549 = vmatprep.subr.mxu0 0.0
  %550 = vmatpush1.msra.mxu0 0.0
  %551 = vmatprep.subr.mxu0 0.0
  %552 = vmatpush1.msra.mxu0 0.0
  %553 = vmatprep.subr.mxu0 0.0
  %554 = vmatpush1.msra.mxu0 0.0
  %555 = vmatprep.subr.mxu0 0.0
  %556 = vmatpush1.msra.mxu0 0.0
  %557 = vmatprep.subr.mxu0 0.0
  %558 = vmatpush1.msra.mxu0 0.0
  %559 = vmatprep.mubr.f32.mxu0 0.0
  %560 = vmatmul.mubr.f32.gmra.mrb[0].mxu0 %v471
  %v561 = vpop.f32.mrb[0].mxu0
  %v562 = vadd.f32 %v493, %v561
  %v563 = vpop.f32.mrb[0].mxu0
  %564 = vdwg.mxu0
  %v565 = vmax.f32 %v562, 0.0
  %v566 = vld [vmem:[%s11] sm:$0xff]
  %v567 = vld [vmem:[%s11 + $0x8] sm:$0xff]
  %v568 = vld [vmem:[%s11 + $0x10] sm:$0xff]
  %v569 = vld [vmem:[%s11 + $0x18] sm:$0xff]
  %v570 = vld [vmem:[%s11 + $0x20] sm:$0xff]
  %v571 = vld [vmem:[%s11 + $0x28] sm:$0xff]
  %v572 = vld [vmem:[%s11 + $0x30] sm:$0xff]
  %v573 = vld [vmem:[%s11 + $0x38] sm:$0xff]
  %v574 = vld [vmem:[%s11 + $0x40] sm:$0xff]
  %v575 = vld [vmem:[%s11 + $0x48] sm:$0xff]
  %v576 = vld [vmem:[%s11 + $0x50] sm:$0xff]
  %v577 = vld [vmem:[%s11 + $0x58] sm:$0xff]
  %v578 = vld [vmem:[%s11 + $0x60] sm:$0xff]
  %v579 = vld [vmem:[%s11 + $0x68] sm:$0xff]
  %v580 = vld [vmem:[%s11 + $0x70] sm:$0xff]
  %v581 = vld [vmem:[%s11 + $0x78] sm:$0xff]
  %v582 = vld [vmem:[%s12] sm:$0x1]
  %v584 = vlaneseq
  %v585 = vshrl.u32 %v584, 7
  %v586 = vsub.s32 0, %v585
  %v587 = vrot.slane %v582, %v586
  %589 = vmatprep.subr.mxu0 0.0
  %590 = vmatpush1.msra.mxu0 %v566
  %591 = vmatprep.subr.mxu0 0.0
  %592 = vmatpush1.msra.mxu0 %v567
  %593 = vmatprep.subr.mxu0 0.0
  %594 = vmatpush1.msra.mxu0 %v568
  %595 = vmatprep.subr.mxu0 0.0
  %596 = vmatpush1.msra.mxu0 %v569
  %597 = vmatprep.subr.mxu0 0.0
  %598 = vmatpush1.msra.mxu0 %v570
  %599 = vmatprep.subr.mxu0 0.0
  %600 = vmatpush1.msra.mxu0 %v571
  %601 = vmatprep.subr.mxu0 0.0
  %602 = vmatpush1.msra.mxu0 %v572
  %603 = vmatprep.subr.mxu0 0.0
  %604 = vmatpush1.msra.mxu0 %v573
  %605 = vmatprep.subr.mxu0 0.0
  %606 = vmatpush1.msra.mxu0 %v574
  %607 = vmatprep.subr.mxu0 0.0
  %608 = vmatpush1.msra.mxu0 %v575
  %609 = vmatprep.subr.mxu0 0.0
  %610 = vmatpush1.msra.mxu0 %v576
  %611 = vmatprep.subr.mxu0 0.0
  %612 = vmatpush1.msra.mxu0 %v577
  %613 = vmatprep.subr.mxu0 0.0
  %614 = vmatpush1.msra.mxu0 %v578
  %615 = vmatprep.subr.mxu0 0.0
  %616 = vmatpush1.msra.mxu0 %v579
  %617 = vmatprep.subr.mxu0 0.0
  %618 = vmatpush1.msra.mxu0 %v580
  %619 = vmatprep.subr.mxu0 0.0
  %620 = vmatpush1.msra.mxu0 %v581
  %621 = vmatprep.subr.mxu0 0.0
  %622 = vmatpush1.msra.mxu0 0.0
  %623 = vmatprep.subr.mxu0 0.0
  %624 = vmatpush1.msra.mxu0 0.0
  %625 = vmatprep.subr.mxu0 0.0
  %626 = vmatpush1.msra.mxu0 0.0
  %627 = vmatprep.subr.mxu0 0.0
  %628 = vmatpush1.msra.mxu0 0.0
  %629 = vmatprep.subr.mxu0 0.0
  %630 = vmatpush1.msra.mxu0 0.0
  %631 = vmatprep.subr.mxu0 0.0
  %632 = vmatpush1.msra.mxu0 0.0
  %633 = vmatprep.subr.mxu0 0.0
  %634 = vmatpush1.msra.mxu0 0.0
  %635 = vmatprep.subr.mxu0 0.0
  %636 = vmatpush1.msra.mxu0 0.0
  %637 = vmatprep.subr.mxu0 0.0
  %638 = vmatpush1.msra.mxu0 0.0
  %639 = vmatprep.subr.mxu0 0.0
  %640 = vmatpush1.msra.mxu0 0.0
  %641 = vmatprep.subr.mxu0 0.0
  %642 = vmatpush1.msra.mxu0 0.0
  %643 = vmatprep.subr.mxu0 0.0
  %644 = vmatpush1.msra.mxu0 0.0
  %645 = vmatprep.subr.mxu0 0.0
  %646 = vmatpush1.msra.mxu0 0.0
  %647 = vmatprep.subr.mxu0 0.0
  %648 = vmatpush1.msra.mxu0 0.0
  %649 = vmatprep.subr.mxu0 0.0
  %650 = vmatpush1.msra.mxu0 0.0
  %651 = vmatprep.subr.mxu0 0.0
  %652 = vmatpush1.msra.mxu0 0.0
  %653 = vmatprep.mubr.f32.mxu0 0.0
  %654 = vmatmul.mubr.f32.gmra.mrb[0].mxu0 %v565
  %v655 = vpop.f32.mrb[0].mxu0
  %v656 = vadd.f32 %v587, %v655
  %v657 = vpop.f32.mrb[0].mxu0
  %658 = vdwg.mxu0
  %659 = vst [vmem:[%s13] sm:$0xff] %v656
  // Predicated region
  $region54: #{tetris_nn3_forward.17} parent=0 // pred_check
    _
  $region55: #{tetris_nn3_forward.17} parent=0 // pred_check_branch
    %661 = sbr.rel (0) target = $region57
  $region56: #{tetris_nn3_forward.17} parent=0 // pred_region
    _
  $region57: #{tetris_nn3_forward.17} parent=0 // pred_fallthru
    _
  // Predicated region
  $region58: #{tetris_nn3_forward.17} parent=0 // pred_check
    _
  $region59: #{tetris_nn3_forward.17} parent=0 // pred_check_branch
    %663 = sbr.rel (0) target = $region61
  $region60: #{tetris_nn3_forward.17} parent=0 // pred_region
    _
  $region61: #{tetris_nn3_forward.17} parent=0 // pred_fallthru
    _

</llo_original>
